<compile_context>
chip_gen: v6e
topology: v6e:2x2x1
jax: 0.10.0
libtpu: 0.0.40
codegen_flags: <defaults>
</compile_context>

<pallas_src>
import jax
import jax.numpy as jnp
from jax.experimental import pallas as pl
from jax.experimental.pallas import tpu as pltpu

# ----------------------------- model config ---------------------------------
NUM_BRANCH = 3
NUM_FOURIER = 8
FOURIER_PER_BRANCH = 2
NUM_BASIS = 4 ** 2            # 16
HIDDEN_DIM = 64
LATENT_DIM = 16

INPUT_DIM = NUM_BRANCH + 4 * NUM_BRANCH + NUM_BRANCH * NUM_FOURIER * FOURIER_PER_BRANCH  # 63
CONDITION_DIM = NUM_BASIS * 3 + NUM_BRANCH * 3                                           # 57

BN_EPS = 1e-5
DOT_DTYPE = jnp.bfloat16      # MXU operand dtype (accumulation stays f32)

# --------------------------- packed slab layouts -----------------------------
LANES = 128                   # lane width of every packed block / activation
W_ROWS = 128                  # rows per weight block in the weight slab
NUM_W_BLOCKS = 22
NUM_VECS = 45                 # bias / gamma / beta rows
VEC_ROWS = 48                 # padded to a multiple of 8

# input slab (B, 256): x @ [0,63) | eps @ [64,80) | cond @ [128,185)
IN_SLAB = 256
X_OFF = 0
EPS_OFF = 64
COND_OFF = 128

# output slab (B, 256): recon @ [0,63) | mu @ [128,144) | logvar @ [144,160)
OUT_SLAB = 256
HEAD_OFF = 128
MU_OFF = HEAD_OFF
LV_OFF = HEAD_OFF + LATENT_DIM

_VMEM = pl.BlockSpec(memory_space=pltpu.MemorySpace.VMEM)


# ------------------------------ fused Pallas kernel --------------------------
def cvae_fused_kernel(in_ref, w_ref, v_ref, out_ref):
    """Whole forward in one kernel.

    in_ref  : (B, 256)      f32  -- x | eps | cond packed lane-dense
    w_ref   : (22*128, 128) bf16 -- every weight matrix, one 128-row block each
    v_ref   : (48, 128)     f32  -- every bias / BN gamma / BN beta, one row each
    out_ref : (B, 256)      f32  -- recon | mu | logvar packed lane-dense
    """
    wi = [0]   # weight-block cursor (trace-time Python state)
    vi = [0]   # vector-row cursor

    def next_w(rows=W_ROWS):
        r0 = wi[0] * W_ROWS
        wi[0] += 1
        return w_ref[r0:r0 + rows, :]            # bf16 (rows, 128), tile-aligned slice

    def next_v():
        r = vi[0]
        vi[0] += 1
        return v_ref[r:r + 1, :]                 # f32 (1, 128)

    def lin(h):
        w = next_w()
        b = next_v()
        return jnp.dot(h.astype(DOT_DTYPE), w,
                       preferred_element_type=jnp.float32) + b

    def bn(h):
        # BatchNorm1d training mode: biased per-batch stats, two-pass variance,
        # fused scale/shift.  rsqrt lowers to the EUP; everything stays f32.
        g = next_v()
        be = next_v()
        mean = jnp.mean(h, axis=0, keepdims=True)
        d = h - mean
        var = jnp.mean(d * d, axis=0, keepdims=True)
        return d * (g * jax.lax.rsqrt(var + BN_EPS)) + be

    def res(h):
        y = jnp.maximum(bn(lin(h)), 0.0)         # fc1 -> bn1 -> relu
        y = bn(lin(y)) + h                       # fc2 -> bn2 -> +identity
        return jnp.maximum(y, 0.0)

    # tile-aligned 128-lane views of the input slab
    x128 = in_ref[:, 0:LANES]                    # x @ cols [0,63); eps cols hit zero weight rows
    cond128 = in_ref[:, COND_OFF:COND_OFF + LANES]   # cond @ cols [0,57)
    eps = in_ref[:, EPS_OFF:EPS_OFF + LATENT_DIM]

    # ----- encoder -----
    h = lin(x128)          # fc1
    h = res(h)             # res1
    h = lin(h)             # fc2
    h = res(h)             # res2
    h = lin(h)             # fc3
    h = res(h)             # res3

    h_head = lin(h)        # fused [fc21_1 | fc22_1]                        -> (B, 128)
    head = lin(h_head)     # block-diag [fc21_2 | fc22_2]: mu @ [0,16), logvar @ [16,32)

    # store mu/logvar now so `head` does not stay live in vregs across the decoder
    out_ref[:, HEAD_OFF:HEAD_OFF + LANES] = head

    mu = head[:, 0:LATENT_DIM]
    logvar = head[:, LATENT_DIM:2 * LATENT_DIM]

    # ----- reparameterize (exp on the EUP, f32) -----
    z = mu + eps * jnp.exp(0.5 * logvar)

    # ----- decoder: fcd1 split into z block + cond block (no [z, cond] concat) -----
    wz = next_w(rows=LATENT_DIM)     # (16, 128)
    wc = next_w()                    # (128, 128)
    bd = next_v()
    hd = (jnp.dot(z.astype(DOT_DTYPE), wz, preferred_element_type=jnp.float32)
          + jnp.dot(cond128.astype(DOT_DTYPE), wc, preferred_element_type=jnp.float32)
          + bd)
    hd = res(hd)           # resd1
    hd = lin(hd)           # fcd2
    hd = res(hd)           # resd2
    hd = lin(hd)           # fcd3
    hd = res(hd)           # resd3

    recon_pad = lin(hd)    # fce -> recon @ cols [0,63), zeros elsewhere
    out_ref[:, 0:LANES] = recon_pad


# ------------------------------ parameter init -------------------------------
def _xavier(key, fan_in, fan_out):
    std = jnp.sqrt(2.0 / (fan_in + fan_out)).astype(jnp.float32)
    return std * jax.random.normal(key, (fan_in, fan_out), dtype=jnp.float32)  # stored (in, out)


def _linear_params(key, fan_in, fan_out):
    return _xavier(key, fan_in, fan_out), jnp.zeros((1, fan_out), jnp.float32)


def _resblock_params(key, dim):
    k1, k2 = jax.random.split(key)
    w1, b1 = _linear_params(k1, dim, dim)
    w2, b2 = _linear_params(k2, dim, dim)
    g1 = jnp.ones((1, dim), jnp.float32)
    be1 = jnp.zeros((1, dim), jnp.float32)
    g2 = jnp.ones((1, dim), jnp.float32)
    be2 = jnp.zeros((1, dim), jnp.float32)
    return (w1, b1, g1, be1, w2, b2, g2, be2)


def init_params(key):
    keys = jax.random.split(key, 17)
    p = {}
    p["fc1"] = _linear_params(keys[0], INPUT_DIM, HIDDEN_DIM)
    p["res1"] = _resblock_params(keys[1], HIDDEN_DIM)
    p["fc2"] = _linear_params(keys[2], HIDDEN_DIM, HIDDEN_DIM)
    p["res2"] = _resblock_params(keys[3], HIDDEN_DIM)
    p["fc3"] = _linear_params(keys[4], HIDDEN_DIM, HIDDEN_DIM)
    p["res3"] = _resblock_params(keys[5], HIDDEN_DIM)
    p["fc21_1"] = _linear_params(keys[6], HIDDEN_DIM, HIDDEN_DIM)
    p["fc21_2"] = _linear_params(keys[7], HIDDEN_DIM, LATENT_DIM)
    p["fc22_1"] = _linear_params(keys[8], HIDDEN_DIM, HIDDEN_DIM)
    p["fc22_2"] = _linear_params(keys[9], HIDDEN_DIM, LATENT_DIM)
    p["fcd1"] = _linear_params(keys[10], LATENT_DIM + CONDITION_DIM, HIDDEN_DIM)
    p["resd1"] = _resblock_params(keys[11], HIDDEN_DIM)
    p["fcd2"] = _linear_params(keys[12], HIDDEN_DIM, HIDDEN_DIM)
    p["resd2"] = _resblock_params(keys[13], HIDDEN_DIM)
    p["fcd3"] = _linear_params(keys[14], HIDDEN_DIM, HIDDEN_DIM)
    p["resd3"] = _resblock_params(keys[15], HIDDEN_DIM)
    p["fce"] = _linear_params(keys[16], HIDDEN_DIM, INPUT_DIM)
    return p


# ------------------------------ slab packing ---------------------------------
def _pad_block(w):
    k, n = w.shape
    return jnp.zeros((W_ROWS, LANES), jnp.float32).at[:k, :n].set(w)


def _pad_vec(v):
    v = v.reshape(1, -1)
    return jnp.zeros((1, LANES), jnp.float32).at[:, :v.shape[1]].set(v)


def pack_params(p):
    """Pack all weights into one (22*128, 128) bf16 slab and all bias/gamma/beta
    vectors into one (48, 128) f32 slab, in exactly the order the kernel consumes
    them (head fusion, fcd1 split, lane-dense fce padding included)."""
    wblocks, vrows = [], []

    def add_lin(w, b):
        wblocks.append(_pad_block(w))
        vrows.append(_pad_vec(b))

    def add_bn(g, be):
        vrows.append(_pad_vec(g))
        vrows.append(_pad_vec(be))

    def add_res(prm):
        w1, b1, g1, be1, w2, b2, g2, be2 = prm
        add_lin(w1, b1)
        add_bn(g1, be1)
        add_lin(w2, b2)
        add_bn(g2, be2)

    add_lin(*p["fc1"]); add_res(p["res1"])
    add_lin(*p["fc2"]); add_res(p["res2"])
    add_lin(*p["fc3"]); add_res(p["res3"])

    # fused mu/logvar hidden layer: one (64, 128) matmul
    w21_1, b21_1 = p["fc21_1"]
    w22_1, b22_1 = p["fc22_1"]
    add_lin(jnp.concatenate([w21_1, w22_1], axis=1),
            jnp.concatenate([b21_1, b22_1], axis=1))

    # block-diagonal second head layer: mu -> cols [0,16), logvar -> cols [16,32)
    w21_2, b21_2 = p["fc21_2"]
    w22_2, b22_2 = p["fc22_2"]
    h2_w = jnp.zeros((2 * HIDDEN_DIM, LANES), jnp.float32)
    h2_w = h2_w.at[:HIDDEN_DIM, 0:LATENT_DIM].set(w21_2)
    h2_w = h2_w.at[HIDDEN_DIM:, LATENT_DIM:2 * LATENT_DIM].set(w22_2)
    h2_b = jnp.zeros((1, LANES), jnp.float32)
    h2_b = h2_b.at[:, 0:LATENT_DIM].set(b21_2)
    h2_b = h2_b.at[:, LATENT_DIM:2 * LATENT_DIM].set(b22_2)
    add_lin(h2_w, h2_b)

    # fcd1 split: z block (rows [0,16)) and cond block (rows [0,57)), shared bias
    wd1, bd1 = p["fcd1"]
    wblocks.append(_pad_block(wd1[:LATENT_DIM, :]))
    wblocks.append(_pad_block(wd1[LATENT_DIM:, :]))
    vrows.append(_pad_vec(bd1))

    add_res(p["resd1"])
    add_lin(*p["fcd2"]); add_res(p["resd2"])
    add_lin(*p["fcd3"]); add_res(p["resd3"])
    add_lin(*p["fce"])

    assert len(wblocks) == NUM_W_BLOCKS and len(vrows) == NUM_VECS
    w_slab = jnp.concatenate(wblocks, axis=0).astype(DOT_DTYPE)
    vrows += [jnp.zeros((1, LANES), jnp.float32)] * (VEC_ROWS - NUM_VECS)
    v_slab = jnp.concatenate(vrows, axis=0)
    return w_slab, v_slab


# ------------------------------ forward pass ---------------------------------
def mask_ghd_as_cond(ghd, accurate_tangent):
    """cond = [accurate_tangent (B, 3*num_branch), masked_ghd (B, 3*num_basis)]."""
    B = ghd.shape[0]
    masked_ghd = ghd.reshape(B, -1, 3)[:, :NUM_BASIS, :].reshape(B, -1)
    tangent = accurate_tangent.reshape(B, NUM_BRANCH * 3)
    return jnp.concatenate([tangent, masked_ghd], axis=1)


@jax.jit
def cvae_forward(w_slab, v_slab, data_dict, eps):
    # translate_input glue: x = cat(branch_length, relative_directions, fouriers)
    x = jnp.concatenate(
        [data_dict["branch_length"], data_dict["relative_directions"], data_dict["fouriers"]],
        axis=1,
    )
    cond = mask_ghd_as_cond(data_dict["ghd"], data_dict["accurate_tangent"])
    B = x.shape[0]

    # one lane-dense input slab: x | eps | cond  (1 DMA instead of 3 narrow ones)
    in_slab = jnp.zeros((B, IN_SLAB), jnp.float32)
    in_slab = in_slab.at[:, X_OFF:X_OFF + INPUT_DIM].set(x)
    in_slab = in_slab.at[:, EPS_OFF:EPS_OFF + LATENT_DIM].set(eps)
    in_slab = in_slab.at[:, COND_OFF:COND_OFF + CONDITION_DIM].set(cond)

    flops = 2 * B * (
        INPUT_DIM * HIDDEN_DIM                        # fc1
        + 6 * 2 * HIDDEN_DIM * HIDDEN_DIM             # 6 residual blocks
        + 4 * HIDDEN_DIM * HIDDEN_DIM                 # fc2, fc3, fcd2, fcd3
        + 2 * HIDDEN_DIM * HIDDEN_DIM                 # fc21_1, fc22_1
        + 2 * HIDDEN_DIM * LATENT_DIM                 # fc21_2, fc22_2
        + (LATENT_DIM + CONDITION_DIM) * HIDDEN_DIM   # fcd1
        + HIDDEN_DIM * INPUT_DIM                      # fce
    )
    cost = pl.CostEstimate(
        flops=flops,
        transcendentals=B * LATENT_DIM + 12 * HIDDEN_DIM,
        bytes_accessed=int(w_slab.size) * 2 + int(v_slab.size) * 4
                       + B * (IN_SLAB + OUT_SLAB) * 4,
    )

    out = pl.pallas_call(
        cvae_fused_kernel,
        out_shape=jax.ShapeDtypeStruct((B, OUT_SLAB), jnp.float32),
        in_specs=[_VMEM, _VMEM, _VMEM],
        out_specs=_VMEM,
        compiler_params=pltpu.CompilerParams(
            # scale-up guard (v5e default scoped VMEM is 16 MiB); footprint here ~1 MiB
            vmem_limit_bytes=32 * 1024 * 1024,
        ),
        cost_estimate=cost,
    )(in_slab, w_slab, v_slab)

    recon = out[:, :INPUT_DIM]
    mu = out[:, MU_OFF:MU_OFF + LATENT_DIM]
    logvar = out[:, LV_OFF:LV_OFF + LATENT_DIM]
    # TODO(synk): cpcd_reconstruct.forward_cpcd (external geometry op) has no Pallas equivalent.
    return x, recon, mu, logvar


# ------------------------------ pure-JAX references --------------------------
def _dot_f32(h, w):
    return jnp.dot(h, w, precision=jax.lax.Precision.HIGHEST)


def _dot_bf16(h, w):
    return jnp.dot(h.astype(jnp.bfloat16), w.astype(jnp.bfloat16),
                   preferred_element_type=jnp.float32)


def _lin_f32(h, w, b):
    return _dot_f32(h, w) + b


def _lin_bf16(h, w, b):
    return _dot_bf16(h, w) + b


def _bn_ref(h, g, be):
    mean = jnp.mean(h, axis=0, keepdims=True)
    d = h - mean
    var = jnp.mean(d * d, axis=0, keepdims=True)
    return d * (g * jax.lax.rsqrt(var + BN_EPS)) + be


def _res_ref(h, prm, lin_fn):
    w1, b1, g1, be1, w2, b2, g2, be2 = prm
    y = jnp.maximum(_bn_ref(lin_fn(h, w1, b1), g1, be1), 0.0)
    y = _bn_ref(lin_fn(y, w2, b2), g2, be2) + h
    return jnp.maximum(y, 0.0)


def _forward_ref(p, x, cond, eps, lin_fn, dot_fn):
    h = lin_fn(x, *p["fc1"]); h = _res_ref(h, p["res1"], lin_fn)
    h = lin_fn(h, *p["fc2"]); h = _res_ref(h, p["res2"], lin_fn)
    h = lin_fn(h, *p["fc3"]); h = _res_ref(h, p["res3"], lin_fn)
    mu = lin_fn(lin_fn(h, *p["fc21_1"]), *p["fc21_2"])
    logvar = lin_fn(lin_fn(h, *p["fc22_1"]), *p["fc22_2"])
    z = mu + eps * jnp.exp(0.5 * logvar)
    wd1, bd1 = p["fcd1"]
    hd = dot_fn(z, wd1[:LATENT_DIM, :]) + dot_fn(cond, wd1[LATENT_DIM:, :]) + bd1
    hd = _res_ref(hd, p["resd1"], lin_fn)
    hd = lin_fn(hd, *p["fcd2"]); hd = _res_ref(hd, p["resd2"], lin_fn)
    hd = lin_fn(hd, *p["fcd3"]); hd = _res_ref(hd, p["resd3"], lin_fn)
    recon = lin_fn(hd, *p["fce"])
    return recon, mu, logvar


def cvae_forward_ref_f32(p, x, cond, eps):
    return _forward_ref(p, x, cond, eps, _lin_f32, _dot_f32)


def cvae_forward_ref_mirror(p, x, cond, eps):
    """Same math as the kernel's precision policy: bf16 dot operands, f32 elsewhere."""
    return _forward_ref(p, x, cond, eps, _lin_bf16, _dot_bf16)


# ------------------------------ demo -----------------------------------------
if __name__ == "__main__":
    key = jax.random.PRNGKey(0)
    B = 8  # no batch padding: BatchNorm (training mode) statistics stay exact; needs B > 1
    k_in, k_param, k_eps = jax.random.split(key, 3)
    ks = jax.random.split(k_in, 5)

    data_dict = {
        "branch_length": jax.random.normal(ks[0], (B, NUM_BRANCH), dtype=jnp.float32),
        "relative_directions": jax.random.normal(ks[1], (B, 4 * NUM_BRANCH), dtype=jnp.float32),
        "fouriers": jax.random.normal(
            ks[2], (B, NUM_BRANCH * NUM_FOURIER * FOURIER_PER_BRANCH), dtype=jnp.float32
        ),
        # ghd has 20 basis functions; the module masks down to the first NUM_BASIS=16.
        "ghd": jax.random.normal(ks[3], (B, 20 * 3), dtype=jnp.float32),
        "accurate_tangent": jax.random.normal(ks[4], (B, NUM_BRANCH, 3), dtype=jnp.float32),
    }
    eps = jax.random.normal(k_eps, (B, LATENT_DIM), dtype=jnp.float32)

    params = init_params(k_param)
    w_slab, v_slab = pack_params(params)

    x, recon, mu, logvar = cvae_forward(w_slab, v_slab, data_dict, eps)
    jax.block_until_ready((x, recon, mu, logvar))

    assert x.shape == (B, INPUT_DIM)
    assert recon.shape == (B, INPUT_DIM)
    assert mu.shape == (B, LATENT_DIM)
    assert logvar.shape == (B, LATENT_DIM)
    assert jnp.isfinite(recon).all() and jnp.isfinite(mu).all() and jnp.isfinite(logvar).all()

    cond = mask_ghd_as_cond(data_dict["ghd"], data_dict["accurate_tangent"])

    # (1) tight check against a reference with the kernel's exact precision policy
    r_m, m_m, l_m = cvae_forward_ref_mirror(params, x, cond, eps)
    err_mirror = float(
        jnp.max(jnp.array([
            jnp.max(jnp.abs(recon - r_m)),
            jnp.max(jnp.abs(mu - m_m)),
            jnp.max(jnp.abs(logvar - l_m)),
        ]))
    )
    assert err_mirror < 2e-3, f"kernel vs bf16-mirror reference mismatch: {err_mirror}"

    # (2) loose guard against the pure-f32 reference (documents bf16-operand drift only)
    r_f, m_f, l_f = cvae_forward_ref_f32(params, x, cond, eps)
    drift = float(
        jnp.max(jnp.array([
            jnp.max(jnp.abs(recon - r_f)),
            jnp.max(jnp.abs(mu - m_f)),
            jnp.max(jnp.abs(logvar - l_f)),
        ]))
    )
    assert drift < 1.0, f"bf16 drift vs f32 reference too large: {drift}"

    print("KERNEL_OK")
</pallas_src>

<mosaic_0001>
module attributes {stable_mosaic.version = 11 : i64} {
  func.func @cvae_fused_kernel(%arg0: memref<8x256xf32, #tpu.memory_space<vmem>>, %arg1: memref<2816x128xbf16, #tpu.memory_space<vmem>>, %arg2: memref<48x128xf32, #tpu.memory_space<vmem>>, %arg3: memref<8x256xf32, #tpu.memory_space<vmem>>) attributes {dimension_semantics = [], scalar_prefetch = 0 : i64, scratch_operands = 0 : i64, tpu.core_type = #tpu.core_type<tc>} {
    %c0 = arith.constant 0 : index
    %c0_0 = arith.constant 0 : index
    %0 = vector.load %arg0[%c0, %c0_0] : memref<8x256xf32, #tpu.memory_space<vmem>>, vector<8x128xf32>
    %c0_1 = arith.constant 0 : index
    %c128 = arith.constant 128 : index
    %1 = vector.load %arg0[%c0_1, %c128] : memref<8x256xf32, #tpu.memory_space<vmem>>, vector<8x128xf32>
    %c0_2 = arith.constant 0 : index
    %c64 = arith.constant 64 : index
    %2 = vector.load %arg0[%c0_2, %c64] : memref<8x256xf32, #tpu.memory_space<vmem>>, vector<8x16xf32>
    %c0_3 = arith.constant 0 : index
    %c0_4 = arith.constant 0 : index
    %3 = vector.load %arg1[%c0_3, %c0_4] : memref<2816x128xbf16, #tpu.memory_space<vmem>>, vector<128x128xbf16>
    %c0_5 = arith.constant 0 : index
    %c0_6 = arith.constant 0 : index
    %4 = vector.load %arg2[%c0_5, %c0_6] : memref<48x128xf32, #tpu.memory_space<vmem>>, vector<1x128xf32>
    %5 = arith.truncf %0 : vector<8x128xf32> to vector<8x128xbf16>
    %cst = arith.constant dense<0.000000e+00> : vector<8x128xf32>
    %6 = tpu.matmul %5, %3, %cst {dimension_numbers = #tpu.dot_dimension_numbers<[1], [0], [0], [1], [0, 0, 1, 1], [], []>} : vector<8x128xbf16>, vector<128x128xbf16>, vector<8x128xf32> -> vector<8x128xf32>
    %7 = vector.broadcast %4 : vector<1x128xf32> to vector<8x128xf32>
    %8 = arith.addf %6, %7 : vector<8x128xf32>
    %c128_7 = arith.constant 128 : index
    %c0_8 = arith.constant 0 : index
    %9 = vector.load %arg1[%c128_7, %c0_8] : memref<2816x128xbf16, #tpu.memory_space<vmem>>, vector<128x128xbf16>
    %c1 = arith.constant 1 : index
    %c0_9 = arith.constant 0 : index
    %10 = vector.load %arg2[%c1, %c0_9] : memref<48x128xf32, #tpu.memory_space<vmem>>, vector<1x128xf32>
    %11 = arith.truncf %8 : vector<8x128xf32> to vector<8x128xbf16>
    %cst_10 = arith.constant dense<0.000000e+00> : vector<8x128xf32>
    %12 = tpu.matmul %11, %9, %cst_10 {dimension_numbers = #tpu.dot_dimension_numbers<[1], [0], [0], [1], [0, 0, 1, 1], [], []>} : vector<8x128xbf16>, vector<128x128xbf16>, vector<8x128xf32> -> vector<8x128xf32>
    %13 = vector.broadcast %10 : vector<1x128xf32> to vector<8x128xf32>
    %14 = arith.addf %12, %13 : vector<8x128xf32>
    %c2 = arith.constant 2 : index
    %c0_11 = arith.constant 0 : index
    %15 = vector.load %arg2[%c2, %c0_11] : memref<48x128xf32, #tpu.memory_space<vmem>>, vector<1x128xf32>
    %c3 = arith.constant 3 : index
    %c0_12 = arith.constant 0 : index
    %16 = vector.load %arg2[%c3, %c0_12] : memref<48x128xf32, #tpu.memory_space<vmem>>, vector<1x128xf32>
    %cst_13 = arith.constant dense<0.000000e+00> : vector<128xf32>
    %17 = vector.multi_reduction <add>, %14, %cst_13 [0] : vector<8x128xf32> to vector<128xf32>
    %18 = vector.shape_cast %17 : vector<128xf32> to vector<1x128xf32>
    %cst_14 = arith.constant 8.000000e+00 : f32
    %19 = vector.broadcast %cst_14 : f32 to vector<1x128xf32>
    %20 = arith.divf %18, %19 : vector<1x128xf32>
    %21 = vector.broadcast %20 : vector<1x128xf32> to vector<8x128xf32>
    %22 = arith.subf %14, %21 : vector<8x128xf32>
    %23 = arith.mulf %22, %22 : vector<8x128xf32>
    %cst_15 = arith.constant dense<0.000000e+00> : vector<128xf32>
    %24 = vector.multi_reduction <add>, %23, %cst_15 [0] : vector<8x128xf32> to vector<128xf32>
    %25 = vector.shape_cast %24 : vector<128xf32> to vector<1x128xf32>
    %cst_16 = arith.constant 8.000000e+00 : f32
    %26 = vector.broadcast %cst_16 : f32 to vector<1x128xf32>
    %27 = arith.divf %25, %26 : vector<1x128xf32>
    %cst_17 = arith.constant 9.99999974E-6 : f32
    %28 = vector.broadcast %cst_17 : f32 to vector<1x128xf32>
    %29 = arith.addf %27, %28 : vector<1x128xf32>
    %30 = math.rsqrt %29 : vector<1x128xf32>
    %31 = arith.mulf %15, %30 : vector<1x128xf32>
    %32 = vector.broadcast %31 : vector<1x128xf32> to vector<8x128xf32>
    %33 = arith.mulf %22, %32 : vector<8x128xf32>
    %34 = vector.broadcast %16 : vector<1x128xf32> to vector<8x128xf32>
    %35 = arith.addf %33, %34 : vector<8x128xf32>
    %cst_18 = arith.constant 0.000000e+00 : f32
    %36 = vector.broadcast %cst_18 : f32 to vector<8x128xf32>
    %37 = arith.maximumf %35, %36 : vector<8x128xf32>
    %c256 = arith.constant 256 : index
    %c0_19 = arith.constant 0 : index
    %38 = vector.load %arg1[%c256, %c0_19] : memref<2816x128xbf16, #tpu.memory_space<vmem>>, vector<128x128xbf16>
    %c4 = arith.constant 4 : index
    %c0_20 = arith.constant 0 : index
    %39 = vector.load %arg2[%c4, %c0_20] : memref<48x128xf32, #tpu.memory_space<vmem>>, vector<1x128xf32>
    %40 = arith.truncf %37 : vector<8x128xf32> to vector<8x128xbf16>
    %cst_21 = arith.constant dense<0.000000e+00> : vector<8x128xf32>
    %41 = tpu.matmul %40, %38, %cst_21 {dimension_numbers = #tpu.dot_dimension_numbers<[1], [0], [0], [1], [0, 0, 1, 1], [], []>} : vector<8x128xbf16>, vector<128x128xbf16>, vector<8x128xf32> -> vector<8x128xf32>
    %42 = vector.broadcast %39 : vector<1x128xf32> to vector<8x128xf32>
    %43 = arith.addf %41, %42 : vector<8x128xf32>
    %c5 = arith.constant 5 : index
    %c0_22 = arith.constant 0 : index
    %44 = vector.load %arg2[%c5, %c0_22] : memref<48x128xf32, #tpu.memory_space<vmem>>, vector<1x128xf32>
    %c6 = arith.constant 6 : index
    %c0_23 = arith.constant 0 : index
    %45 = vector.load %arg2[%c6, %c0_23] : memref<48x128xf32, #tpu.memory_space<vmem>>, vector<1x128xf32>
    %cst_24 = arith.constant dense<0.000000e+00> : vector<128xf32>
    %46 = vector.multi_reduction <add>, %43, %cst_24 [0] : vector<8x128xf32> to vector<128xf32>
    %47 = vector.shape_cast %46 : vector<128xf32> to vector<1x128xf32>
    %cst_25 = arith.constant 8.000000e+00 : f32
    %48 = vector.broadcast %cst_25 : f32 to vector<1x128xf32>
    %49 = arith.divf %47, %48 : vector<1x128xf32>
    %50 = vector.broadcast %49 : vector<1x128xf32> to vector<8x128xf32>
    %51 = arith.subf %43, %50 : vector<8x128xf32>
    %52 = arith.mulf %51, %51 : vector<8x128xf32>
    %cst_26 = arith.constant dense<0.000000e+00> : vector<128xf32>
    %53 = vector.multi_reduction <add>, %52, %cst_26 [0] : vector<8x128xf32> to vector<128xf32>
    %54 = vector.shape_cast %53 : vector<128xf32> to vector<1x128xf32>
    %cst_27 = arith.constant 8.000000e+00 : f32
    %55 = vector.broadcast %cst_27 : f32 to vector<1x128xf32>
    %56 = arith.divf %54, %55 : vector<1x128xf32>
    %cst_28 = arith.constant 9.99999974E-6 : f32
    %57 = vector.broadcast %cst_28 : f32 to vector<1x128xf32>
    %58 = arith.addf %56, %57 : vector<1x128xf32>
    %59 = math.rsqrt %58 : vector<1x128xf32>
    %60 = arith.mulf %44, %59 : vector<1x128xf32>
    %61 = vector.broadcast %60 : vector<1x128xf32> to vector<8x128xf32>
    %62 = arith.mulf %51, %61 : vector<8x128xf32>
    %63 = vector.broadcast %45 : vector<1x128xf32> to vector<8x128xf32>
    %64 = arith.addf %62, %63 : vector<8x128xf32>
    %65 = arith.addf %64, %8 : vector<8x128xf32>
    %cst_29 = arith.constant 0.000000e+00 : f32
    %66 = vector.broadcast %cst_29 : f32 to vector<8x128xf32>
    %67 = arith.maximumf %65, %66 : vector<8x128xf32>
    %c384 = arith.constant 384 : index
    %c0_30 = arith.constant 0 : index
    %68 = vector.load %arg1[%c384, %c0_30] : memref<2816x128xbf16, #tpu.memory_space<vmem>>, vector<128x128xbf16>
    %c7 = arith.constant 7 : index
    %c0_31 = arith.constant 0 : index
    %69 = vector.load %arg2[%c7, %c0_31] : memref<48x128xf32, #tpu.memory_space<vmem>>, vector<1x128xf32>
    %70 = arith.truncf %67 : vector<8x128xf32> to vector<8x128xbf16>
    %cst_32 = arith.constant dense<0.000000e+00> : vector<8x128xf32>
    %71 = tpu.matmul %70, %68, %cst_32 {dimension_numbers = #tpu.dot_dimension_numbers<[1], [0], [0], [1], [0, 0, 1, 1], [], []>} : vector<8x128xbf16>, vector<128x128xbf16>, vector<8x128xf32> -> vector<8x128xf32>
    %72 = vector.broadcast %69 : vector<1x128xf32> to vector<8x128xf32>
    %73 = arith.addf %71, %72 : vector<8x128xf32>
    %c512 = arith.constant 512 : index
    %c0_33 = arith.constant 0 : index
    %74 = vector.load %arg1[%c512, %c0_33] : memref<2816x128xbf16, #tpu.memory_space<vmem>>, vector<128x128xbf16>
    %c8 = arith.constant 8 : index
    %c0_34 = arith.constant 0 : index
    %75 = vector.load %arg2[%c8, %c0_34] : memref<48x128xf32, #tpu.memory_space<vmem>>, vector<1x128xf32>
    %76 = arith.truncf %73 : vector<8x128xf32> to vector<8x128xbf16>
    %cst_35 = arith.constant dense<0.000000e+00> : vector<8x128xf32>
    %77 = tpu.matmul %76, %74, %cst_35 {dimension_numbers = #tpu.dot_dimension_numbers<[1], [0], [0], [1], [0, 0, 1, 1], [], []>} : vector<8x128xbf16>, vector<128x128xbf16>, vector<8x128xf32> -> vector<8x128xf32>
    %78 = vector.broadcast %75 : vector<1x128xf32> to vector<8x128xf32>
    %79 = arith.addf %77, %78 : vector<8x128xf32>
    %c9 = arith.constant 9 : index
    %c0_36 = arith.constant 0 : index
    %80 = vector.load %arg2[%c9, %c0_36] : memref<48x128xf32, #tpu.memory_space<vmem>>, vector<1x128xf32>
    %c10 = arith.constant 10 : index
    %c0_37 = arith.constant 0 : index
    %81 = vector.load %arg2[%c10, %c0_37] : memref<48x128xf32, #tpu.memory_space<vmem>>, vector<1x128xf32>
    %cst_38 = arith.constant dense<0.000000e+00> : vector<128xf32>
    %82 = vector.multi_reduction <add>, %79, %cst_38 [0] : vector<8x128xf32> to vector<128xf32>
    %83 = vector.shape_cast %82 : vector<128xf32> to vector<1x128xf32>
    %cst_39 = arith.constant 8.000000e+00 : f32
    %84 = vector.broadcast %cst_39 : f32 to vector<1x128xf32>
    %85 = arith.divf %83, %84 : vector<1x128xf32>
    %86 = vector.broadcast %85 : vector<1x128xf32> to vector<8x128xf32>
    %87 = arith.subf %79, %86 : vector<8x128xf32>
    %88 = arith.mulf %87, %87 : vector<8x128xf32>
    %cst_40 = arith.constant dense<0.000000e+00> : vector<128xf32>
    %89 = vector.multi_reduction <add>, %88, %cst_40 [0] : vector<8x128xf32> to vector<128xf32>
    %90 = vector.shape_cast %89 : vector<128xf32> to vector<1x128xf32>
    %cst_41 = arith.constant 8.000000e+00 : f32
    %91 = vector.broadcast %cst_41 : f32 to vector<1x128xf32>
    %92 = arith.divf %90, %91 : vector<1x128xf32>
    %cst_42 = arith.constant 9.99999974E-6 : f32
    %93 = vector.broadcast %cst_42 : f32 to vector<1x128xf32>
    %94 = arith.addf %92, %93 : vector<1x128xf32>
    %95 = math.rsqrt %94 : vector<1x128xf32>
    %96 = arith.mulf %80, %95 : vector<1x128xf32>
    %97 = vector.broadcast %96 : vector<1x128xf32> to vector<8x128xf32>
    %98 = arith.mulf %87, %97 : vector<8x128xf32>
    %99 = vector.broadcast %81 : vector<1x128xf32> to vector<8x128xf32>
    %100 = arith.addf %98, %99 : vector<8x128xf32>
    %cst_43 = arith.constant 0.000000e+00 : f32
    %101 = vector.broadcast %cst_43 : f32 to vector<8x128xf32>
    %102 = arith.maximumf %100, %101 : vector<8x128xf32>
    %c640 = arith.constant 640 : index
    %c0_44 = arith.constant 0 : index
    %103 = vector.load %arg1[%c640, %c0_44] : memref<2816x128xbf16, #tpu.memory_space<vmem>>, vector<128x128xbf16>
    %c11 = arith.constant 11 : index
    %c0_45 = arith.constant 0 : index
    %104 = vector.load %arg2[%c11, %c0_45] : memref<48x128xf32, #tpu.memory_space<vmem>>, vector<1x128xf32>
    %105 = arith.truncf %102 : vector<8x128xf32> to vector<8x128xbf16>
    %cst_46 = arith.constant dense<0.000000e+00> : vector<8x128xf32>
    %106 = tpu.matmul %105, %103, %cst_46 {dimension_numbers = #tpu.dot_dimension_numbers<[1], [0], [0], [1], [0, 0, 1, 1], [], []>} : vector<8x128xbf16>, vector<128x128xbf16>, vector<8x128xf32> -> vector<8x128xf32>
    %107 = vector.broadcast %104 : vector<1x128xf32> to vector<8x128xf32>
    %108 = arith.addf %106, %107 : vector<8x128xf32>
    %c12 = arith.constant 12 : index
    %c0_47 = arith.constant 0 : index
    %109 = vector.load %arg2[%c12, %c0_47] : memref<48x128xf32, #tpu.memory_space<vmem>>, vector<1x128xf32>
    %c13 = arith.constant 13 : index
    %c0_48 = arith.constant 0 : index
    %110 = vector.load %arg2[%c13, %c0_48] : memref<48x128xf32, #tpu.memory_space<vmem>>, vector<1x128xf32>
    %cst_49 = arith.constant dense<0.000000e+00> : vector<128xf32>
    %111 = vector.multi_reduction <add>, %108, %cst_49 [0] : vector<8x128xf32> to vector<128xf32>
    %112 = vector.shape_cast %111 : vector<128xf32> to vector<1x128xf32>
    %cst_50 = arith.constant 8.000000e+00 : f32
    %113 = vector.broadcast %cst_50 : f32 to vector<1x128xf32>
    %114 = arith.divf %112, %113 : vector<1x128xf32>
    %115 = vector.broadcast %114 : vector<1x128xf32> to vector<8x128xf32>
    %116 = arith.subf %108, %115 : vector<8x128xf32>
    %117 = arith.mulf %116, %116 : vector<8x128xf32>
    %cst_51 = arith.constant dense<0.000000e+00> : vector<128xf32>
    %118 = vector.multi_reduction <add>, %117, %cst_51 [0] : vector<8x128xf32> to vector<128xf32>
    %119 = vector.shape_cast %118 : vector<128xf32> to vector<1x128xf32>
    %cst_52 = arith.constant 8.000000e+00 : f32
    %120 = vector.broadcast %cst_52 : f32 to vector<1x128xf32>
    %121 = arith.divf %119, %120 : vector<1x128xf32>
    %cst_53 = arith.constant 9.99999974E-6 : f32
    %122 = vector.broadcast %cst_53 : f32 to vector<1x128xf32>
    %123 = arith.addf %121, %122 : vector<1x128xf32>
    %124 = math.rsqrt %123 : vector<1x128xf32>
    %125 = arith.mulf %109, %124 : vector<1x128xf32>
    %126 = vector.broadcast %125 : vector<1x128xf32> to vector<8x128xf32>
    %127 = arith.mulf %116, %126 : vector<8x128xf32>
    %128 = vector.broadcast %110 : vector<1x128xf32> to vector<8x128xf32>
    %129 = arith.addf %127, %128 : vector<8x128xf32>
    %130 = arith.addf %129, %73 : vector<8x128xf32>
    %cst_54 = arith.constant 0.000000e+00 : f32
    %131 = vector.broadcast %cst_54 : f32 to vector<8x128xf32>
    %132 = arith.maximumf %130, %131 : vector<8x128xf32>
    %c768 = arith.constant 768 : index
    %c0_55 = arith.constant 0 : index
    %133 = vector.load %arg1[%c768, %c0_55] : memref<2816x128xbf16, #tpu.memory_space<vmem>>, vector<128x128xbf16>
    %c14 = arith.constant 14 : index
    %c0_56 = arith.constant 0 : index
    %134 = vector.load %arg2[%c14, %c0_56] : memref<48x128xf32, #tpu.memory_space<vmem>>, vector<1x128xf32>
    %135 = arith.truncf %132 : vector<8x128xf32> to vector<8x128xbf16>
    %cst_57 = arith.constant dense<0.000000e+00> : vector<8x128xf32>
    %136 = tpu.matmul %135, %133, %cst_57 {dimension_numbers = #tpu.dot_dimension_numbers<[1], [0], [0], [1], [0, 0, 1, 1], [], []>} : vector<8x128xbf16>, vector<128x128xbf16>, vector<8x128xf32> -> vector<8x128xf32>
    %137 = vector.broadcast %134 : vector<1x128xf32> to vector<8x128xf32>
    %138 = arith.addf %136, %137 : vector<8x128xf32>
    %c896 = arith.constant 896 : index
    %c0_58 = arith.constant 0 : index
    %139 = vector.load %arg1[%c896, %c0_58] : memref<2816x128xbf16, #tpu.memory_space<vmem>>, vector<128x128xbf16>
    %c15 = arith.constant 15 : index
    %c0_59 = arith.constant 0 : index
    %140 = vector.load %arg2[%c15, %c0_59] : memref<48x128xf32, #tpu.memory_space<vmem>>, vector<1x128xf32>
    %141 = arith.truncf %138 : vector<8x128xf32> to vector<8x128xbf16>
    %cst_60 = arith.constant dense<0.000000e+00> : vector<8x128xf32>
    %142 = tpu.matmul %141, %139, %cst_60 {dimension_numbers = #tpu.dot_dimension_numbers<[1], [0], [0], [1], [0, 0, 1, 1], [], []>} : vector<8x128xbf16>, vector<128x128xbf16>, vector<8x128xf32> -> vector<8x128xf32>
    %143 = vector.broadcast %140 : vector<1x128xf32> to vector<8x128xf32>
    %144 = arith.addf %142, %143 : vector<8x128xf32>
    %c16 = arith.constant 16 : index
    %c0_61 = arith.constant 0 : index
    %145 = vector.load %arg2[%c16, %c0_61] : memref<48x128xf32, #tpu.memory_space<vmem>>, vector<1x128xf32>
    %c17 = arith.constant 17 : index
    %c0_62 = arith.constant 0 : index
    %146 = vector.load %arg2[%c17, %c0_62] : memref<48x128xf32, #tpu.memory_space<vmem>>, vector<1x128xf32>
    %cst_63 = arith.constant dense<0.000000e+00> : vector<128xf32>
    %147 = vector.multi_reduction <add>, %144, %cst_63 [0] : vector<8x128xf32> to vector<128xf32>
    %148 = vector.shape_cast %147 : vector<128xf32> to vector<1x128xf32>
    %cst_64 = arith.constant 8.000000e+00 : f32
    %149 = vector.broadcast %cst_64 : f32 to vector<1x128xf32>
    %150 = arith.divf %148, %149 : vector<1x128xf32>
    %151 = vector.broadcast %150 : vector<1x128xf32> to vector<8x128xf32>
    %152 = arith.subf %144, %151 : vector<8x128xf32>
    %153 = arith.mulf %152, %152 : vector<8x128xf32>
    %cst_65 = arith.constant dense<0.000000e+00> : vector<128xf32>
    %154 = vector.multi_reduction <add>, %153, %cst_65 [0] : vector<8x128xf32> to vector<128xf32>
    %155 = vector.shape_cast %154 : vector<128xf32> to vector<1x128xf32>
    %cst_66 = arith.constant 8.000000e+00 : f32
    %156 = vector.broadcast %cst_66 : f32 to vector<1x128xf32>
    %157 = arith.divf %155, %156 : vector<1x128xf32>
    %cst_67 = arith.constant 9.99999974E-6 : f32
    %158 = vector.broadcast %cst_67 : f32 to vector<1x128xf32>
    %159 = arith.addf %157, %158 : vector<1x128xf32>
    %160 = math.rsqrt %159 : vector<1x128xf32>
    %161 = arith.mulf %145, %160 : vector<1x128xf32>
    %162 = vector.broadcast %161 : vector<1x128xf32> to vector<8x128xf32>
    %163 = arith.mulf %152, %162 : vector<8x128xf32>
    %164 = vector.broadcast %146 : vector<1x128xf32> to vector<8x128xf32>
    %165 = arith.addf %163, %164 : vector<8x128xf32>
    %cst_68 = arith.constant 0.000000e+00 : f32
    %166 = vector.broadcast %cst_68 : f32 to vector<8x128xf32>
    %167 = arith.maximumf %165, %166 : vector<8x128xf32>
    %c1024 = arith.constant 1024 : index
    %c0_69 = arith.constant 0 : index
    %168 = vector.load %arg1[%c1024, %c0_69] : memref<2816x128xbf16, #tpu.memory_space<vmem>>, vector<128x128xbf16>
    %c18 = arith.constant 18 : index
    %c0_70 = arith.constant 0 : index
    %169 = vector.load %arg2[%c18, %c0_70] : memref<48x128xf32, #tpu.memory_space<vmem>>, vector<1x128xf32>
    %170 = arith.truncf %167 : vector<8x128xf32> to vector<8x128xbf16>
    %cst_71 = arith.constant dense<0.000000e+00> : vector<8x128xf32>
    %171 = tpu.matmul %170, %168, %cst_71 {dimension_numbers = #tpu.dot_dimension_numbers<[1], [0], [0], [1], [0, 0, 1, 1], [], []>} : vector<8x128xbf16>, vector<128x128xbf16>, vector<8x128xf32> -> vector<8x128xf32>
    %172 = vector.broadcast %169 : vector<1x128xf32> to vector<8x128xf32>
    %173 = arith.addf %171, %172 : vector<8x128xf32>
    %c19 = arith.constant 19 : index
    %c0_72 = arith.constant 0 : index
    %174 = vector.load %arg2[%c19, %c0_72] : memref<48x128xf32, #tpu.memory_space<vmem>>, vector<1x128xf32>
    %c20 = arith.constant 20 : index
    %c0_73 = arith.constant 0 : index
    %175 = vector.load %arg2[%c20, %c0_73] : memref<48x128xf32, #tpu.memory_space<vmem>>, vector<1x128xf32>
    %cst_74 = arith.constant dense<0.000000e+00> : vector<128xf32>
    %176 = vector.multi_reduction <add>, %173, %cst_74 [0] : vector<8x128xf32> to vector<128xf32>
    %177 = vector.shape_cast %176 : vector<128xf32> to vector<1x128xf32>
    %cst_75 = arith.constant 8.000000e+00 : f32
    %178 = vector.broadcast %cst_75 : f32 to vector<1x128xf32>
    %179 = arith.divf %177, %178 : vector<1x128xf32>
    %180 = vector.broadcast %179 : vector<1x128xf32> to vector<8x128xf32>
    %181 = arith.subf %173, %180 : vector<8x128xf32>
    %182 = arith.mulf %181, %181 : vector<8x128xf32>
    %cst_76 = arith.constant dense<0.000000e+00> : vector<128xf32>
    %183 = vector.multi_reduction <add>, %182, %cst_76 [0] : vector<8x128xf32> to vector<128xf32>
    %184 = vector.shape_cast %183 : vector<128xf32> to vector<1x128xf32>
    %cst_77 = arith.constant 8.000000e+00 : f32
    %185 = vector.broadcast %cst_77 : f32 to vector<1x128xf32>
    %186 = arith.divf %184, %185 : vector<1x128xf32>
    %cst_78 = arith.constant 9.99999974E-6 : f32
    %187 = vector.broadcast %cst_78 : f32 to vector<1x128xf32>
    %188 = arith.addf %186, %187 : vector<1x128xf32>
    %189 = math.rsqrt %188 : vector<1x128xf32>
    %190 = arith.mulf %174, %189 : vector<1x128xf32>
    %191 = vector.broadcast %190 : vector<1x128xf32> to vector<8x128xf32>
    %192 = arith.mulf %181, %191 : vector<8x128xf32>
    %193 = vector.broadcast %175 : vector<1x128xf32> to vector<8x128xf32>
    %194 = arith.addf %192, %193 : vector<8x128xf32>
    %195 = arith.addf %194, %138 : vector<8x128xf32>
    %cst_79 = arith.constant 0.000000e+00 : f32
    %196 = vector.broadcast %cst_79 : f32 to vector<8x128xf32>
    %197 = arith.maximumf %195, %196 : vector<8x128xf32>
    %c1152 = arith.constant 1152 : index
    %c0_80 = arith.constant 0 : index
    %198 = vector.load %arg1[%c1152, %c0_80] : memref<2816x128xbf16, #tpu.memory_space<vmem>>, vector<128x128xbf16>
    %c21 = arith.constant 21 : index
    %c0_81 = arith.constant 0 : index
    %199 = vector.load %arg2[%c21, %c0_81] : memref<48x128xf32, #tpu.memory_space<vmem>>, vector<1x128xf32>
    %200 = arith.truncf %197 : vector<8x128xf32> to vector<8x128xbf16>
    %cst_82 = arith.constant dense<0.000000e+00> : vector<8x128xf32>
    %201 = tpu.matmul %200, %198, %cst_82 {dimension_numbers = #tpu.dot_dimension_numbers<[1], [0], [0], [1], [0, 0, 1, 1], [], []>} : vector<8x128xbf16>, vector<128x128xbf16>, vector<8x128xf32> -> vector<8x128xf32>
    %202 = vector.broadcast %199 : vector<1x128xf32> to vector<8x128xf32>
    %203 = arith.addf %201, %202 : vector<8x128xf32>
    %c1280 = arith.constant 1280 : index
    %c0_83 = arith.constant 0 : index
    %204 = vector.load %arg1[%c1280, %c0_83] : memref<2816x128xbf16, #tpu.memory_space<vmem>>, vector<128x128xbf16>
    %c22 = arith.constant 22 : index
    %c0_84 = arith.constant 0 : index
    %205 = vector.load %arg2[%c22, %c0_84] : memref<48x128xf32, #tpu.memory_space<vmem>>, vector<1x128xf32>
    %206 = arith.truncf %203 : vector<8x128xf32> to vector<8x128xbf16>
    %cst_85 = arith.constant dense<0.000000e+00> : vector<8x128xf32>
    %207 = tpu.matmul %206, %204, %cst_85 {dimension_numbers = #tpu.dot_dimension_numbers<[1], [0], [0], [1], [0, 0, 1, 1], [], []>} : vector<8x128xbf16>, vector<128x128xbf16>, vector<8x128xf32> -> vector<8x128xf32>
    %208 = vector.broadcast %205 : vector<1x128xf32> to vector<8x128xf32>
    %209 = arith.addf %207, %208 : vector<8x128xf32>
    %c0_86 = arith.constant 0 : index
    %c128_87 = arith.constant 128 : index
    %210 = vector.load %arg3[%c0_86, %c128_87] : memref<8x256xf32, #tpu.memory_space<vmem>>, vector<8x128xf32>
    tpu.vector_store %arg3[%c0_86, %c128_87], %209 {strides = array<i32>} : memref<8x256xf32, #tpu.memory_space<vmem>>, vector<8x128xf32>,
    %211 = vector.extract_strided_slice %209 {offsets = [0, 0], sizes = [8, 16], strides = [1, 1]} : vector<8x128xf32> to vector<8x16xf32>
    %212 = vector.extract_strided_slice %209 {offsets = [0, 16], sizes = [8, 16], strides = [1, 1]} : vector<8x128xf32> to vector<8x16xf32>
    %cst_88 = arith.constant 5.000000e-01 : f32
    %213 = vector.broadcast %cst_88 : f32 to vector<8x16xf32>
    %214 = arith.mulf %213, %212 : vector<8x16xf32>
    %215 = math.exp %214 : vector<8x16xf32>
    %216 = arith.mulf %2, %215 : vector<8x16xf32>
    %217 = arith.addf %211, %216 : vector<8x16xf32>
    %c1408 = arith.constant 1408 : index
    %c0_89 = arith.constant 0 : index
    %218 = vector.load %arg1[%c1408, %c0_89] : memref<2816x128xbf16, #tpu.memory_space<vmem>>, vector<16x128xbf16>
    %c1536 = arith.constant 1536 : index
    %c0_90 = arith.constant 0 : index
    %219 = vector.load %arg1[%c1536, %c0_90] : memref<2816x128xbf16, #tpu.memory_space<vmem>>, vector<128x128xbf16>
    %c23 = arith.constant 23 : index
    %c0_91 = arith.constant 0 : index
    %220 = vector.load %arg2[%c23, %c0_91] : memref<48x128xf32, #tpu.memory_space<vmem>>, vector<1x128xf32>
    %221 = arith.truncf %217 : vector<8x16xf32> to vector<8x16xbf16>
    %cst_92 = arith.constant dense<0.000000e+00> : vector<8x128xf32>
    %222 = tpu.matmul %221, %218, %cst_92 {dimension_numbers = #tpu.dot_dimension_numbers<[1], [0], [0], [1], [0, 0, 1, 1], [], []>} : vector<8x16xbf16>, vector<16x128xbf16>, vector<8x128xf32> -> vector<8x128xf32>
    %223 = arith.truncf %1 : vector<8x128xf32> to vector<8x128xbf16>
    %cst_93 = arith.constant dense<0.000000e+00> : vector<8x128xf32>
    %224 = tpu.matmul %223, %219, %cst_93 {dimension_numbers = #tpu.dot_dimension_numbers<[1], [0], [0], [1], [0, 0, 1, 1], [], []>} : vector<8x128xbf16>, vector<128x128xbf16>, vector<8x128xf32> -> vector<8x128xf32>
    %225 = arith.addf %222, %224 : vector<8x128xf32>
    %226 = vector.broadcast %220 : vector<1x128xf32> to vector<8x128xf32>
    %227 = arith.addf %225, %226 : vector<8x128xf32>
    %c1664 = arith.constant 1664 : index
    %c0_94 = arith.constant 0 : index
    %228 = vector.load %arg1[%c1664, %c0_94] : memref<2816x128xbf16, #tpu.memory_space<vmem>>, vector<128x128xbf16>
    %c24 = arith.constant 24 : index
    %c0_95 = arith.constant 0 : index
    %229 = vector.load %arg2[%c24, %c0_95] : memref<48x128xf32, #tpu.memory_space<vmem>>, vector<1x128xf32>
    %230 = arith.truncf %227 : vector<8x128xf32> to vector<8x128xbf16>
    %cst_96 = arith.constant dense<0.000000e+00> : vector<8x128xf32>
    %231 = tpu.matmul %230, %228, %cst_96 {dimension_numbers = #tpu.dot_dimension_numbers<[1], [0], [0], [1], [0, 0, 1, 1], [], []>} : vector<8x128xbf16>, vector<128x128xbf16>, vector<8x128xf32> -> vector<8x128xf32>
    %232 = vector.broadcast %229 : vector<1x128xf32> to vector<8x128xf32>
    %233 = arith.addf %231, %232 : vector<8x128xf32>
    %c25 = arith.constant 25 : index
    %c0_97 = arith.constant 0 : index
    %234 = vector.load %arg2[%c25, %c0_97] : memref<48x128xf32, #tpu.memory_space<vmem>>, vector<1x128xf32>
    %c26 = arith.constant 26 : index
    %c0_98 = arith.constant 0 : index
    %235 = vector.load %arg2[%c26, %c0_98] : memref<48x128xf32, #tpu.memory_space<vmem>>, vector<1x128xf32>
    %cst_99 = arith.constant dense<0.000000e+00> : vector<128xf32>
    %236 = vector.multi_reduction <add>, %233, %cst_99 [0] : vector<8x128xf32> to vector<128xf32>
    %237 = vector.shape_cast %236 : vector<128xf32> to vector<1x128xf32>
    %cst_100 = arith.constant 8.000000e+00 : f32
    %238 = vector.broadcast %cst_100 : f32 to vector<1x128xf32>
    %239 = arith.divf %237, %238 : vector<1x128xf32>
    %240 = vector.broadcast %239 : vector<1x128xf32> to vector<8x128xf32>
    %241 = arith.subf %233, %240 : vector<8x128xf32>
    %242 = arith.mulf %241, %241 : vector<8x128xf32>
    %cst_101 = arith.constant dense<0.000000e+00> : vector<128xf32>
    %243 = vector.multi_reduction <add>, %242, %cst_101 [0] : vector<8x128xf32> to vector<128xf32>
    %244 = vector.shape_cast %243 : vector<128xf32> to vector<1x128xf32>
    %cst_102 = arith.constant 8.000000e+00 : f32
    %245 = vector.broadcast %cst_102 : f32 to vector<1x128xf32>
    %246 = arith.divf %244, %245 : vector<1x128xf32>
    %cst_103 = arith.constant 9.99999974E-6 : f32
    %247 = vector.broadcast %cst_103 : f32 to vector<1x128xf32>
    %248 = arith.addf %246, %247 : vector<1x128xf32>
    %249 = math.rsqrt %248 : vector<1x128xf32>
    %250 = arith.mulf %234, %249 : vector<1x128xf32>
    %251 = vector.broadcast %250 : vector<1x128xf32> to vector<8x128xf32>
    %252 = arith.mulf %241, %251 : vector<8x128xf32>
    %253 = vector.broadcast %235 : vector<1x128xf32> to vector<8x128xf32>
    %254 = arith.addf %252, %253 : vector<8x128xf32>
    %cst_104 = arith.constant 0.000000e+00 : f32
    %255 = vector.broadcast %cst_104 : f32 to vector<8x128xf32>
    %256 = arith.maximumf %254, %255 : vector<8x128xf32>
    %c1792 = arith.constant 1792 : index
    %c0_105 = arith.constant 0 : index
    %257 = vector.load %arg1[%c1792, %c0_105] : memref<2816x128xbf16, #tpu.memory_space<vmem>>, vector<128x128xbf16>
    %c27 = arith.constant 27 : index
    %c0_106 = arith.constant 0 : index
    %258 = vector.load %arg2[%c27, %c0_106] : memref<48x128xf32, #tpu.memory_space<vmem>>, vector<1x128xf32>
    %259 = arith.truncf %256 : vector<8x128xf32> to vector<8x128xbf16>
    %cst_107 = arith.constant dense<0.000000e+00> : vector<8x128xf32>
    %260 = tpu.matmul %259, %257, %cst_107 {dimension_numbers = #tpu.dot_dimension_numbers<[1], [0], [0], [1], [0, 0, 1, 1], [], []>} : vector<8x128xbf16>, vector<128x128xbf16>, vector<8x128xf32> -> vector<8x128xf32>
    %261 = vector.broadcast %258 : vector<1x128xf32> to vector<8x128xf32>
    %262 = arith.addf %260, %261 : vector<8x128xf32>
    %c28 = arith.constant 28 : index
    %c0_108 = arith.constant 0 : index
    %263 = vector.load %arg2[%c28, %c0_108] : memref<48x128xf32, #tpu.memory_space<vmem>>, vector<1x128xf32>
    %c29 = arith.constant 29 : index
    %c0_109 = arith.constant 0 : index
    %264 = vector.load %arg2[%c29, %c0_109] : memref<48x128xf32, #tpu.memory_space<vmem>>, vector<1x128xf32>
    %cst_110 = arith.constant dense<0.000000e+00> : vector<128xf32>
    %265 = vector.multi_reduction <add>, %262, %cst_110 [0] : vector<8x128xf32> to vector<128xf32>
    %266 = vector.shape_cast %265 : vector<128xf32> to vector<1x128xf32>
    %cst_111 = arith.constant 8.000000e+00 : f32
    %267 = vector.broadcast %cst_111 : f32 to vector<1x128xf32>
    %268 = arith.divf %266, %267 : vector<1x128xf32>
    %269 = vector.broadcast %268 : vector<1x128xf32> to vector<8x128xf32>
    %270 = arith.subf %262, %269 : vector<8x128xf32>
    %271 = arith.mulf %270, %270 : vector<8x128xf32>
    %cst_112 = arith.constant dense<0.000000e+00> : vector<128xf32>
    %272 = vector.multi_reduction <add>, %271, %cst_112 [0] : vector<8x128xf32> to vector<128xf32>
    %273 = vector.shape_cast %272 : vector<128xf32> to vector<1x128xf32>
    %cst_113 = arith.constant 8.000000e+00 : f32
    %274 = vector.broadcast %cst_113 : f32 to vector<1x128xf32>
    %275 = arith.divf %273, %274 : vector<1x128xf32>
    %cst_114 = arith.constant 9.99999974E-6 : f32
    %276 = vector.broadcast %cst_114 : f32 to vector<1x128xf32>
    %277 = arith.addf %275, %276 : vector<1x128xf32>
    %278 = math.rsqrt %277 : vector<1x128xf32>
    %279 = arith.mulf %263, %278 : vector<1x128xf32>
    %280 = vector.broadcast %279 : vector<1x128xf32> to vector<8x128xf32>
    %281 = arith.mulf %270, %280 : vector<8x128xf32>
    %282 = vector.broadcast %264 : vector<1x128xf32> to vector<8x128xf32>
    %283 = arith.addf %281, %282 : vector<8x128xf32>
    %284 = arith.addf %283, %227 : vector<8x128xf32>
    %cst_115 = arith.constant 0.000000e+00 : f32
    %285 = vector.broadcast %cst_115 : f32 to vector<8x128xf32>
    %286 = arith.maximumf %284, %285 : vector<8x128xf32>
    %c1920 = arith.constant 1920 : index
    %c0_116 = arith.constant 0 : index
    %287 = vector.load %arg1[%c1920, %c0_116] : memref<2816x128xbf16, #tpu.memory_space<vmem>>, vector<128x128xbf16>
    %c30 = arith.constant 30 : index
    %c0_117 = arith.constant 0 : index
    %288 = vector.load %arg2[%c30, %c0_117] : memref<48x128xf32, #tpu.memory_space<vmem>>, vector<1x128xf32>
    %289 = arith.truncf %286 : vector<8x128xf32> to vector<8x128xbf16>
    %cst_118 = arith.constant dense<0.000000e+00> : vector<8x128xf32>
    %290 = tpu.matmul %289, %287, %cst_118 {dimension_numbers = #tpu.dot_dimension_numbers<[1], [0], [0], [1], [0, 0, 1, 1], [], []>} : vector<8x128xbf16>, vector<128x128xbf16>, vector<8x128xf32> -> vector<8x128xf32>
    %291 = vector.broadcast %288 : vector<1x128xf32> to vector<8x128xf32>
    %292 = arith.addf %290, %291 : vector<8x128xf32>
    %c2048 = arith.constant 2048 : index
    %c0_119 = arith.constant 0 : index
    %293 = vector.load %arg1[%c2048, %c0_119] : memref<2816x128xbf16, #tpu.memory_space<vmem>>, vector<128x128xbf16>
    %c31 = arith.constant 31 : index
    %c0_120 = arith.constant 0 : index
    %294 = vector.load %arg2[%c31, %c0_120] : memref<48x128xf32, #tpu.memory_space<vmem>>, vector<1x128xf32>
    %295 = arith.truncf %292 : vector<8x128xf32> to vector<8x128xbf16>
    %cst_121 = arith.constant dense<0.000000e+00> : vector<8x128xf32>
    %296 = tpu.matmul %295, %293, %cst_121 {dimension_numbers = #tpu.dot_dimension_numbers<[1], [0], [0], [1], [0, 0, 1, 1], [], []>} : vector<8x128xbf16>, vector<128x128xbf16>, vector<8x128xf32> -> vector<8x128xf32>
    %297 = vector.broadcast %294 : vector<1x128xf32> to vector<8x128xf32>
    %298 = arith.addf %296, %297 : vector<8x128xf32>
    %c32 = arith.constant 32 : index
    %c0_122 = arith.constant 0 : index
    %299 = vector.load %arg2[%c32, %c0_122] : memref<48x128xf32, #tpu.memory_space<vmem>>, vector<1x128xf32>
    %c33 = arith.constant 33 : index
    %c0_123 = arith.constant 0 : index
    %300 = vector.load %arg2[%c33, %c0_123] : memref<48x128xf32, #tpu.memory_space<vmem>>, vector<1x128xf32>
    %cst_124 = arith.constant dense<0.000000e+00> : vector<128xf32>
    %301 = vector.multi_reduction <add>, %298, %cst_124 [0] : vector<8x128xf32> to vector<128xf32>
    %302 = vector.shape_cast %301 : vector<128xf32> to vector<1x128xf32>
    %cst_125 = arith.constant 8.000000e+00 : f32
    %303 = vector.broadcast %cst_125 : f32 to vector<1x128xf32>
    %304 = arith.divf %302, %303 : vector<1x128xf32>
    %305 = vector.broadcast %304 : vector<1x128xf32> to vector<8x128xf32>
    %306 = arith.subf %298, %305 : vector<8x128xf32>
    %307 = arith.mulf %306, %306 : vector<8x128xf32>
    %cst_126 = arith.constant dense<0.000000e+00> : vector<128xf32>
    %308 = vector.multi_reduction <add>, %307, %cst_126 [0] : vector<8x128xf32> to vector<128xf32>
    %309 = vector.shape_cast %308 : vector<128xf32> to vector<1x128xf32>
    %cst_127 = arith.constant 8.000000e+00 : f32
    %310 = vector.broadcast %cst_127 : f32 to vector<1x128xf32>
    %311 = arith.divf %309, %310 : vector<1x128xf32>
    %cst_128 = arith.constant 9.99999974E-6 : f32
    %312 = vector.broadcast %cst_128 : f32 to vector<1x128xf32>
    %313 = arith.addf %311, %312 : vector<1x128xf32>
    %314 = math.rsqrt %313 : vector<1x128xf32>
    %315 = arith.mulf %299, %314 : vector<1x128xf32>
    %316 = vector.broadcast %315 : vector<1x128xf32> to vector<8x128xf32>
    %317 = arith.mulf %306, %316 : vector<8x128xf32>
    %318 = vector.broadcast %300 : vector<1x128xf32> to vector<8x128xf32>
    %319 = arith.addf %317, %318 : vector<8x128xf32>
    %cst_129 = arith.constant 0.000000e+00 : f32
    %320 = vector.broadcast %cst_129 : f32 to vector<8x128xf32>
    %321 = arith.maximumf %319, %320 : vector<8x128xf32>
    %c2176 = arith.constant 2176 : index
    %c0_130 = arith.constant 0 : index
    %322 = vector.load %arg1[%c2176, %c0_130] : memref<2816x128xbf16, #tpu.memory_space<vmem>>, vector<128x128xbf16>
    %c34 = arith.constant 34 : index
    %c0_131 = arith.constant 0 : index
    %323 = vector.load %arg2[%c34, %c0_131] : memref<48x128xf32, #tpu.memory_space<vmem>>, vector<1x128xf32>
    %324 = arith.truncf %321 : vector<8x128xf32> to vector<8x128xbf16>
    %cst_132 = arith.constant dense<0.000000e+00> : vector<8x128xf32>
    %325 = tpu.matmul %324, %322, %cst_132 {dimension_numbers = #tpu.dot_dimension_numbers<[1], [0], [0], [1], [0, 0, 1, 1], [], []>} : vector<8x128xbf16>, vector<128x128xbf16>, vector<8x128xf32> -> vector<8x128xf32>
    %326 = vector.broadcast %323 : vector<1x128xf32> to vector<8x128xf32>
    %327 = arith.addf %325, %326 : vector<8x128xf32>
    %c35 = arith.constant 35 : index
    %c0_133 = arith.constant 0 : index
    %328 = vector.load %arg2[%c35, %c0_133] : memref<48x128xf32, #tpu.memory_space<vmem>>, vector<1x128xf32>
    %c36 = arith.constant 36 : index
    %c0_134 = arith.constant 0 : index
    %329 = vector.load %arg2[%c36, %c0_134] : memref<48x128xf32, #tpu.memory_space<vmem>>, vector<1x128xf32>
    %cst_135 = arith.constant dense<0.000000e+00> : vector<128xf32>
    %330 = vector.multi_reduction <add>, %327, %cst_135 [0] : vector<8x128xf32> to vector<128xf32>
    %331 = vector.shape_cast %330 : vector<128xf32> to vector<1x128xf32>
    %cst_136 = arith.constant 8.000000e+00 : f32
    %332 = vector.broadcast %cst_136 : f32 to vector<1x128xf32>
    %333 = arith.divf %331, %332 : vector<1x128xf32>
    %334 = vector.broadcast %333 : vector<1x128xf32> to vector<8x128xf32>
    %335 = arith.subf %327, %334 : vector<8x128xf32>
    %336 = arith.mulf %335, %335 : vector<8x128xf32>
    %cst_137 = arith.constant dense<0.000000e+00> : vector<128xf32>
    %337 = vector.multi_reduction <add>, %336, %cst_137 [0] : vector<8x128xf32> to vector<128xf32>
    %338 = vector.shape_cast %337 : vector<128xf32> to vector<1x128xf32>
    %cst_138 = arith.constant 8.000000e+00 : f32
    %339 = vector.broadcast %cst_138 : f32 to vector<1x128xf32>
    %340 = arith.divf %338, %339 : vector<1x128xf32>
    %cst_139 = arith.constant 9.99999974E-6 : f32
    %341 = vector.broadcast %cst_139 : f32 to vector<1x128xf32>
    %342 = arith.addf %340, %341 : vector<1x128xf32>
    %343 = math.rsqrt %342 : vector<1x128xf32>
    %344 = arith.mulf %328, %343 : vector<1x128xf32>
    %345 = vector.broadcast %344 : vector<1x128xf32> to vector<8x128xf32>
    %346 = arith.mulf %335, %345 : vector<8x128xf32>
    %347 = vector.broadcast %329 : vector<1x128xf32> to vector<8x128xf32>
    %348 = arith.addf %346, %347 : vector<8x128xf32>
    %349 = arith.addf %348, %292 : vector<8x128xf32>
    %cst_140 = arith.constant 0.000000e+00 : f32
    %350 = vector.broadcast %cst_140 : f32 to vector<8x128xf32>
    %351 = arith.maximumf %349, %350 : vector<8x128xf32>
    %c2304 = arith.constant 2304 : index
    %c0_141 = arith.constant 0 : index
    %352 = vector.load %arg1[%c2304, %c0_141] : memref<2816x128xbf16, #tpu.memory_space<vmem>>, vector<128x128xbf16>
    %c37 = arith.constant 37 : index
    %c0_142 = arith.constant 0 : index
    %353 = vector.load %arg2[%c37, %c0_142] : memref<48x128xf32, #tpu.memory_space<vmem>>, vector<1x128xf32>
    %354 = arith.truncf %351 : vector<8x128xf32> to vector<8x128xbf16>
    %cst_143 = arith.constant dense<0.000000e+00> : vector<8x128xf32>
    %355 = tpu.matmul %354, %352, %cst_143 {dimension_numbers = #tpu.dot_dimension_numbers<[1], [0], [0], [1], [0, 0, 1, 1], [], []>} : vector<8x128xbf16>, vector<128x128xbf16>, vector<8x128xf32> -> vector<8x128xf32>
    %356 = vector.broadcast %353 : vector<1x128xf32> to vector<8x128xf32>
    %357 = arith.addf %355, %356 : vector<8x128xf32>
    %c2432 = arith.constant 2432 : index
    %c0_144 = arith.constant 0 : index
    %358 = vector.load %arg1[%c2432, %c0_144] : memref<2816x128xbf16, #tpu.memory_space<vmem>>, vector<128x128xbf16>
    %c38 = arith.constant 38 : index
    %c0_145 = arith.constant 0 : index
    %359 = vector.load %arg2[%c38, %c0_145] : memref<48x128xf32, #tpu.memory_space<vmem>>, vector<1x128xf32>
    %360 = arith.truncf %357 : vector<8x128xf32> to vector<8x128xbf16>
    %cst_146 = arith.constant dense<0.000000e+00> : vector<8x128xf32>
    %361 = tpu.matmul %360, %358, %cst_146 {dimension_numbers = #tpu.dot_dimension_numbers<[1], [0], [0], [1], [0, 0, 1, 1], [], []>} : vector<8x128xbf16>, vector<128x128xbf16>, vector<8x128xf32> -> vector<8x128xf32>
    %362 = vector.broadcast %359 : vector<1x128xf32> to vector<8x128xf32>
    %363 = arith.addf %361, %362 : vector<8x128xf32>
    %c39 = arith.constant 39 : index
    %c0_147 = arith.constant 0 : index
    %364 = vector.load %arg2[%c39, %c0_147] : memref<48x128xf32, #tpu.memory_space<vmem>>, vector<1x128xf32>
    %c40 = arith.constant 40 : index
    %c0_148 = arith.constant 0 : index
    %365 = vector.load %arg2[%c40, %c0_148] : memref<48x128xf32, #tpu.memory_space<vmem>>, vector<1x128xf32>
    %cst_149 = arith.constant dense<0.000000e+00> : vector<128xf32>
    %366 = vector.multi_reduction <add>, %363, %cst_149 [0] : vector<8x128xf32> to vector<128xf32>
    %367 = vector.shape_cast %366 : vector<128xf32> to vector<1x128xf32>
    %cst_150 = arith.constant 8.000000e+00 : f32
    %368 = vector.broadcast %cst_150 : f32 to vector<1x128xf32>
    %369 = arith.divf %367, %368 : vector<1x128xf32>
    %370 = vector.broadcast %369 : vector<1x128xf32> to vector<8x128xf32>
    %371 = arith.subf %363, %370 : vector<8x128xf32>
    %372 = arith.mulf %371, %371 : vector<8x128xf32>
    %cst_151 = arith.constant dense<0.000000e+00> : vector<128xf32>
    %373 = vector.multi_reduction <add>, %372, %cst_151 [0] : vector<8x128xf32> to vector<128xf32>
    %374 = vector.shape_cast %373 : vector<128xf32> to vector<1x128xf32>
    %cst_152 = arith.constant 8.000000e+00 : f32
    %375 = vector.broadcast %cst_152 : f32 to vector<1x128xf32>
    %376 = arith.divf %374, %375 : vector<1x128xf32>
    %cst_153 = arith.constant 9.99999974E-6 : f32
    %377 = vector.broadcast %cst_153 : f32 to vector<1x128xf32>
    %378 = arith.addf %376, %377 : vector<1x128xf32>
    %379 = math.rsqrt %378 : vector<1x128xf32>
    %380 = arith.mulf %364, %379 : vector<1x128xf32>
    %381 = vector.broadcast %380 : vector<1x128xf32> to vector<8x128xf32>
    %382 = arith.mulf %371, %381 : vector<8x128xf32>
    %383 = vector.broadcast %365 : vector<1x128xf32> to vector<8x128xf32>
    %384 = arith.addf %382, %383 : vector<8x128xf32>
    %cst_154 = arith.constant 0.000000e+00 : f32
    %385 = vector.broadcast %cst_154 : f32 to vector<8x128xf32>
    %386 = arith.maximumf %384, %385 : vector<8x128xf32>
    %c2560 = arith.constant 2560 : index
    %c0_155 = arith.constant 0 : index
    %387 = vector.load %arg1[%c2560, %c0_155] : memref<2816x128xbf16, #tpu.memory_space<vmem>>, vector<128x128xbf16>
    %c41 = arith.constant 41 : index
    %c0_156 = arith.constant 0 : index
    %388 = vector.load %arg2[%c41, %c0_156] : memref<48x128xf32, #tpu.memory_space<vmem>>, vector<1x128xf32>
    %389 = arith.truncf %386 : vector<8x128xf32> to vector<8x128xbf16>
    %cst_157 = arith.constant dense<0.000000e+00> : vector<8x128xf32>
    %390 = tpu.matmul %389, %387, %cst_157 {dimension_numbers = #tpu.dot_dimension_numbers<[1], [0], [0], [1], [0, 0, 1, 1], [], []>} : vector<8x128xbf16>, vector<128x128xbf16>, vector<8x128xf32> -> vector<8x128xf32>
    %391 = vector.broadcast %388 : vector<1x128xf32> to vector<8x128xf32>
    %392 = arith.addf %390, %391 : vector<8x128xf32>
    %c42 = arith.constant 42 : index
    %c0_158 = arith.constant 0 : index
    %393 = vector.load %arg2[%c42, %c0_158] : memref<48x128xf32, #tpu.memory_space<vmem>>, vector<1x128xf32>
    %c43 = arith.constant 43 : index
    %c0_159 = arith.constant 0 : index
    %394 = vector.load %arg2[%c43, %c0_159] : memref<48x128xf32, #tpu.memory_space<vmem>>, vector<1x128xf32>
    %cst_160 = arith.constant dense<0.000000e+00> : vector<128xf32>
    %395 = vector.multi_reduction <add>, %392, %cst_160 [0] : vector<8x128xf32> to vector<128xf32>
    %396 = vector.shape_cast %395 : vector<128xf32> to vector<1x128xf32>
    %cst_161 = arith.constant 8.000000e+00 : f32
    %397 = vector.broadcast %cst_161 : f32 to vector<1x128xf32>
    %398 = arith.divf %396, %397 : vector<1x128xf32>
    %399 = vector.broadcast %398 : vector<1x128xf32> to vector<8x128xf32>
    %400 = arith.subf %392, %399 : vector<8x128xf32>
    %401 = arith.mulf %400, %400 : vector<8x128xf32>
    %cst_162 = arith.constant dense<0.000000e+00> : vector<128xf32>
    %402 = vector.multi_reduction <add>, %401, %cst_162 [0] : vector<8x128xf32> to vector<128xf32>
    %403 = vector.shape_cast %402 : vector<128xf32> to vector<1x128xf32>
    %cst_163 = arith.constant 8.000000e+00 : f32
    %404 = vector.broadcast %cst_163 : f32 to vector<1x128xf32>
    %405 = arith.divf %403, %404 : vector<1x128xf32>
    %cst_164 = arith.constant 9.99999974E-6 : f32
    %406 = vector.broadcast %cst_164 : f32 to vector<1x128xf32>
    %407 = arith.addf %405, %406 : vector<1x128xf32>
    %408 = math.rsqrt %407 : vector<1x128xf32>
    %409 = arith.mulf %393, %408 : vector<1x128xf32>
    %410 = vector.broadcast %409 : vector<1x128xf32> to vector<8x128xf32>
    %411 = arith.mulf %400, %410 : vector<8x128xf32>
    %412 = vector.broadcast %394 : vector<1x128xf32> to vector<8x128xf32>
    %413 = arith.addf %411, %412 : vector<8x128xf32>
    %414 = arith.addf %413, %357 : vector<8x128xf32>
    %cst_165 = arith.constant 0.000000e+00 : f32
    %415 = vector.broadcast %cst_165 : f32 to vector<8x128xf32>
    %416 = arith.maximumf %414, %415 : vector<8x128xf32>
    %c2688 = arith.constant 2688 : index
    %c0_166 = arith.constant 0 : index
    %417 = vector.load %arg1[%c2688, %c0_166] : memref<2816x128xbf16, #tpu.memory_space<vmem>>, vector<128x128xbf16>
    %c44 = arith.constant 44 : index
    %c0_167 = arith.constant 0 : index
    %418 = vector.load %arg2[%c44, %c0_167] : memref<48x128xf32, #tpu.memory_space<vmem>>, vector<1x128xf32>
    %419 = arith.truncf %416 : vector<8x128xf32> to vector<8x128xbf16>
    %cst_168 = arith.constant dense<0.000000e+00> : vector<8x128xf32>
    %420 = tpu.matmul %419, %417, %cst_168 {dimension_numbers = #tpu.dot_dimension_numbers<[1], [0], [0], [1], [0, 0, 1, 1], [], []>} : vector<8x128xbf16>, vector<128x128xbf16>, vector<8x128xf32> -> vector<8x128xf32>
    %421 = vector.broadcast %418 : vector<1x128xf32> to vector<8x128xf32>
    %422 = arith.addf %420, %421 : vector<8x128xf32>
    %c0_169 = arith.constant 0 : index
    %c0_170 = arith.constant 0 : index
    %423 = vector.load %arg3[%c0_169, %c0_170] : memref<8x256xf32, #tpu.memory_space<vmem>>, vector<8x128xf32>
    tpu.vector_store %arg3[%c0_169, %c0_170], %422 {strides = array<i32>} : memref<8x256xf32, #tpu.memory_space<vmem>>, vector<8x128xf32>,
    return
  }
}

</mosaic_0001>

<llo_original>
// kernel: cvae_forward.1
$region0: #{cvae_forward.1}
  #allocation0 [shape = 'u32[]', space=smem, size = 0x4, offset = 0x4, fixed_abs, tag = 'smem constant byte address 0x4 - core index']
  #allocation1 [shape = 'u32[144,128]{1,0:T(1,128)}', space=vmem, size = 0x12000, scoped, tag = 'internal scratch']
  %s0 = inlined_call_operand.vmem [shape: f32[8,256], index: 0, kind: input, shape index: {}]
  %s1 = inlined_call_operand.hbm [shape: bf16[2816,128], index: 1, kind: input, shape index: {}]
  %s2 = inlined_call_operand.vmem [shape: f32[48,128], index: 2, kind: input, shape index: {}]
  %s3 = inlined_call_operand.vmem [shape: f32[8,256], index: 3, kind: output, shape index: {}]
  %s4 = sld [smem:[#allocation0]]
  $region26: #{cvae_forward.1} parent=0
    _
  %s6 = ssub.s32 1, %s4
  %s7 = scalar_select 0, %s6, %s4
  $region1: #{cvae_forward.1} parent=0
    #allocation2 [shape = 'u8[720896]{0}', space=vmem, size = 0xb0000, scoped, tag = 'input window, operand 1, single buffered']
    #allocation3 [shape = 's32[1]{0}', space=sflag, size = 0x4, scoped, tag = 'scoped memory for cvae_forward.1']
    %8 = vsyncpa [#allocation3], 0
    // Predicated region
    $region2: #{cvae_forward.1} parent=1 // pred_check
      _
    $region3: #{cvae_forward.1} parent=1 // pred_check_branch
      %10 = sbr.rel (0) target = $region5
    $region4: #{cvae_forward.1} parent=1 // pred_region
      _
    $region5: #{cvae_forward.1} parent=1 // pred_fallthru
      _
    // Predicated region
    $region6: #{cvae_forward.1} parent=1 // pred_check
      _
    $region7: #{cvae_forward.1} parent=1 // pred_check_branch
      %12 = sbr.rel (0) target = $region9
    $region8: #{cvae_forward.1} parent=1 // pred_region
      %s14 = ssub.s32 22528, 22528
      %15 = vsyncadd [#allocation3], %s14
      %s16 = sshll.u32 [#allocation2], 4
      %s17 = int_to_ptr.vmem [resolvable:$true] %s16
      %22 = dma.hbm_to_vmem [thread:$0]  %s1, 22528, %s17, [#allocation3], 64, 64, 4
    $region9: #{cvae_forward.1} parent=1 // pred_fallthru
      _
    // Predicated region
    $region10: #{cvae_forward.1} parent=1 // pred_check
      _
    $region11: #{cvae_forward.1} parent=1 // pred_check_branch
      %24 = sbr.rel (0) target = $region13
    $region12: #{cvae_forward.1} parent=1 // pred_region
      _
    $region13: #{cvae_forward.1} parent=1 // pred_fallthru
      _
    // Predicated region
    $region14: #{cvae_forward.1} parent=1 // pred_check
      _
    $region15: #{cvae_forward.1} parent=1 // pred_check_branch
      %26 = sbr.rel (0) target = $region17
    $region16: #{cvae_forward.1} parent=1 // pred_region
      %27 = dma.done [#allocation3], 22528
    $region17: #{cvae_forward.1} parent=1 // pred_fallthru
      _
    %v29 = vld [vmem:[%s0] sm:$0xff]
    %v30 = vld [vmem:[%s0 + $0x8] sm:$0xff]
    %v31 = vld [vmem:[#allocation2] sm:$0xf]
    %v32 = vld [vmem:[#allocation2 + $0x4] sm:$0xf]
    %v33 = vld [vmem:[#allocation2 + $0x8] sm:$0xf]
    %v34 = vld [vmem:[#allocation2 + $0xc] sm:$0xf]
    %v35 = vld [vmem:[#allocation2 + $0x10] sm:$0xf]
    %v36 = vld [vmem:[#allocation2 + $0x14] sm:$0xf]
    %v37 = vld [vmem:[#allocation2 + $0x18] sm:$0xf]
    %v38 = vld [vmem:[#allocation2 + $0x1c] sm:$0xf]
    %v39 = vld [vmem:[#allocation2 + $0x20] sm:$0xf]
    %v40 = vld [vmem:[#allocation2 + $0x24] sm:$0xf]
    %v41 = vld [vmem:[#allocation2 + $0x28] sm:$0xf]
    %v42 = vld [vmem:[#allocation2 + $0x2c] sm:$0xf]
    %v43 = vld [vmem:[#allocation2 + $0x30] sm:$0xf]
    %v44 = vld [vmem:[#allocation2 + $0x34] sm:$0xf]
    %v45 = vld [vmem:[#allocation2 + $0x38] sm:$0xf]
    %v46 = vld [vmem:[#allocation2 + $0x3c] sm:$0xf]
    %v47 = vld [vmem:[%s2] sm:$0x1]
    %v48 = vpack.c.bf16 %v29, %v29
    %v49 = vlaneseq
    %v50 = vshrl.u32 %v49, 7
    %v51 = vsub.s32 0, %v50
    %v52 = vrot.slane %v47, %v51
    %v69 = vunpack.c.l.b16 %v31
    %v70 = vunpack.c.l.b16 %v32
    %v71 = vunpack.c.l.b16 %v33
    %v72 = vunpack.c.l.b16 %v34
    %v73 = vunpack.c.l.b16 %v35
    %v74 = vunpack.c.l.b16 %v36
    %v75 = vunpack.c.l.b16 %v37
    %v76 = vunpack.c.l.b16 %v38
    %v77 = vunpack.c.l.b16 %v39
    %v78 = vunpack.c.l.b16 %v40
    %v79 = vunpack.c.l.b16 %v41
    %v80 = vunpack.c.l.b16 %v42
    %v81 = vunpack.c.l.b16 %v43
    %v82 = vunpack.c.l.b16 %v44
    %v83 = vunpack.c.l.b16 %v45
    %v84 = vunpack.c.l.b16 %v46
    %v85 = vpack.c.b16 %v70, %v69
    %v86 = vpack.c.b16 %v72, %v71
    %v87 = vpack.c.b16 %v74, %v73
    %v88 = vpack.c.b16 %v76, %v75
    %v89 = vpack.c.b16 %v78, %v77
    %v90 = vpack.c.b16 %v80, %v79
    %v91 = vpack.c.b16 %v82, %v81
    %v92 = vpack.c.b16 %v84, %v83
    %101 = vmatprep.subr.bf16.mxu0 0
    %102 = vmatpush1.bf16.msra.mxu0 %v92
    %103 = vmatprep.subr.bf16.mxu0 0
    %104 = vmatpush1.bf16.msra.mxu0 %v91
    %105 = vmatprep.subr.bf16.mxu0 0
    %106 = vmatpush1.bf16.msra.mxu0 %v90
    %107 = vmatprep.subr.bf16.mxu0 0
    %108 = vmatpush1.bf16.msra.mxu0 %v89
    %109 = vmatprep.subr.bf16.mxu0 0
    %110 = vmatpush1.bf16.msra.mxu0 %v88
    %111 = vmatprep.subr.bf16.mxu0 0
    %112 = vmatpush1.bf16.msra.mxu0 %v87
    %113 = vmatprep.subr.bf16.mxu0 0
    %114 = vmatpush1.bf16.msra.mxu0 %v86
    %115 = vmatprep.subr.bf16.mxu0 0
    %116 = vmatpush1.bf16.msra.mxu0 %v85
    %117 = vmatprep.subr.bf16.mxu0 0
    %118 = vmatpush2.bf16.msra.mxu0 0
    %119 = vmatprep.subr.bf16.mxu0 0
    %120 = vmatpush2.bf16.msra.mxu0 0
    %121 = vmatprep.subr.bf16.mxu0 0
    %122 = vmatpush2.bf16.msra.mxu0 0
    %123 = vmatprep.subr.bf16.mxu0 0
    %124 = vmatpush2.bf16.msra.mxu0 0
    %125 = vmatprep.subr.bf16.mxu0 0
    %126 = vmatpush2.bf16.msra.mxu0 0
    %127 = vmatprep.subr.bf16.mxu0 0
    %128 = vmatpush2.bf16.msra.mxu0 0
    %129 = vmatprep.subr.bf16.mxu0 0
    %130 = vmatpush2.bf16.msra.mxu0 0
    %131 = vmatprep.subr.bf16.mxu0 0
    %132 = vmatpush2.bf16.msra.mxu0 0
    %133 = vmatprep.mubr.bf16.mxu0 0
    %134 = vmatmul.mubr.bf16.gmra.mxu0 %v48
    %v135 = vpop.f32.mrf.mxu0
    %v136 = vadd.f32 %v52, %v135
    %v137 = vpop.f32.mrf.mxu0
    %v138 = vpop.f32.mrf.mxu0
    %v139 = vpop.f32.mrf.mxu0
    %140 = vdwg.mxu0
    %v141 = vld [vmem:[#allocation2 + $0x40] sm:$0xf]
    %v142 = vld [vmem:[#allocation2 + $0x44] sm:$0xf]
    %v143 = vld [vmem:[#allocation2 + $0x48] sm:$0xf]
    %v144 = vld [vmem:[#allocation2 + $0x4c] sm:$0xf]
    %v145 = vld [vmem:[#allocation2 + $0x50] sm:$0xf]
    %v146 = vld [vmem:[#allocation2 + $0x54] sm:$0xf]
    %v147 = vld [vmem:[#allocation2 + $0x58] sm:$0xf]
    %v148 = vld [vmem:[#allocation2 + $0x5c] sm:$0xf]
    %v149 = vld [vmem:[#allocation2 + $0x60] sm:$0xf]
    %v150 = vld [vmem:[#allocation2 + $0x64] sm:$0xf]
    %v151 = vld [vmem:[#allocation2 + $0x68] sm:$0xf]
    %v152 = vld [vmem:[#allocation2 + $0x6c] sm:$0xf]
    %v153 = vld [vmem:[#allocation2 + $0x70] sm:$0xf]
    %v154 = vld [vmem:[#allocation2 + $0x74] sm:$0xf]
    %v155 = vld [vmem:[#allocation2 + $0x78] sm:$0xf]
    %v156 = vld [vmem:[#allocation2 + $0x7c] sm:$0xf]
    %v157 = vld [vmem:[%s2 + $0x1] sm:$0x1]
    %v158 = vpack.c.bf16 %v136, %v136
    %v159 = vlaneseq
    %v160 = vshrl.u32 %v159, 7
    %v161 = vsub.s32 0, %v160
    %v162 = vrot.slane %v157, %v161
    %v179 = vunpack.c.l.b16 %v141
    %v180 = vunpack.c.l.b16 %v142
    %v181 = vunpack.c.l.b16 %v143
    %v182 = vunpack.c.l.b16 %v144
    %v183 = vunpack.c.l.b16 %v145
    %v184 = vunpack.c.l.b16 %v146
    %v185 = vunpack.c.l.b16 %v147
    %v186 = vunpack.c.l.b16 %v148
    %v187 = vunpack.c.l.b16 %v149
    %v188 = vunpack.c.l.b16 %v150
    %v189 = vunpack.c.l.b16 %v151
    %v190 = vunpack.c.l.b16 %v152
    %v191 = vunpack.c.l.b16 %v153
    %v192 = vunpack.c.l.b16 %v154
    %v193 = vunpack.c.l.b16 %v155
    %v194 = vunpack.c.l.b16 %v156
    %v195 = vpack.c.b16 %v180, %v179
    %v196 = vpack.c.b16 %v182, %v181
    %v197 = vpack.c.b16 %v184, %v183
    %v198 = vpack.c.b16 %v186, %v185
    %v199 = vpack.c.b16 %v188, %v187
    %v200 = vpack.c.b16 %v190, %v189
    %v201 = vpack.c.b16 %v192, %v191
    %v202 = vpack.c.b16 %v194, %v193
    %211 = vmatprep.subr.bf16.mxu0 0
    %212 = vmatpush1.bf16.msra.mxu0 %v202
    %213 = vmatprep.subr.bf16.mxu0 0
    %214 = vmatpush1.bf16.msra.mxu0 %v201
    %215 = vmatprep.subr.bf16.mxu0 0
    %216 = vmatpush1.bf16.msra.mxu0 %v200
    %217 = vmatprep.subr.bf16.mxu0 0
    %218 = vmatpush1.bf16.msra.mxu0 %v199
    %219 = vmatprep.subr.bf16.mxu0 0
    %220 = vmatpush1.bf16.msra.mxu0 %v198
    %221 = vmatprep.subr.bf16.mxu0 0
    %222 = vmatpush1.bf16.msra.mxu0 %v197
    %223 = vmatprep.subr.bf16.mxu0 0
    %224 = vmatpush1.bf16.msra.mxu0 %v196
    %225 = vmatprep.subr.bf16.mxu0 0
    %226 = vmatpush1.bf16.msra.mxu0 %v195
    %227 = vmatprep.subr.bf16.mxu0 0
    %228 = vmatpush2.bf16.msra.mxu0 0
    %229 = vmatprep.subr.bf16.mxu0 0
    %230 = vmatpush2.bf16.msra.mxu0 0
    %231 = vmatprep.subr.bf16.mxu0 0
    %232 = vmatpush2.bf16.msra.mxu0 0
    %233 = vmatprep.subr.bf16.mxu0 0
    %234 = vmatpush2.bf16.msra.mxu0 0
    %235 = vmatprep.subr.bf16.mxu0 0
    %236 = vmatpush2.bf16.msra.mxu0 0
    %237 = vmatprep.subr.bf16.mxu0 0
    %238 = vmatpush2.bf16.msra.mxu0 0
    %239 = vmatprep.subr.bf16.mxu0 0
    %240 = vmatpush2.bf16.msra.mxu0 0
    %241 = vmatprep.subr.bf16.mxu0 0
    %242 = vmatpush2.bf16.msra.mxu0 0
    %243 = vmatprep.mubr.bf16.mxu0 0
    %244 = vmatmul.mubr.bf16.gmra.mxu0 %v158
    %v245 = vpop.f32.mrf.mxu0
    %v246 = vadd.f32 %v162, %v245
    %v247 = vpop.f32.mrf.mxu0
    %v248 = vpop.f32.mrf.mxu0
    %v249 = vpop.f32.mrf.mxu0
    %250 = vdwg.mxu0
    %v251 = vld [vmem:[%s2 + $0x2] sm:$0x1]
    %v252 = vld [vmem:[%s2 + $0x3] sm:$0x1]
    %v253 = vrot.slane %v246, 4
    %v254 = vadd.f32 %v246, %v253
    %v255 = vrot.slane %v254, 2
    %v256 = vadd.f32 %v254, %v255
    %v257 = vrot.slane %v256, 1
    %v258 = vadd.f32 %v256, %v257
    %v259 = vrcp.pop 8.0
    %v260 = vmul.f32 %v258, %v259
    %v261 = vsub.f32 %v246, %v260
    %v262 = vmul.f32 %v261, %v261
    %v263 = vrot.slane %v262, 4
    %v264 = vadd.f32 %v262, %v263
    %v265 = vrot.slane %v264, 2
    %v266 = vadd.f32 %v264, %v265
    %v267 = vrot.slane %v266, 1
    %v268 = vadd.f32 %v266, %v267
    %v269 = vmul.f32 %v268, %v259
    %v270 = vadd.f32 %v269, 1e-05
    %v271 = vrsqrt.pop %v270
    %v272 = vmul.f32 %v251, %v271
    %v273 = vlaneseq
    %v274 = vshrl.u32 %v273, 7
    %v275 = vsub.s32 0, %v274
    %v276 = vrot.slane %v272, %v275
    %v277 = vmul.f32 %v261, %v276
    %v278 = vlaneseq
    %v279 = vshrl.u32 %v278, 7
    %v280 = vsub.s32 0, %v279
    %v281 = vrot.slane %v252, %v280
    %v282 = vadd.f32 %v277, %v281
    %v283 = vmax.f32 %v282, 0.0
    %v284 = vld [vmem:[#allocation2 + $0x80] sm:$0xf]
    %v285 = vld [vmem:[#allocation2 + $0x84] sm:$0xf]
    %v286 = vld [vmem:[#allocation2 + $0x88] sm:$0xf]
    %v287 = vld [vmem:[#allocation2 + $0x8c] sm:$0xf]
    %v288 = vld [vmem:[#allocation2 + $0x90] sm:$0xf]
    %v289 = vld [vmem:[#allocation2 + $0x94] sm:$0xf]
    %v290 = vld [vmem:[#allocation2 + $0x98] sm:$0xf]
    %v291 = vld [vmem:[#allocation2 + $0x9c] sm:$0xf]
    %v292 = vld [vmem:[#allocation2 + $0xa0] sm:$0xf]
    %v293 = vld [vmem:[#allocation2 + $0xa4] sm:$0xf]
    %v294 = vld [vmem:[#allocation2 + $0xa8] sm:$0xf]
    %v295 = vld [vmem:[#allocation2 + $0xac] sm:$0xf]
    %v296 = vld [vmem:[#allocation2 + $0xb0] sm:$0xf]
    %v297 = vld [vmem:[#allocation2 + $0xb4] sm:$0xf]
    %v298 = vld [vmem:[#allocation2 + $0xb8] sm:$0xf]
    %v299 = vld [vmem:[#allocation2 + $0xbc] sm:$0xf]
    %v300 = vld [vmem:[%s2 + $0x4] sm:$0x1]
    %v301 = vpack.c.bf16 %v283, %v283
    %v302 = vlaneseq
    %v303 = vshrl.u32 %v302, 7
    %v304 = vsub.s32 0, %v303
    %v305 = vrot.slane %v300, %v304
    %v322 = vunpack.c.l.b16 %v284
    %v323 = vunpack.c.l.b16 %v285
    %v324 = vunpack.c.l.b16 %v286
    %v325 = vunpack.c.l.b16 %v287
    %v326 = vunpack.c.l.b16 %v288
    %v327 = vunpack.c.l.b16 %v289
    %v328 = vunpack.c.l.b16 %v290
    %v329 = vunpack.c.l.b16 %v291
    %v330 = vunpack.c.l.b16 %v292
    %v331 = vunpack.c.l.b16 %v293
    %v332 = vunpack.c.l.b16 %v294
    %v333 = vunpack.c.l.b16 %v295
    %v334 = vunpack.c.l.b16 %v296
    %v335 = vunpack.c.l.b16 %v297
    %v336 = vunpack.c.l.b16 %v298
    %v337 = vunpack.c.l.b16 %v299
    %v338 = vpack.c.b16 %v323, %v322
    %v339 = vpack.c.b16 %v325, %v324
    %v340 = vpack.c.b16 %v327, %v326
    %v341 = vpack.c.b16 %v329, %v328
    %v342 = vpack.c.b16 %v331, %v330
    %v343 = vpack.c.b16 %v333, %v332
    %v344 = vpack.c.b16 %v335, %v334
    %v345 = vpack.c.b16 %v337, %v336
    %354 = vmatprep.subr.bf16.mxu0 0
    %355 = vmatpush1.bf16.msra.mxu0 %v345
    %356 = vmatprep.subr.bf16.mxu0 0
    %357 = vmatpush1.bf16.msra.mxu0 %v344
    %358 = vmatprep.subr.bf16.mxu0 0
    %359 = vmatpush1.bf16.msra.mxu0 %v343
    %360 = vmatprep.subr.bf16.mxu0 0
    %361 = vmatpush1.bf16.msra.mxu0 %v342
    %362 = vmatprep.subr.bf16.mxu0 0
    %363 = vmatpush1.bf16.msra.mxu0 %v341
    %364 = vmatprep.subr.bf16.mxu0 0
    %365 = vmatpush1.bf16.msra.mxu0 %v340
    %366 = vmatprep.subr.bf16.mxu0 0
    %367 = vmatpush1.bf16.msra.mxu0 %v339
    %368 = vmatprep.subr.bf16.mxu0 0
    %369 = vmatpush1.bf16.msra.mxu0 %v338
    %370 = vmatprep.subr.bf16.mxu0 0
    %371 = vmatpush2.bf16.msra.mxu0 0
    %372 = vmatprep.subr.bf16.mxu0 0
    %373 = vmatpush2.bf16.msra.mxu0 0
    %374 = vmatprep.subr.bf16.mxu0 0
    %375 = vmatpush2.bf16.msra.mxu0 0
    %376 = vmatprep.subr.bf16.mxu0 0
    %377 = vmatpush2.bf16.msra.mxu0 0
    %378 = vmatprep.subr.bf16.mxu0 0
    %379 = vmatpush2.bf16.msra.mxu0 0
    %380 = vmatprep.subr.bf16.mxu0 0
    %381 = vmatpush2.bf16.msra.mxu0 0
    %382 = vmatprep.subr.bf16.mxu0 0
    %383 = vmatpush2.bf16.msra.mxu0 0
    %384 = vmatprep.subr.bf16.mxu0 0
    %385 = vmatpush2.bf16.msra.mxu0 0
    %386 = vmatprep.mubr.bf16.mxu0 0
    %387 = vmatmul.mubr.bf16.gmra.mxu0 %v301
    %v388 = vpop.f32.mrf.mxu0
    %v389 = vadd.f32 %v305, %v388
    %v390 = vpop.f32.mrf.mxu0
    %v391 = vpop.f32.mrf.mxu0
    %v392 = vpop.f32.mrf.mxu0
    %393 = vdwg.mxu0
    %v394 = vld [vmem:[%s2 + $0x5] sm:$0x1]
    %v395 = vld [vmem:[%s2 + $0x6] sm:$0x1]
    %v396 = vrot.slane %v389, 4
    %v397 = vadd.f32 %v389, %v396
    %v398 = vrot.slane %v397, 2
    %v399 = vadd.f32 %v397, %v398
    %v400 = vrot.slane %v399, 1
    %v401 = vadd.f32 %v399, %v400
    %v402 = vmul.f32 %v401, %v259
    %v403 = vsub.f32 %v389, %v402
    %v404 = vmul.f32 %v403, %v403
    %v405 = vrot.slane %v404, 4
    %v406 = vadd.f32 %v404, %v405
    %v407 = vrot.slane %v406, 2
    %v408 = vadd.f32 %v406, %v407
    %v409 = vrot.slane %v408, 1
    %v410 = vadd.f32 %v408, %v409
    %v411 = vmul.f32 %v410, %v259
    %v412 = vadd.f32 %v411, 1e-05
    %v413 = vrsqrt.pop %v412
    %v414 = vmul.f32 %v394, %v413
    %v415 = vlaneseq
    %v416 = vshrl.u32 %v415, 7
    %v417 = vsub.s32 0, %v416
    %v418 = vrot.slane %v414, %v417
    %v419 = vmul.f32 %v403, %v418
    %v420 = vlaneseq
    %v421 = vshrl.u32 %v420, 7
    %v422 = vsub.s32 0, %v421
    %v423 = vrot.slane %v395, %v422
    %v424 = vadd.f32 %v419, %v423
    %v425 = vadd.f32 %v424, %v136
    %v426 = vmax.f32 %v425, 0.0
    %v427 = vld [vmem:[#allocation2 + $0xc0] sm:$0xf]
    %v428 = vld [vmem:[#allocation2 + $0xc4] sm:$0xf]
    %v429 = vld [vmem:[#allocation2 + $0xc8] sm:$0xf]
    %v430 = vld [vmem:[#allocation2 + $0xcc] sm:$0xf]
    %v431 = vld [vmem:[#allocation2 + $0xd0] sm:$0xf]
    %v432 = vld [vmem:[#allocation2 + $0xd4] sm:$0xf]
    %v433 = vld [vmem:[#allocation2 + $0xd8] sm:$0xf]
    %v434 = vld [vmem:[#allocation2 + $0xdc] sm:$0xf]
    %v435 = vld [vmem:[#allocation2 + $0xe0] sm:$0xf]
    %v436 = vld [vmem:[#allocation2 + $0xe4] sm:$0xf]
    %v437 = vld [vmem:[#allocation2 + $0xe8] sm:$0xf]
    %v438 = vld [vmem:[#allocation2 + $0xec] sm:$0xf]
    %v439 = vld [vmem:[#allocation2 + $0xf0] sm:$0xf]
    %v440 = vld [vmem:[#allocation2 + $0xf4] sm:$0xf]
    %v441 = vld [vmem:[#allocation2 + $0xf8] sm:$0xf]
    %v442 = vld [vmem:[#allocation2 + $0xfc] sm:$0xf]
    %v443 = vld [vmem:[%s2 + $0x7] sm:$0x1]
    %v444 = vpack.c.bf16 %v426, %v426
    %v445 = vlaneseq
    %v446 = vshrl.u32 %v445, 7
    %v447 = vsub.s32 0, %v446
    %v448 = vrot.slane %v443, %v447
    %v465 = vunpack.c.l.b16 %v427
    %v466 = vunpack.c.l.b16 %v428
    %v467 = vunpack.c.l.b16 %v429
    %v468 = vunpack.c.l.b16 %v430
    %v469 = vunpack.c.l.b16 %v431
    %v470 = vunpack.c.l.b16 %v432
    %v471 = vunpack.c.l.b16 %v433
    %v472 = vunpack.c.l.b16 %v434
    %v473 = vunpack.c.l.b16 %v435
    %v474 = vunpack.c.l.b16 %v436
    %v475 = vunpack.c.l.b16 %v437
    %v476 = vunpack.c.l.b16 %v438
    %v477 = vunpack.c.l.b16 %v439
    %v478 = vunpack.c.l.b16 %v440
    %v479 = vunpack.c.l.b16 %v441
    %v480 = vunpack.c.l.b16 %v442
    %v481 = vpack.c.b16 %v466, %v465
    %v482 = vpack.c.b16 %v468, %v467
    %v483 = vpack.c.b16 %v470, %v469
    %v484 = vpack.c.b16 %v472, %v471
    %v485 = vpack.c.b16 %v474, %v473
    %v486 = vpack.c.b16 %v476, %v475
    %v487 = vpack.c.b16 %v478, %v477
    %v488 = vpack.c.b16 %v480, %v479
    %497 = vmatprep.subr.bf16.mxu0 0
    %498 = vmatpush1.bf16.msra.mxu0 %v488
    %499 = vmatprep.subr.bf16.mxu0 0
    %500 = vmatpush1.bf16.msra.mxu0 %v487
    %501 = vmatprep.subr.bf16.mxu0 0
    %502 = vmatpush1.bf16.msra.mxu0 %v486
    %503 = vmatprep.subr.bf16.mxu0 0
    %504 = vmatpush1.bf16.msra.mxu0 %v485
    %505 = vmatprep.subr.bf16.mxu0 0
    %506 = vmatpush1.bf16.msra.mxu0 %v484
    %507 = vmatprep.subr.bf16.mxu0 0
    %508 = vmatpush1.bf16.msra.mxu0 %v483
    %509 = vmatprep.subr.bf16.mxu0 0
    %510 = vmatpush1.bf16.msra.mxu0 %v482
    %511 = vmatprep.subr.bf16.mxu0 0
    %512 = vmatpush1.bf16.msra.mxu0 %v481
    %513 = vmatprep.subr.bf16.mxu0 0
    %514 = vmatpush2.bf16.msra.mxu0 0
    %515 = vmatprep.subr.bf16.mxu0 0
    %516 = vmatpush2.bf16.msra.mxu0 0
    %517 = vmatprep.subr.bf16.mxu0 0
    %518 = vmatpush2.bf16.msra.mxu0 0
    %519 = vmatprep.subr.bf16.mxu0 0
    %520 = vmatpush2.bf16.msra.mxu0 0
    %521 = vmatprep.subr.bf16.mxu0 0
    %522 = vmatpush2.bf16.msra.mxu0 0
    %523 = vmatprep.subr.bf16.mxu0 0
    %524 = vmatpush2.bf16.msra.mxu0 0
    %525 = vmatprep.subr.bf16.mxu0 0
    %526 = vmatpush2.bf16.msra.mxu0 0
    %527 = vmatprep.subr.bf16.mxu0 0
    %528 = vmatpush2.bf16.msra.mxu0 0
    %529 = vmatprep.mubr.bf16.mxu0 0
    %530 = vmatmul.mubr.bf16.gmra.mxu0 %v444
    %v531 = vpop.f32.mrf.mxu0
    %v532 = vadd.f32 %v448, %v531
    %v533 = vpop.f32.mrf.mxu0
    %v534 = vpop.f32.mrf.mxu0
    %v535 = vpop.f32.mrf.mxu0
    %536 = vdwg.mxu0
    %v537 = vld [vmem:[#allocation2 + $0x100] sm:$0xf]
    %v538 = vld [vmem:[#allocation2 + $0x104] sm:$0xf]
    %v539 = vld [vmem:[#allocation2 + $0x108] sm:$0xf]
    %v540 = vld [vmem:[#allocation2 + $0x10c] sm:$0xf]
    %v541 = vld [vmem:[#allocation2 + $0x110] sm:$0xf]
    %v542 = vld [vmem:[#allocation2 + $0x114] sm:$0xf]
    %v543 = vld [vmem:[#allocation2 + $0x118] sm:$0xf]
    %v544 = vld [vmem:[#allocation2 + $0x11c] sm:$0xf]
    %v545 = vld [vmem:[#allocation2 + $0x120] sm:$0xf]
    %v546 = vld [vmem:[#allocation2 + $0x124] sm:$0xf]
    %v547 = vld [vmem:[#allocation2 + $0x128] sm:$0xf]
    %v548 = vld [vmem:[#allocation2 + $0x12c] sm:$0xf]
    %v549 = vld [vmem:[#allocation2 + $0x130] sm:$0xf]
    %v550 = vld [vmem:[#allocation2 + $0x134] sm:$0xf]
    %v551 = vld [vmem:[#allocation2 + $0x138] sm:$0xf]
    %v552 = vld [vmem:[#allocation2 + $0x13c] sm:$0xf]
    %v553 = vld [vmem:[%s2 + $0x8] sm:$0x1]
    %v554 = vpack.c.bf16 %v532, %v532
    %v555 = vlaneseq
    %v556 = vshrl.u32 %v555, 7
    %v557 = vsub.s32 0, %v556
    %v558 = vrot.slane %v553, %v557
    %v575 = vunpack.c.l.b16 %v537
    %v576 = vunpack.c.l.b16 %v538
    %v577 = vunpack.c.l.b16 %v539
    %v578 = vunpack.c.l.b16 %v540
    %v579 = vunpack.c.l.b16 %v541
    %v580 = vunpack.c.l.b16 %v542
    %v581 = vunpack.c.l.b16 %v543
    %v582 = vunpack.c.l.b16 %v544
    %v583 = vunpack.c.l.b16 %v545
    %v584 = vunpack.c.l.b16 %v546
    %v585 = vunpack.c.l.b16 %v547
    %v586 = vunpack.c.l.b16 %v548
    %v587 = vunpack.c.l.b16 %v549
    %v588 = vunpack.c.l.b16 %v550
    %v589 = vunpack.c.l.b16 %v551
    %v590 = vunpack.c.l.b16 %v552
    %v591 = vpack.c.b16 %v576, %v575
    %v592 = vpack.c.b16 %v578, %v577
    %v593 = vpack.c.b16 %v580, %v579
    %v594 = vpack.c.b16 %v582, %v581
    %v595 = vpack.c.b16 %v584, %v583
    %v596 = vpack.c.b16 %v586, %v585
    %v597 = vpack.c.b16 %v588, %v587
    %v598 = vpack.c.b16 %v590, %v589
    %607 = vmatprep.subr.bf16.mxu0 0
    %608 = vmatpush1.bf16.msra.mxu0 %v598
    %609 = vmatprep.subr.bf16.mxu0 0
    %610 = vmatpush1.bf16.msra.mxu0 %v597
    %611 = vmatprep.subr.bf16.mxu0 0
    %612 = vmatpush1.bf16.msra.mxu0 %v596
    %613 = vmatprep.subr.bf16.mxu0 0
    %614 = vmatpush1.bf16.msra.mxu0 %v595
    %615 = vmatprep.subr.bf16.mxu0 0
    %616 = vmatpush1.bf16.msra.mxu0 %v594
    %617 = vmatprep.subr.bf16.mxu0 0
    %618 = vmatpush1.bf16.msra.mxu0 %v593
    %619 = vmatprep.subr.bf16.mxu0 0
    %620 = vmatpush1.bf16.msra.mxu0 %v592
    %621 = vmatprep.subr.bf16.mxu0 0
    %622 = vmatpush1.bf16.msra.mxu0 %v591
    %623 = vmatprep.subr.bf16.mxu0 0
    %624 = vmatpush2.bf16.msra.mxu0 0
    %625 = vmatprep.subr.bf16.mxu0 0
    %626 = vmatpush2.bf16.msra.mxu0 0
    %627 = vmatprep.subr.bf16.mxu0 0
    %628 = vmatpush2.bf16.msra.mxu0 0
    %629 = vmatprep.subr.bf16.mxu0 0
    %630 = vmatpush2.bf16.msra.mxu0 0
    %631 = vmatprep.subr.bf16.mxu0 0
    %632 = vmatpush2.bf16.msra.mxu0 0
    %633 = vmatprep.subr.bf16.mxu0 0
    %634 = vmatpush2.bf16.msra.mxu0 0
    %635 = vmatprep.subr.bf16.mxu0 0
    %636 = vmatpush2.bf16.msra.mxu0 0
    %637 = vmatprep.subr.bf16.mxu0 0
    %638 = vmatpush2.bf16.msra.mxu0 0
    %639 = vmatprep.mubr.bf16.mxu0 0
    %640 = vmatmul.mubr.bf16.gmra.mxu0 %v554
    %v641 = vpop.f32.mrf.mxu0
    %v642 = vadd.f32 %v558, %v641
    %v643 = vpop.f32.mrf.mxu0
    %v644 = vpop.f32.mrf.mxu0
    %v645 = vpop.f32.mrf.mxu0
    %646 = vdwg.mxu0
    %v647 = vld [vmem:[%s2 + $0x9] sm:$0x1]
    %v648 = vld [vmem:[%s2 + $0xa] sm:$0x1]
    %v649 = vrot.slane %v642, 4
    %v650 = vadd.f32 %v642, %v649
    %v651 = vrot.slane %v650, 2
    %v652 = vadd.f32 %v650, %v651
    %v653 = vrot.slane %v652, 1
    %v654 = vadd.f32 %v652, %v653
    %v655 = vmul.f32 %v654, %v259
    %v656 = vsub.f32 %v642, %v655
    %v657 = vmul.f32 %v656, %v656
    %v658 = vrot.slane %v657, 4
    %v659 = vadd.f32 %v657, %v658
    %v660 = vrot.slane %v659, 2
    %v661 = vadd.f32 %v659, %v660
    %v662 = vrot.slane %v661, 1
    %v663 = vadd.f32 %v661, %v662
    %v664 = vmul.f32 %v663, %v259
    %v665 = vadd.f32 %v664, 1e-05
    %v666 = vrsqrt.pop %v665
    %v667 = vmul.f32 %v647, %v666
    %v668 = vlaneseq
    %v669 = vshrl.u32 %v668, 7
    %v670 = vsub.s32 0, %v669
    %v671 = vrot.slane %v667, %v670
    %v672 = vmul.f32 %v656, %v671
    %v673 = vlaneseq
    %v674 = vshrl.u32 %v673, 7
    %v675 = vsub.s32 0, %v674
    %v676 = vrot.slane %v648, %v675
    %v677 = vadd.f32 %v672, %v676
    %v678 = vmax.f32 %v677, 0.0
    %v679 = vld [vmem:[#allocation2 + $0x140] sm:$0xf]
    %v680 = vld [vmem:[#allocation2 + $0x144] sm:$0xf]
    %v681 = vld [vmem:[#allocation2 + $0x148] sm:$0xf]
    %v682 = vld [vmem:[#allocation2 + $0x14c] sm:$0xf]
    %v683 = vld [vmem:[#allocation2 + $0x150] sm:$0xf]
    %v684 = vld [vmem:[#allocation2 + $0x154] sm:$0xf]
    %v685 = vld [vmem:[#allocation2 + $0x158] sm:$0xf]
    %v686 = vld [vmem:[#allocation2 + $0x15c] sm:$0xf]
    %v687 = vld [vmem:[#allocation2 + $0x160] sm:$0xf]
    %v688 = vld [vmem:[#allocation2 + $0x164] sm:$0xf]
    %v689 = vld [vmem:[#allocation2 + $0x168] sm:$0xf]
    %v690 = vld [vmem:[#allocation2 + $0x16c] sm:$0xf]
    %v691 = vld [vmem:[#allocation2 + $0x170] sm:$0xf]
    %v692 = vld [vmem:[#allocation2 + $0x174] sm:$0xf]
    %v693 = vld [vmem:[#allocation2 + $0x178] sm:$0xf]
    %v694 = vld [vmem:[#allocation2 + $0x17c] sm:$0xf]
    %v695 = vld [vmem:[%s2 + $0xb] sm:$0x1]
    %v696 = vpack.c.bf16 %v678, %v678
    %v697 = vlaneseq
    %v698 = vshrl.u32 %v697, 7
    %v699 = vsub.s32 0, %v698
    %v700 = vrot.slane %v695, %v699
    %v717 = vunpack.c.l.b16 %v679
    %v718 = vunpack.c.l.b16 %v680
    %v719 = vunpack.c.l.b16 %v681
    %v720 = vunpack.c.l.b16 %v682
    %v721 = vunpack.c.l.b16 %v683
    %v722 = vunpack.c.l.b16 %v684
    %v723 = vunpack.c.l.b16 %v685
    %v724 = vunpack.c.l.b16 %v686
    %v725 = vunpack.c.l.b16 %v687
    %v726 = vunpack.c.l.b16 %v688
    %v727 = vunpack.c.l.b16 %v689
    %v728 = vunpack.c.l.b16 %v690
    %v729 = vunpack.c.l.b16 %v691
    %v730 = vunpack.c.l.b16 %v692
    %v731 = vunpack.c.l.b16 %v693
    %v732 = vunpack.c.l.b16 %v694
    %v733 = vpack.c.b16 %v718, %v717
    %v734 = vpack.c.b16 %v720, %v719
    %v735 = vpack.c.b16 %v722, %v721
    %v736 = vpack.c.b16 %v724, %v723
    %v737 = vpack.c.b16 %v726, %v725
    %v738 = vpack.c.b16 %v728, %v727
    %v739 = vpack.c.b16 %v730, %v729
    %v740 = vpack.c.b16 %v732, %v731
    %749 = vmatprep.subr.bf16.mxu0 0
    %750 = vmatpush1.bf16.msra.mxu0 %v740
    %751 = vmatprep.subr.bf16.mxu0 0
    %752 = vmatpush1.bf16.msra.mxu0 %v739
    %753 = vmatprep.subr.bf16.mxu0 0
    %754 = vmatpush1.bf16.msra.mxu0 %v738
    %755 = vmatprep.subr.bf16.mxu0 0
    %756 = vmatpush1.bf16.msra.mxu0 %v737
    %757 = vmatprep.subr.bf16.mxu0 0
    %758 = vmatpush1.bf16.msra.mxu0 %v736
    %759 = vmatprep.subr.bf16.mxu0 0
    %760 = vmatpush1.bf16.msra.mxu0 %v735
    %761 = vmatprep.subr.bf16.mxu0 0
    %762 = vmatpush1.bf16.msra.mxu0 %v734
    %763 = vmatprep.subr.bf16.mxu0 0
    %764 = vmatpush1.bf16.msra.mxu0 %v733
    %765 = vmatprep.subr.bf16.mxu0 0
    %766 = vmatpush2.bf16.msra.mxu0 0
    %767 = vmatprep.subr.bf16.mxu0 0
    %768 = vmatpush2.bf16.msra.mxu0 0
    %769 = vmatprep.subr.bf16.mxu0 0
    %770 = vmatpush2.bf16.msra.mxu0 0
    %771 = vmatprep.subr.bf16.mxu0 0
    %772 = vmatpush2.bf16.msra.mxu0 0
    %773 = vmatprep.subr.bf16.mxu0 0
    %774 = vmatpush2.bf16.msra.mxu0 0
    %775 = vmatprep.subr.bf16.mxu0 0
    %776 = vmatpush2.bf16.msra.mxu0 0
    %777 = vmatprep.subr.bf16.mxu0 0
    %778 = vmatpush2.bf16.msra.mxu0 0
    %779 = vmatprep.subr.bf16.mxu0 0
    %780 = vmatpush2.bf16.msra.mxu0 0
    %781 = vmatprep.mubr.bf16.mxu0 0
    %782 = vmatmul.mubr.bf16.gmra.mxu0 %v696
    %v783 = vpop.f32.mrf.mxu0
    %v784 = vadd.f32 %v700, %v783
    %v785 = vpop.f32.mrf.mxu0
    %v786 = vpop.f32.mrf.mxu0
    %v787 = vpop.f32.mrf.mxu0
    %788 = vdwg.mxu0
    %v789 = vld [vmem:[%s2 + $0xc] sm:$0x1]
    %v790 = vld [vmem:[%s2 + $0xd] sm:$0x1]
    %v791 = vrot.slane %v784, 4
    %v792 = vadd.f32 %v784, %v791
    %v793 = vrot.slane %v792, 2
    %v794 = vadd.f32 %v792, %v793
    %v795 = vrot.slane %v794, 1
    %v796 = vadd.f32 %v794, %v795
    %v797 = vmul.f32 %v796, %v259
    %v798 = vsub.f32 %v784, %v797
    %v799 = vmul.f32 %v798, %v798
    %v800 = vrot.slane %v799, 4
    %v801 = vadd.f32 %v799, %v800
    %v802 = vrot.slane %v801, 2
    %v803 = vadd.f32 %v801, %v802
    %v804 = vrot.slane %v803, 1
    %v805 = vadd.f32 %v803, %v804
    %v806 = vmul.f32 %v805, %v259
    %v807 = vadd.f32 %v806, 1e-05
    %v808 = vrsqrt.pop %v807
    %v809 = vmul.f32 %v789, %v808
    %v810 = vlaneseq
    %v811 = vshrl.u32 %v810, 7
    %v812 = vsub.s32 0, %v811
    %v813 = vrot.slane %v809, %v812
    %v814 = vmul.f32 %v798, %v813
    %v815 = vlaneseq
    %v816 = vshrl.u32 %v815, 7
    %v817 = vsub.s32 0, %v816
    %v818 = vrot.slane %v790, %v817
    %v819 = vadd.f32 %v814, %v818
    %v820 = vadd.f32 %v819, %v532
    %v821 = vmax.f32 %v820, 0.0
    %v822 = vld [vmem:[#allocation2 + $0x180] sm:$0xf]
    %v823 = vld [vmem:[#allocation2 + $0x184] sm:$0xf]
    %v824 = vld [vmem:[#allocation2 + $0x188] sm:$0xf]
    %v825 = vld [vmem:[#allocation2 + $0x18c] sm:$0xf]
    %v826 = vld [vmem:[#allocation2 + $0x190] sm:$0xf]
    %v827 = vld [vmem:[#allocation2 + $0x194] sm:$0xf]
    %v828 = vld [vmem:[#allocation2 + $0x198] sm:$0xf]
    %v829 = vld [vmem:[#allocation2 + $0x19c] sm:$0xf]
    %v830 = vld [vmem:[#allocation2 + $0x1a0] sm:$0xf]
    %v831 = vld [vmem:[#allocation2 + $0x1a4] sm:$0xf]
    %v832 = vld [vmem:[#allocation2 + $0x1a8] sm:$0xf]
    %v833 = vld [vmem:[#allocation2 + $0x1ac] sm:$0xf]
    %v834 = vld [vmem:[#allocation2 + $0x1b0] sm:$0xf]
    %v835 = vld [vmem:[#allocation2 + $0x1b4] sm:$0xf]
    %v836 = vld [vmem:[#allocation2 + $0x1b8] sm:$0xf]
    %v837 = vld [vmem:[#allocation2 + $0x1bc] sm:$0xf]
    %v838 = vld [vmem:[%s2 + $0xe] sm:$0x1]
    %v839 = vpack.c.bf16 %v821, %v821
    %v840 = vlaneseq
    %v841 = vshrl.u32 %v840, 7
    %v842 = vsub.s32 0, %v841
    %v843 = vrot.slane %v838, %v842
    %v860 = vunpack.c.l.b16 %v822
    %v861 = vunpack.c.l.b16 %v823
    %v862 = vunpack.c.l.b16 %v824
    %v863 = vunpack.c.l.b16 %v825
    %v864 = vunpack.c.l.b16 %v826
    %v865 = vunpack.c.l.b16 %v827
    %v866 = vunpack.c.l.b16 %v828
    %v867 = vunpack.c.l.b16 %v829
    %v868 = vunpack.c.l.b16 %v830
    %v869 = vunpack.c.l.b16 %v831
    %v870 = vunpack.c.l.b16 %v832
    %v871 = vunpack.c.l.b16 %v833
    %v872 = vunpack.c.l.b16 %v834
    %v873 = vunpack.c.l.b16 %v835
    %v874 = vunpack.c.l.b16 %v836
    %v875 = vunpack.c.l.b16 %v837
    %v876 = vpack.c.b16 %v861, %v860
    %v877 = vpack.c.b16 %v863, %v862
    %v878 = vpack.c.b16 %v865, %v864
    %v879 = vpack.c.b16 %v867, %v866
    %v880 = vpack.c.b16 %v869, %v868
    %v881 = vpack.c.b16 %v871, %v870
    %v882 = vpack.c.b16 %v873, %v872
    %v883 = vpack.c.b16 %v875, %v874
    %892 = vmatprep.subr.bf16.mxu0 0
    %893 = vmatpush1.bf16.msra.mxu0 %v883
    %894 = vmatprep.subr.bf16.mxu0 0
    %895 = vmatpush1.bf16.msra.mxu0 %v882
    %896 = vmatprep.subr.bf16.mxu0 0
    %897 = vmatpush1.bf16.msra.mxu0 %v881
    %898 = vmatprep.subr.bf16.mxu0 0
    %899 = vmatpush1.bf16.msra.mxu0 %v880
    %900 = vmatprep.subr.bf16.mxu0 0
    %901 = vmatpush1.bf16.msra.mxu0 %v879
    %902 = vmatprep.subr.bf16.mxu0 0
    %903 = vmatpush1.bf16.msra.mxu0 %v878
    %904 = vmatprep.subr.bf16.mxu0 0
    %905 = vmatpush1.bf16.msra.mxu0 %v877
    %906 = vmatprep.subr.bf16.mxu0 0
    %907 = vmatpush1.bf16.msra.mxu0 %v876
    %908 = vmatprep.subr.bf16.mxu0 0
    %909 = vmatpush2.bf16.msra.mxu0 0
    %910 = vmatprep.subr.bf16.mxu0 0
    %911 = vmatpush2.bf16.msra.mxu0 0
    %912 = vmatprep.subr.bf16.mxu0 0
    %913 = vmatpush2.bf16.msra.mxu0 0
    %914 = vmatprep.subr.bf16.mxu0 0
    %915 = vmatpush2.bf16.msra.mxu0 0
    %916 = vmatprep.subr.bf16.mxu0 0
    %917 = vmatpush2.bf16.msra.mxu0 0
    %918 = vmatprep.subr.bf16.mxu0 0
    %919 = vmatpush2.bf16.msra.mxu0 0
    %920 = vmatprep.subr.bf16.mxu0 0
    %921 = vmatpush2.bf16.msra.mxu0 0
    %922 = vmatprep.subr.bf16.mxu0 0
    %923 = vmatpush2.bf16.msra.mxu0 0
    %924 = vmatprep.mubr.bf16.mxu0 0
    %925 = vmatmul.mubr.bf16.gmra.mxu0 %v839
    %v926 = vpop.f32.mrf.mxu0
    %v927 = vadd.f32 %v843, %v926
    %v928 = vpop.f32.mrf.mxu0
    %v929 = vpop.f32.mrf.mxu0
    %v930 = vpop.f32.mrf.mxu0
    %931 = vdwg.mxu0
    %v932 = vld [vmem:[#allocation2 + $0x1c0] sm:$0xf]
    %v933 = vld [vmem:[#allocation2 + $0x1c4] sm:$0xf]
    %v934 = vld [vmem:[#allocation2 + $0x1c8] sm:$0xf]
    %v935 = vld [vmem:[#allocation2 + $0x1cc] sm:$0xf]
    %v936 = vld [vmem:[#allocation2 + $0x1d0] sm:$0xf]
    %v937 = vld [vmem:[#allocation2 + $0x1d4] sm:$0xf]
    %v938 = vld [vmem:[#allocation2 + $0x1d8] sm:$0xf]
    %v939 = vld [vmem:[#allocation2 + $0x1dc] sm:$0xf]
    %v940 = vld [vmem:[#allocation2 + $0x1e0] sm:$0xf]
    %v941 = vld [vmem:[#allocation2 + $0x1e4] sm:$0xf]
    %v942 = vld [vmem:[#allocation2 + $0x1e8] sm:$0xf]
    %v943 = vld [vmem:[#allocation2 + $0x1ec] sm:$0xf]
    %v944 = vld [vmem:[#allocation2 + $0x1f0] sm:$0xf]
    %v945 = vld [vmem:[#allocation2 + $0x1f4] sm:$0xf]
    %v946 = vld [vmem:[#allocation2 + $0x1f8] sm:$0xf]
    %v947 = vld [vmem:[#allocation2 + $0x1fc] sm:$0xf]
    %v948 = vld [vmem:[%s2 + $0xf] sm:$0x1]
    %v949 = vpack.c.bf16 %v927, %v927
    %v950 = vlaneseq
    %v951 = vshrl.u32 %v950, 7
    %v952 = vsub.s32 0, %v951
    %v953 = vrot.slane %v948, %v952
    %v970 = vunpack.c.l.b16 %v932
    %v971 = vunpack.c.l.b16 %v933
    %v972 = vunpack.c.l.b16 %v934
    %v973 = vunpack.c.l.b16 %v935
    %v974 = vunpack.c.l.b16 %v936
    %v975 = vunpack.c.l.b16 %v937
    %v976 = vunpack.c.l.b16 %v938
    %v977 = vunpack.c.l.b16 %v939
    %v978 = vunpack.c.l.b16 %v940
    %v979 = vunpack.c.l.b16 %v941
    %v980 = vunpack.c.l.b16 %v942
    %v981 = vunpack.c.l.b16 %v943
    %v982 = vunpack.c.l.b16 %v944
    %v983 = vunpack.c.l.b16 %v945
    %v984 = vunpack.c.l.b16 %v946
    %v985 = vunpack.c.l.b16 %v947
    %v986 = vpack.c.b16 %v971, %v970
    %v987 = vpack.c.b16 %v973, %v972
    %v988 = vpack.c.b16 %v975, %v974
    %v989 = vpack.c.b16 %v977, %v976
    %v990 = vpack.c.b16 %v979, %v978
    %v991 = vpack.c.b16 %v981, %v980
    %v992 = vpack.c.b16 %v983, %v982
    %v993 = vpack.c.b16 %v985, %v984
    %1002 = vmatprep.subr.bf16.mxu0 0
    %1003 = vmatpush1.bf16.msra.mxu0 %v993
    %1004 = vmatprep.subr.bf16.mxu0 0
    %1005 = vmatpush1.bf16.msra.mxu0 %v992
    %1006 = vmatprep.subr.bf16.mxu0 0
    %1007 = vmatpush1.bf16.msra.mxu0 %v991
    %1008 = vmatprep.subr.bf16.mxu0 0
    %1009 = vmatpush1.bf16.msra.mxu0 %v990
    %1010 = vmatprep.subr.bf16.mxu0 0
    %1011 = vmatpush1.bf16.msra.mxu0 %v989
    %1012 = vmatprep.subr.bf16.mxu0 0
    %1013 = vmatpush1.bf16.msra.mxu0 %v988
    %1014 = vmatprep.subr.bf16.mxu0 0
    %1015 = vmatpush1.bf16.msra.mxu0 %v987
    %1016 = vmatprep.subr.bf16.mxu0 0
    %1017 = vmatpush1.bf16.msra.mxu0 %v986
    %1018 = vmatprep.subr.bf16.mxu0 0
    %1019 = vmatpush2.bf16.msra.mxu0 0
    %1020 = vmatprep.subr.bf16.mxu0 0
    %1021 = vmatpush2.bf16.msra.mxu0 0
    %1022 = vmatprep.subr.bf16.mxu0 0
    %1023 = vmatpush2.bf16.msra.mxu0 0
    %1024 = vmatprep.subr.bf16.mxu0 0
    %1025 = vmatpush2.bf16.msra.mxu0 0
    %1026 = vmatprep.subr.bf16.mxu0 0
    %1027 = vmatpush2.bf16.msra.mxu0 0
    %1028 = vmatprep.subr.bf16.mxu0 0
    %1029 = vmatpush2.bf16.msra.mxu0 0
    %1030 = vmatprep.subr.bf16.mxu0 0
    %1031 = vmatpush2.bf16.msra.mxu0 0
    %1032 = vmatprep.subr.bf16.mxu0 0
    %1033 = vmatpush2.bf16.msra.mxu0 0
    %1034 = vmatprep.mubr.bf16.mxu0 0
    %1035 = vmatmul.mubr.bf16.gmra.mxu0 %v949
    %v1036 = vpop.f32.mrf.mxu0
    %v1037 = vadd.f32 %v953, %v1036
    %v1038 = vpop.f32.mrf.mxu0
    %v1039 = vpop.f32.mrf.mxu0
    %v1040 = vpop.f32.mrf.mxu0
    %1041 = vdwg.mxu0
    %v1042 = vld [vmem:[%s2 + $0x10] sm:$0x1]
    %v1043 = vld [vmem:[%s2 + $0x11] sm:$0x1]
    %v1044 = vrot.slane %v1037, 4
    %v1045 = vadd.f32 %v1037, %v1044
    %v1046 = vrot.slane %v1045, 2
    %v1047 = vadd.f32 %v1045, %v1046
    %v1048 = vrot.slane %v1047, 1
    %v1049 = vadd.f32 %v1047, %v1048
    %v1050 = vmul.f32 %v1049, %v259
    %v1051 = vsub.f32 %v1037, %v1050
    %v1052 = vmul.f32 %v1051, %v1051
    %v1053 = vrot.slane %v1052, 4
    %v1054 = vadd.f32 %v1052, %v1053
    %v1055 = vrot.slane %v1054, 2
    %v1056 = vadd.f32 %v1054, %v1055
    %v1057 = vrot.slane %v1056, 1
    %v1058 = vadd.f32 %v1056, %v1057
    %v1059 = vmul.f32 %v1058, %v259
    %v1060 = vadd.f32 %v1059, 1e-05
    %v1061 = vrsqrt.pop %v1060
    %v1062 = vmul.f32 %v1042, %v1061
    %v1063 = vlaneseq
    %v1064 = vshrl.u32 %v1063, 7
    %v1065 = vsub.s32 0, %v1064
    %v1066 = vrot.slane %v1062, %v1065
    %v1067 = vmul.f32 %v1051, %v1066
    %v1068 = vlaneseq
    %v1069 = vshrl.u32 %v1068, 7
    %v1070 = vsub.s32 0, %v1069
    %v1071 = vrot.slane %v1043, %v1070
    %v1072 = vadd.f32 %v1067, %v1071
    %v1073 = vmax.f32 %v1072, 0.0
    %v1074 = vld [vmem:[#allocation2 + $0x200] sm:$0xf]
    %v1075 = vld [vmem:[#allocation2 + $0x204] sm:$0xf]
    %v1076 = vld [vmem:[#allocation2 + $0x208] sm:$0xf]
    %v1077 = vld [vmem:[#allocation2 + $0x20c] sm:$0xf]
    %v1078 = vld [vmem:[#allocation2 + $0x210] sm:$0xf]
    %v1079 = vld [vmem:[#allocation2 + $0x214] sm:$0xf]
    %v1080 = vld [vmem:[#allocation2 + $0x218] sm:$0xf]
    %v1081 = vld [vmem:[#allocation2 + $0x21c] sm:$0xf]
    %v1082 = vld [vmem:[#allocation2 + $0x220] sm:$0xf]
    %v1083 = vld [vmem:[#allocation2 + $0x224] sm:$0xf]
    %v1084 = vld [vmem:[#allocation2 + $0x228] sm:$0xf]
    %v1085 = vld [vmem:[#allocation2 + $0x22c] sm:$0xf]
    %v1086 = vld [vmem:[#allocation2 + $0x230] sm:$0xf]
    %v1087 = vld [vmem:[#allocation2 + $0x234] sm:$0xf]
    %v1088 = vld [vmem:[#allocation2 + $0x238] sm:$0xf]
    %v1089 = vld [vmem:[#allocation2 + $0x23c] sm:$0xf]
    %v1090 = vld [vmem:[%s2 + $0x12] sm:$0x1]
    %v1091 = vpack.c.bf16 %v1073, %v1073
    %v1092 = vlaneseq
    %v1093 = vshrl.u32 %v1092, 7
    %v1094 = vsub.s32 0, %v1093
    %v1095 = vrot.slane %v1090, %v1094
    %v1112 = vunpack.c.l.b16 %v1074
    %v1113 = vunpack.c.l.b16 %v1075
    %v1114 = vunpack.c.l.b16 %v1076
    %v1115 = vunpack.c.l.b16 %v1077
    %v1116 = vunpack.c.l.b16 %v1078
    %v1117 = vunpack.c.l.b16 %v1079
    %v1118 = vunpack.c.l.b16 %v1080
    %v1119 = vunpack.c.l.b16 %v1081
    %v1120 = vunpack.c.l.b16 %v1082
    %v1121 = vunpack.c.l.b16 %v1083
    %v1122 = vunpack.c.l.b16 %v1084
    %v1123 = vunpack.c.l.b16 %v1085
    %v1124 = vunpack.c.l.b16 %v1086
    %v1125 = vunpack.c.l.b16 %v1087
    %v1126 = vunpack.c.l.b16 %v1088
    %v1127 = vunpack.c.l.b16 %v1089
    %v1128 = vpack.c.b16 %v1113, %v1112
    %v1129 = vpack.c.b16 %v1115, %v1114
    %v1130 = vpack.c.b16 %v1117, %v1116
    %v1131 = vpack.c.b16 %v1119, %v1118
    %v1132 = vpack.c.b16 %v1121, %v1120
    %v1133 = vpack.c.b16 %v1123, %v1122
    %v1134 = vpack.c.b16 %v1125, %v1124
    %v1135 = vpack.c.b16 %v1127, %v1126
    %1144 = vmatprep.subr.bf16.mxu0 0
    %1145 = vmatpush1.bf16.msra.mxu0 %v1135
    %1146 = vmatprep.subr.bf16.mxu0 0
    %1147 = vmatpush1.bf16.msra.mxu0 %v1134
    %1148 = vmatprep.subr.bf16.mxu0 0
    %1149 = vmatpush1.bf16.msra.mxu0 %v1133
    %1150 = vmatprep.subr.bf16.mxu0 0
    %1151 = vmatpush1.bf16.msra.mxu0 %v1132
    %1152 = vmatprep.subr.bf16.mxu0 0
    %1153 = vmatpush1.bf16.msra.mxu0 %v1131
    %1154 = vmatprep.subr.bf16.mxu0 0
    %1155 = vmatpush1.bf16.msra.mxu0 %v1130
    %1156 = vmatprep.subr.bf16.mxu0 0
    %1157 = vmatpush1.bf16.msra.mxu0 %v1129
    %1158 = vmatprep.subr.bf16.mxu0 0
    %1159 = vmatpush1.bf16.msra.mxu0 %v1128
    %1160 = vmatprep.subr.bf16.mxu0 0
    %1161 = vmatpush2.bf16.msra.mxu0 0
    %1162 = vmatprep.subr.bf16.mxu0 0
    %1163 = vmatpush2.bf16.msra.mxu0 0
    %1164 = vmatprep.subr.bf16.mxu0 0
    %1165 = vmatpush2.bf16.msra.mxu0 0
    %1166 = vmatprep.subr.bf16.mxu0 0
    %1167 = vmatpush2.bf16.msra.mxu0 0
    %1168 = vmatprep.subr.bf16.mxu0 0
    %1169 = vmatpush2.bf16.msra.mxu0 0
    %1170 = vmatprep.subr.bf16.mxu0 0
    %1171 = vmatpush2.bf16.msra.mxu0 0
    %1172 = vmatprep.subr.bf16.mxu0 0
    %1173 = vmatpush2.bf16.msra.mxu0 0
    %1174 = vmatprep.subr.bf16.mxu0 0
    %1175 = vmatpush2.bf16.msra.mxu0 0
    %1176 = vmatprep.mubr.bf16.mxu0 0
    %1177 = vmatmul.mubr.bf16.gmra.mxu0 %v1091
    %v1178 = vpop.f32.mrf.mxu0
    %v1179 = vadd.f32 %v1095, %v1178
    %v1180 = vpop.f32.mrf.mxu0
    %v1181 = vpop.f32.mrf.mxu0
    %v1182 = vpop.f32.mrf.mxu0
    %1183 = vdwg.mxu0
    %v1184 = vld [vmem:[%s2 + $0x13] sm:$0x1]
    %v1185 = vld [vmem:[%s2 + $0x14] sm:$0x1]
    %v1186 = vrot.slane %v1179, 4
    %v1187 = vadd.f32 %v1179, %v1186
    %v1188 = vrot.slane %v1187, 2
    %v1189 = vadd.f32 %v1187, %v1188
    %v1190 = vrot.slane %v1189, 1
    %v1191 = vadd.f32 %v1189, %v1190
    %v1192 = vmul.f32 %v1191, %v259
    %v1193 = vsub.f32 %v1179, %v1192
    %v1194 = vmul.f32 %v1193, %v1193
    %v1195 = vrot.slane %v1194, 4
    %v1196 = vadd.f32 %v1194, %v1195
    %v1197 = vrot.slane %v1196, 2
    %v1198 = vadd.f32 %v1196, %v1197
    %v1199 = vrot.slane %v1198, 1
    %v1200 = vadd.f32 %v1198, %v1199
    %v1201 = vmul.f32 %v1200, %v259
    %v1202 = vadd.f32 %v1201, 1e-05
    %v1203 = vrsqrt.pop %v1202
    %v1204 = vmul.f32 %v1184, %v1203
    %v1205 = vlaneseq
    %v1206 = vshrl.u32 %v1205, 7
    %v1207 = vsub.s32 0, %v1206
    %v1208 = vrot.slane %v1204, %v1207
    %v1209 = vmul.f32 %v1193, %v1208
    %v1210 = vlaneseq
    %v1211 = vshrl.u32 %v1210, 7
    %v1212 = vsub.s32 0, %v1211
    %v1213 = vrot.slane %v1185, %v1212
    %v1214 = vadd.f32 %v1209, %v1213
    %v1215 = vadd.f32 %v1214, %v927
    %v1216 = vmax.f32 %v1215, 0.0
    %v1217 = vld [vmem:[#allocation2 + $0x240] sm:$0xf]
    %v1218 = vld [vmem:[#allocation2 + $0x244] sm:$0xf]
    %v1219 = vld [vmem:[#allocation2 + $0x248] sm:$0xf]
    %v1220 = vld [vmem:[#allocation2 + $0x24c] sm:$0xf]
    %v1221 = vld [vmem:[#allocation2 + $0x250] sm:$0xf]
    %v1222 = vld [vmem:[#allocation2 + $0x254] sm:$0xf]
    %v1223 = vld [vmem:[#allocation2 + $0x258] sm:$0xf]
    %v1224 = vld [vmem:[#allocation2 + $0x25c] sm:$0xf]
    %v1225 = vld [vmem:[#allocation2 + $0x260] sm:$0xf]
    %v1226 = vld [vmem:[#allocation2 + $0x264] sm:$0xf]
    %v1227 = vld [vmem:[#allocation2 + $0x268] sm:$0xf]
    %v1228 = vld [vmem:[#allocation2 + $0x26c] sm:$0xf]
    %v1229 = vld [vmem:[#allocation2 + $0x270] sm:$0xf]
    %v1230 = vld [vmem:[#allocation2 + $0x274] sm:$0xf]
    %v1231 = vld [vmem:[#allocation2 + $0x278] sm:$0xf]
    %v1232 = vld [vmem:[#allocation2 + $0x27c] sm:$0xf]
    %v1233 = vld [vmem:[%s2 + $0x15] sm:$0x1]
    %v1234 = vpack.c.bf16 %v1216, %v1216
    %v1235 = vlaneseq
    %v1236 = vshrl.u32 %v1235, 7
    %v1237 = vsub.s32 0, %v1236
    %v1238 = vrot.slane %v1233, %v1237
    %v1255 = vunpack.c.l.b16 %v1217
    %v1256 = vunpack.c.l.b16 %v1218
    %v1257 = vunpack.c.l.b16 %v1219
    %v1258 = vunpack.c.l.b16 %v1220
    %v1259 = vunpack.c.l.b16 %v1221
    %v1260 = vunpack.c.l.b16 %v1222
    %v1261 = vunpack.c.l.b16 %v1223
    %v1262 = vunpack.c.l.b16 %v1224
    %v1263 = vunpack.c.l.b16 %v1225
    %v1264 = vunpack.c.l.b16 %v1226
    %v1265 = vunpack.c.l.b16 %v1227
    %v1266 = vunpack.c.l.b16 %v1228
    %v1267 = vunpack.c.l.b16 %v1229
    %v1268 = vunpack.c.l.b16 %v1230
    %v1269 = vunpack.c.l.b16 %v1231
    %v1270 = vunpack.c.l.b16 %v1232
    %v1271 = vpack.c.b16 %v1256, %v1255
    %v1272 = vpack.c.b16 %v1258, %v1257
    %v1273 = vpack.c.b16 %v1260, %v1259
    %v1274 = vpack.c.b16 %v1262, %v1261
    %v1275 = vpack.c.b16 %v1264, %v1263
    %v1276 = vpack.c.b16 %v1266, %v1265
    %v1277 = vpack.c.b16 %v1268, %v1267
    %v1278 = vpack.c.b16 %v1270, %v1269
    %1287 = vmatprep.subr.bf16.mxu0 0
    %1288 = vmatpush1.bf16.msra.mxu0 %v1278
    %1289 = vmatprep.subr.bf16.mxu0 0
    %1290 = vmatpush1.bf16.msra.mxu0 %v1277
    %1291 = vmatprep.subr.bf16.mxu0 0
    %1292 = vmatpush1.bf16.msra.mxu0 %v1276
    %1293 = vmatprep.subr.bf16.mxu0 0
    %1294 = vmatpush1.bf16.msra.mxu0 %v1275
    %1295 = vmatprep.subr.bf16.mxu0 0
    %1296 = vmatpush1.bf16.msra.mxu0 %v1274
    %1297 = vmatprep.subr.bf16.mxu0 0
    %1298 = vmatpush1.bf16.msra.mxu0 %v1273
    %1299 = vmatprep.subr.bf16.mxu0 0
    %1300 = vmatpush1.bf16.msra.mxu0 %v1272
    %1301 = vmatprep.subr.bf16.mxu0 0
    %1302 = vmatpush1.bf16.msra.mxu0 %v1271
    %1303 = vmatprep.subr.bf16.mxu0 0
    %1304 = vmatpush2.bf16.msra.mxu0 0
    %1305 = vmatprep.subr.bf16.mxu0 0
    %1306 = vmatpush2.bf16.msra.mxu0 0
    %1307 = vmatprep.subr.bf16.mxu0 0
    %1308 = vmatpush2.bf16.msra.mxu0 0
    %1309 = vmatprep.subr.bf16.mxu0 0
    %1310 = vmatpush2.bf16.msra.mxu0 0
    %1311 = vmatprep.subr.bf16.mxu0 0
    %1312 = vmatpush2.bf16.msra.mxu0 0
    %1313 = vmatprep.subr.bf16.mxu0 0
    %1314 = vmatpush2.bf16.msra.mxu0 0
    %1315 = vmatprep.subr.bf16.mxu0 0
    %1316 = vmatpush2.bf16.msra.mxu0 0
    %1317 = vmatprep.subr.bf16.mxu0 0
    %1318 = vmatpush2.bf16.msra.mxu0 0
    %1319 = vmatprep.mubr.bf16.mxu0 0
    %1320 = vmatmul.mubr.bf16.gmra.mxu0 %v1234
    %v1321 = vpop.f32.mrf.mxu0
    %v1322 = vadd.f32 %v1238, %v1321
    %v1323 = vpop.f32.mrf.mxu0
    %v1324 = vpop.f32.mrf.mxu0
    %v1325 = vpop.f32.mrf.mxu0
    %1326 = vdwg.mxu0
    %v1327 = vld [vmem:[#allocation2 + $0x280] sm:$0xf]
    %v1328 = vld [vmem:[#allocation2 + $0x284] sm:$0xf]
    %v1329 = vld [vmem:[#allocation2 + $0x288] sm:$0xf]
    %v1330 = vld [vmem:[#allocation2 + $0x28c] sm:$0xf]
    %v1331 = vld [vmem:[#allocation2 + $0x290] sm:$0xf]
    %v1332 = vld [vmem:[#allocation2 + $0x294] sm:$0xf]
    %v1333 = vld [vmem:[#allocation2 + $0x298] sm:$0xf]
    %v1334 = vld [vmem:[#allocation2 + $0x29c] sm:$0xf]
    %v1335 = vld [vmem:[#allocation2 + $0x2a0] sm:$0xf]
    %v1336 = vld [vmem:[#allocation2 + $0x2a4] sm:$0xf]
    %v1337 = vld [vmem:[#allocation2 + $0x2a8] sm:$0xf]
    %v1338 = vld [vmem:[#allocation2 + $0x2ac] sm:$0xf]
    %v1339 = vld [vmem:[#allocation2 + $0x2b0] sm:$0xf]
    %v1340 = vld [vmem:[#allocation2 + $0x2b4] sm:$0xf]
    %v1341 = vld [vmem:[#allocation2 + $0x2b8] sm:$0xf]
    %v1342 = vld [vmem:[#allocation2 + $0x2bc] sm:$0xf]
    %v1343 = vld [vmem:[%s2 + $0x16] sm:$0x1]
    %v1344 = vpack.c.bf16 %v1322, %v1322
    %v1345 = vlaneseq
    %v1346 = vshrl.u32 %v1345, 7
    %v1347 = vsub.s32 0, %v1346
    %v1348 = vrot.slane %v1343, %v1347
    %v1365 = vunpack.c.l.b16 %v1327
    %v1366 = vunpack.c.l.b16 %v1328
    %v1367 = vunpack.c.l.b16 %v1329
    %v1368 = vunpack.c.l.b16 %v1330
    %v1369 = vunpack.c.l.b16 %v1331
    %v1370 = vunpack.c.l.b16 %v1332
    %v1371 = vunpack.c.l.b16 %v1333
    %v1372 = vunpack.c.l.b16 %v1334
    %v1373 = vunpack.c.l.b16 %v1335
    %v1374 = vunpack.c.l.b16 %v1336
    %v1375 = vunpack.c.l.b16 %v1337
    %v1376 = vunpack.c.l.b16 %v1338
    %v1377 = vunpack.c.l.b16 %v1339
    %v1378 = vunpack.c.l.b16 %v1340
    %v1379 = vunpack.c.l.b16 %v1341
    %v1380 = vunpack.c.l.b16 %v1342
    %v1381 = vpack.c.b16 %v1366, %v1365
    %v1382 = vpack.c.b16 %v1368, %v1367
    %v1383 = vpack.c.b16 %v1370, %v1369
    %v1384 = vpack.c.b16 %v1372, %v1371
    %v1385 = vpack.c.b16 %v1374, %v1373
    %v1386 = vpack.c.b16 %v1376, %v1375
    %v1387 = vpack.c.b16 %v1378, %v1377
    %v1388 = vpack.c.b16 %v1380, %v1379
    %1397 = vmatprep.subr.bf16.mxu0 0
    %1398 = vmatpush1.bf16.msra.mxu0 %v1388
    %1399 = vmatprep.subr.bf16.mxu0 0
    %1400 = vmatpush1.bf16.msra.mxu0 %v1387
    %1401 = vmatprep.subr.bf16.mxu0 0
    %1402 = vmatpush1.bf16.msra.mxu0 %v1386
    %1403 = vmatprep.subr.bf16.mxu0 0
    %1404 = vmatpush1.bf16.msra.mxu0 %v1385
    %1405 = vmatprep.subr.bf16.mxu0 0
    %1406 = vmatpush1.bf16.msra.mxu0 %v1384
    %1407 = vmatprep.subr.bf16.mxu0 0
    %1408 = vmatpush1.bf16.msra.mxu0 %v1383
    %1409 = vmatprep.subr.bf16.mxu0 0
    %1410 = vmatpush1.bf16.msra.mxu0 %v1382
    %1411 = vmatprep.subr.bf16.mxu0 0
    %1412 = vmatpush1.bf16.msra.mxu0 %v1381
    %1413 = vmatprep.subr.bf16.mxu0 0
    %1414 = vmatpush2.bf16.msra.mxu0 0
    %1415 = vmatprep.subr.bf16.mxu0 0
    %1416 = vmatpush2.bf16.msra.mxu0 0
    %1417 = vmatprep.subr.bf16.mxu0 0
    %1418 = vmatpush2.bf16.msra.mxu0 0
    %1419 = vmatprep.subr.bf16.mxu0 0
    %1420 = vmatpush2.bf16.msra.mxu0 0
    %1421 = vmatprep.subr.bf16.mxu0 0
    %1422 = vmatpush2.bf16.msra.mxu0 0
    %1423 = vmatprep.subr.bf16.mxu0 0
    %1424 = vmatpush2.bf16.msra.mxu0 0
    %1425 = vmatprep.subr.bf16.mxu0 0
    %1426 = vmatpush2.bf16.msra.mxu0 0
    %1427 = vmatprep.subr.bf16.mxu0 0
    %1428 = vmatpush2.bf16.msra.mxu0 0
    %1429 = vmatprep.mubr.bf16.mxu0 0
    %1430 = vmatmul.mubr.bf16.gmra.mxu0 %v1344
    %v1431 = vpop.f32.mrf.mxu0
    %v1432 = vadd.f32 %v1348, %v1431
    %v1433 = vpop.f32.mrf.mxu0
    %v1434 = vpop.f32.mrf.mxu0
    %v1435 = vpop.f32.mrf.mxu0
    %1436 = vdwg.mxu0
    %1437 = vst [vmem:[%s3 + $0x8] sm:$0xff] %v1432
    %v1438 = vmul.f32 %v1432, 0.5
    %v1439 = vmul.f32 %v1438, 1.442695
    %v1440 = vpow.pop %v1439
    %1442 = vrot.lane.b32.xlu0 %v1440, 48
    %v1443 = vpop.permute.xlu0 %1442
    %v1445 = vmul.f32 %v29, %v1443
    %1447 = vrot.lane.b32.xlu0 %v1445, 64
    %v1448 = vpop.permute.xlu0 %1447
    %v1450 = vadd.f32 %v1432, %v1448
    %v1451 = vld [vmem:[#allocation2 + $0x2c0] sm:$0xf]
    %v1452 = vld [vmem:[#allocation2 + $0x2c4] sm:$0xf]
    %v1453 = vld [vmem:[#allocation2 + $0x300] sm:$0xf]
    %v1454 = vld [vmem:[#allocation2 + $0x304] sm:$0xf]
    %v1455 = vld [vmem:[#allocation2 + $0x308] sm:$0xf]
    %v1456 = vld [vmem:[#allocation2 + $0x30c] sm:$0xf]
    %v1457 = vld [vmem:[#allocation2 + $0x310] sm:$0xf]
    %v1458 = vld [vmem:[#allocation2 + $0x314] sm:$0xf]
    %v1459 = vld [vmem:[#allocation2 + $0x318] sm:$0xf]
    %v1460 = vld [vmem:[#allocation2 + $0x31c] sm:$0xf]
    %v1461 = vld [vmem:[#allocation2 + $0x320] sm:$0xf]
    %v1462 = vld [vmem:[#allocation2 + $0x324] sm:$0xf]
    %v1463 = vld [vmem:[#allocation2 + $0x328] sm:$0xf]
    %v1464 = vld [vmem:[#allocation2 + $0x32c] sm:$0xf]
    %v1465 = vld [vmem:[#allocation2 + $0x330] sm:$0xf]
    %v1466 = vld [vmem:[#allocation2 + $0x334] sm:$0xf]
    %v1467 = vld [vmem:[#allocation2 + $0x338] sm:$0xf]
    %v1468 = vld [vmem:[#allocation2 + $0x33c] sm:$0xf]
    %v1469 = vld [vmem:[%s2 + $0x17] sm:$0x1]
    %v1470 = vpack.c.bf16 %v1450, %v1450
    %v1471 = vpack.c.bf16 %v30, %v30
    %v1488 = vunpack.c.l.b16 %v1453
    %v1489 = vunpack.c.l.b16 %v1454
    %v1490 = vunpack.c.l.b16 %v1455
    %v1491 = vunpack.c.l.b16 %v1456
    %v1492 = vunpack.c.l.b16 %v1457
    %v1493 = vunpack.c.l.b16 %v1458
    %v1494 = vunpack.c.l.b16 %v1459
    %v1495 = vunpack.c.l.b16 %v1460
    %v1496 = vunpack.c.l.b16 %v1461
    %v1497 = vunpack.c.l.b16 %v1462
    %v1498 = vunpack.c.l.b16 %v1463
    %v1499 = vunpack.c.l.b16 %v1464
    %v1500 = vunpack.c.l.b16 %v1465
    %v1501 = vunpack.c.l.b16 %v1466
    %v1502 = vunpack.c.l.b16 %v1467
    %v1503 = vunpack.c.l.b16 %v1468
    %v1504 = vpack.c.b16 %v1489, %v1488
    %v1505 = vpack.c.b16 %v1491, %v1490
    %v1506 = vpack.c.b16 %v1493, %v1492
    %v1507 = vpack.c.b16 %v1495, %v1494
    %v1508 = vpack.c.b16 %v1497, %v1496
    %v1509 = vpack.c.b16 %v1499, %v1498
    %v1510 = vpack.c.b16 %v1501, %v1500
    %v1511 = vpack.c.b16 %v1503, %v1502
    %1520 = vmatprep.subr.bf16.mxu0 0
    %1521 = vmatpush1.bf16.msra.mxu0 %v1511
    %1522 = vmatprep.subr.bf16.mxu0 0
    %1523 = vmatpush1.bf16.msra.mxu0 %v1510
    %1524 = vmatprep.subr.bf16.mxu0 0
    %1525 = vmatpush1.bf16.msra.mxu0 %v1509
    %1526 = vmatprep.subr.bf16.mxu0 0
    %1527 = vmatpush1.bf16.msra.mxu0 %v1508
    %1528 = vmatprep.subr.bf16.mxu0 0
    %1529 = vmatpush1.bf16.msra.mxu0 %v1507
    %1530 = vmatprep.subr.bf16.mxu0 0
    %1531 = vmatpush1.bf16.msra.mxu0 %v1506
    %1532 = vmatprep.subr.bf16.mxu0 0
    %1533 = vmatpush1.bf16.msra.mxu0 %v1505
    %1534 = vmatprep.subr.bf16.mxu0 0
    %1535 = vmatpush1.bf16.msra.mxu0 %v1504
    %1536 = vmatprep.subr.bf16.mxu0 0
    %1537 = vmatpush2.bf16.msra.mxu0 0
    %1538 = vmatprep.subr.bf16.mxu0 0
    %1539 = vmatpush2.bf16.msra.mxu0 0
    %1540 = vmatprep.subr.bf16.mxu0 0
    %1541 = vmatpush2.bf16.msra.mxu0 0
    %1542 = vmatprep.subr.bf16.mxu0 0
    %1543 = vmatpush2.bf16.msra.mxu0 0
    %1544 = vmatprep.subr.bf16.mxu0 0
    %1545 = vmatpush2.bf16.msra.mxu0 0
    %1546 = vmatprep.subr.bf16.mxu0 0
    %1547 = vmatpush2.bf16.msra.mxu0 0
    %1548 = vmatprep.subr.bf16.mxu0 0
    %1549 = vmatpush2.bf16.msra.mxu0 0
    %1550 = vmatprep.subr.bf16.mxu0 0
    %1551 = vmatpush2.bf16.msra.mxu0 0
    %1552 = vmatprep.mubr.bf16.mxu0 0
    %1553 = vmatmul.mubr.bf16.gmra.mxu0 %v1471
    %v1554 = vpop.f32.mrf.mxu0
    %v1555 = vadd.f32 0.0, %v1554
    %v1556 = vpop.f32.mrf.mxu0
    %v1557 = vpop.f32.mrf.mxu0
    %v1558 = vpop.f32.mrf.mxu0
    %1559 = vdwg.mxu0
    %v1562 = vunpack.c.l.b16 %v1451
    %v1563 = vunpack.c.l.b16 %v1452
    %v1564 = vpack.c.b16 %v1563, %v1562
    %vm1566 = vcmask 130048
    %v1568 = vsel %vm1566, %v1470, 0
    %1570 = vmatprep.subr.bf16.mxu0 0
    %1571 = vmatpush1.bf16.msra.mxu0 0
    %1572 = vmatprep.subr.bf16.mxu0 0
    %1573 = vmatpush1.bf16.msra.mxu0 0
    %1574 = vmatprep.subr.bf16.mxu0 0
    %1575 = vmatpush1.bf16.msra.mxu0 0
    %1576 = vmatprep.subr.bf16.mxu0 0
    %1577 = vmatpush1.bf16.msra.mxu0 0
    %1578 = vmatprep.subr.bf16.mxu0 0
    %1579 = vmatpush1.bf16.msra.mxu0 0
    %1580 = vmatprep.subr.bf16.mxu0 0
    %1581 = vmatpush1.bf16.msra.mxu0 0
    %1582 = vmatprep.subr.bf16.mxu0 0
    %1583 = vmatpush1.bf16.msra.mxu0 0
    %1584 = vmatprep.subr.bf16.mxu0 0
    %1585 = vmatpush1.bf16.msra.mxu0 %v1564
    %1586 = vmatprep.subr.bf16.mxu0 0
    %1587 = vmatpush2.bf16.msra.mxu0 0
    %1588 = vmatprep.subr.bf16.mxu0 0
    %1589 = vmatpush2.bf16.msra.mxu0 0
    %1590 = vmatprep.subr.bf16.mxu0 0
    %1591 = vmatpush2.bf16.msra.mxu0 0
    %1592 = vmatprep.subr.bf16.mxu0 0
    %1593 = vmatpush2.bf16.msra.mxu0 0
    %1594 = vmatprep.subr.bf16.mxu0 0
    %1595 = vmatpush2.bf16.msra.mxu0 0
    %1596 = vmatprep.subr.bf16.mxu0 0
    %1597 = vmatpush2.bf16.msra.mxu0 0
    %1598 = vmatprep.subr.bf16.mxu0 0
    %1599 = vmatpush2.bf16.msra.mxu0 0
    %1600 = vmatprep.subr.bf16.mxu0 0
    %1601 = vmatpush2.bf16.msra.mxu0 0
    %1602 = vmatprep.mubr.bf16.mxu0 0
    %1603 = vmatmul.mubr.bf16.gmra.mxu0 %v1568
    %v1604 = vpop.f32.mrf.mxu0
    %v1605 = vadd.f32 %v1555, %v1604
    %v1606 = vpop.f32.mrf.mxu0
    %v1607 = vpop.f32.mrf.mxu0
    %v1608 = vpop.f32.mrf.mxu0
    %1609 = vdwg.mxu0
    %v1610 = vlaneseq
    %v1611 = vshrl.u32 %v1610, 7
    %v1612 = vsub.s32 0, %v1611
    %v1613 = vrot.slane %v1469, %v1612
    %v1614 = vadd.f32 %v1605, %v1613
    %v1615 = vld [vmem:[#allocation2 + $0x340] sm:$0xf]
    %v1616 = vld [vmem:[#allocation2 + $0x344] sm:$0xf]
    %v1617 = vld [vmem:[#allocation2 + $0x348] sm:$0xf]
    %v1618 = vld [vmem:[#allocation2 + $0x34c] sm:$0xf]
    %v1619 = vld [vmem:[#allocation2 + $0x350] sm:$0xf]
    %v1620 = vld [vmem:[#allocation2 + $0x354] sm:$0xf]
    %v1621 = vld [vmem:[#allocation2 + $0x358] sm:$0xf]
    %v1622 = vld [vmem:[#allocation2 + $0x35c] sm:$0xf]
    %v1623 = vld [vmem:[#allocation2 + $0x360] sm:$0xf]
    %v1624 = vld [vmem:[#allocation2 + $0x364] sm:$0xf]
    %v1625 = vld [vmem:[#allocation2 + $0x368] sm:$0xf]
    %v1626 = vld [vmem:[#allocation2 + $0x36c] sm:$0xf]
    %v1627 = vld [vmem:[#allocation2 + $0x370] sm:$0xf]
    %v1628 = vld [vmem:[#allocation2 + $0x374] sm:$0xf]
    %v1629 = vld [vmem:[#allocation2 + $0x378] sm:$0xf]
    %v1630 = vld [vmem:[#allocation2 + $0x37c] sm:$0xf]
    %v1631 = vld [vmem:[%s2 + $0x18] sm:$0x1]
    %v1632 = vpack.c.bf16 %v1614, %v1614
    %v1633 = vlaneseq
    %v1634 = vshrl.u32 %v1633, 7
    %v1635 = vsub.s32 0, %v1634
    %v1636 = vrot.slane %v1631, %v1635
    %v1653 = vunpack.c.l.b16 %v1615
    %v1654 = vunpack.c.l.b16 %v1616
    %v1655 = vunpack.c.l.b16 %v1617
    %v1656 = vunpack.c.l.b16 %v1618
    %v1657 = vunpack.c.l.b16 %v1619
    %v1658 = vunpack.c.l.b16 %v1620
    %v1659 = vunpack.c.l.b16 %v1621
    %v1660 = vunpack.c.l.b16 %v1622
    %v1661 = vunpack.c.l.b16 %v1623
    %v1662 = vunpack.c.l.b16 %v1624
    %v1663 = vunpack.c.l.b16 %v1625
    %v1664 = vunpack.c.l.b16 %v1626
    %v1665 = vunpack.c.l.b16 %v1627
    %v1666 = vunpack.c.l.b16 %v1628
    %v1667 = vunpack.c.l.b16 %v1629
    %v1668 = vunpack.c.l.b16 %v1630
    %v1669 = vpack.c.b16 %v1654, %v1653
    %v1670 = vpack.c.b16 %v1656, %v1655
    %v1671 = vpack.c.b16 %v1658, %v1657
    %v1672 = vpack.c.b16 %v1660, %v1659
    %v1673 = vpack.c.b16 %v1662, %v1661
    %v1674 = vpack.c.b16 %v1664, %v1663
    %v1675 = vpack.c.b16 %v1666, %v1665
    %v1676 = vpack.c.b16 %v1668, %v1667
    %1685 = vmatprep.subr.bf16.mxu0 0
    %1686 = vmatpush1.bf16.msra.mxu0 %v1676
    %1687 = vmatprep.subr.bf16.mxu0 0
    %1688 = vmatpush1.bf16.msra.mxu0 %v1675
    %1689 = vmatprep.subr.bf16.mxu0 0
    %1690 = vmatpush1.bf16.msra.mxu0 %v1674
    %1691 = vmatprep.subr.bf16.mxu0 0
    %1692 = vmatpush1.bf16.msra.mxu0 %v1673
    %1693 = vmatprep.subr.bf16.mxu0 0
    %1694 = vmatpush1.bf16.msra.mxu0 %v1672
    %1695 = vmatprep.subr.bf16.mxu0 0
    %1696 = vmatpush1.bf16.msra.mxu0 %v1671
    %1697 = vmatprep.subr.bf16.mxu0 0
    %1698 = vmatpush1.bf16.msra.mxu0 %v1670
    %1699 = vmatprep.subr.bf16.mxu0 0
    %1700 = vmatpush1.bf16.msra.mxu0 %v1669
    %1701 = vmatprep.subr.bf16.mxu0 0
    %1702 = vmatpush2.bf16.msra.mxu0 0
    %1703 = vmatprep.subr.bf16.mxu0 0
    %1704 = vmatpush2.bf16.msra.mxu0 0
    %1705 = vmatprep.subr.bf16.mxu0 0
    %1706 = vmatpush2.bf16.msra.mxu0 0
    %1707 = vmatprep.subr.bf16.mxu0 0
    %1708 = vmatpush2.bf16.msra.mxu0 0
    %1709 = vmatprep.subr.bf16.mxu0 0
    %1710 = vmatpush2.bf16.msra.mxu0 0
    %1711 = vmatprep.subr.bf16.mxu0 0
    %1712 = vmatpush2.bf16.msra.mxu0 0
    %1713 = vmatprep.subr.bf16.mxu0 0
    %1714 = vmatpush2.bf16.msra.mxu0 0
    %1715 = vmatprep.subr.bf16.mxu0 0
    %1716 = vmatpush2.bf16.msra.mxu0 0
    %1717 = vmatprep.mubr.bf16.mxu0 0
    %1718 = vmatmul.mubr.bf16.gmra.mxu0 %v1632
    %v1719 = vpop.f32.mrf.mxu0
    %v1720 = vadd.f32 %v1636, %v1719
    %v1721 = vpop.f32.mrf.mxu0
    %v1722 = vpop.f32.mrf.mxu0
    %v1723 = vpop.f32.mrf.mxu0
    %1724 = vdwg.mxu0
    %v1725 = vld [vmem:[%s2 + $0x19] sm:$0x1]
    %v1726 = vld [vmem:[%s2 + $0x1a] sm:$0x1]
    %v1727 = vrot.slane %v1720, 4
    %v1728 = vadd.f32 %v1720, %v1727
    %v1729 = vrot.slane %v1728, 2
    %v1730 = vadd.f32 %v1728, %v1729
    %v1731 = vrot.slane %v1730, 1
    %v1732 = vadd.f32 %v1730, %v1731
    %v1733 = vmul.f32 %v1732, %v259
    %v1734 = vsub.f32 %v1720, %v1733
    %v1735 = vmul.f32 %v1734, %v1734
    %v1736 = vrot.slane %v1735, 4
    %v1737 = vadd.f32 %v1735, %v1736
    %v1738 = vrot.slane %v1737, 2
    %v1739 = vadd.f32 %v1737, %v1738
    %v1740 = vrot.slane %v1739, 1
    %v1741 = vadd.f32 %v1739, %v1740
    %v1742 = vmul.f32 %v1741, %v259
    %v1743 = vadd.f32 %v1742, 1e-05
    %v1744 = vrsqrt.pop %v1743
    %v1745 = vmul.f32 %v1725, %v1744
    %v1746 = vlaneseq
    %v1747 = vshrl.u32 %v1746, 7
    %v1748 = vsub.s32 0, %v1747
    %v1749 = vrot.slane %v1745, %v1748
    %v1750 = vmul.f32 %v1734, %v1749
    %v1751 = vlaneseq
    %v1752 = vshrl.u32 %v1751, 7
    %v1753 = vsub.s32 0, %v1752
    %v1754 = vrot.slane %v1726, %v1753
    %v1755 = vadd.f32 %v1750, %v1754
    %v1756 = vmax.f32 %v1755, 0.0
    %v1757 = vld [vmem:[#allocation2 + $0x380] sm:$0xf]
    %v1758 = vld [vmem:[#allocation2 + $0x384] sm:$0xf]
    %v1759 = vld [vmem:[#allocation2 + $0x388] sm:$0xf]
    %v1760 = vld [vmem:[#allocation2 + $0x38c] sm:$0xf]
    %v1761 = vld [vmem:[#allocation2 + $0x390] sm:$0xf]
    %v1762 = vld [vmem:[#allocation2 + $0x394] sm:$0xf]
    %v1763 = vld [vmem:[#allocation2 + $0x398] sm:$0xf]
    %v1764 = vld [vmem:[#allocation2 + $0x39c] sm:$0xf]
    %v1765 = vld [vmem:[#allocation2 + $0x3a0] sm:$0xf]
    %v1766 = vld [vmem:[#allocation2 + $0x3a4] sm:$0xf]
    %v1767 = vld [vmem:[#allocation2 + $0x3a8] sm:$0xf]
    %v1768 = vld [vmem:[#allocation2 + $0x3ac] sm:$0xf]
    %v1769 = vld [vmem:[#allocation2 + $0x3b0] sm:$0xf]
    %v1770 = vld [vmem:[#allocation2 + $0x3b4] sm:$0xf]
    %v1771 = vld [vmem:[#allocation2 + $0x3b8] sm:$0xf]
    %v1772 = vld [vmem:[#allocation2 + $0x3bc] sm:$0xf]
    %v1773 = vld [vmem:[%s2 + $0x1b] sm:$0x1]
    %v1774 = vpack.c.bf16 %v1756, %v1756
    %v1775 = vlaneseq
    %v1776 = vshrl.u32 %v1775, 7
    %v1777 = vsub.s32 0, %v1776
    %v1778 = vrot.slane %v1773, %v1777
    %v1795 = vunpack.c.l.b16 %v1757
    %v1796 = vunpack.c.l.b16 %v1758
    %v1797 = vunpack.c.l.b16 %v1759
    %v1798 = vunpack.c.l.b16 %v1760
    %v1799 = vunpack.c.l.b16 %v1761
    %v1800 = vunpack.c.l.b16 %v1762
    %v1801 = vunpack.c.l.b16 %v1763
    %v1802 = vunpack.c.l.b16 %v1764
    %v1803 = vunpack.c.l.b16 %v1765
    %v1804 = vunpack.c.l.b16 %v1766
    %v1805 = vunpack.c.l.b16 %v1767
    %v1806 = vunpack.c.l.b16 %v1768
    %v1807 = vunpack.c.l.b16 %v1769
    %v1808 = vunpack.c.l.b16 %v1770
    %v1809 = vunpack.c.l.b16 %v1771
    %v1810 = vunpack.c.l.b16 %v1772
    %v1811 = vpack.c.b16 %v1796, %v1795
    %v1812 = vpack.c.b16 %v1798, %v1797
    %v1813 = vpack.c.b16 %v1800, %v1799
    %v1814 = vpack.c.b16 %v1802, %v1801
    %v1815 = vpack.c.b16 %v1804, %v1803
    %v1816 = vpack.c.b16 %v1806, %v1805
    %v1817 = vpack.c.b16 %v1808, %v1807
    %v1818 = vpack.c.b16 %v1810, %v1809
    %1827 = vmatprep.subr.bf16.mxu0 0
    %1828 = vmatpush1.bf16.msra.mxu0 %v1818
    %1829 = vmatprep.subr.bf16.mxu0 0
    %1830 = vmatpush1.bf16.msra.mxu0 %v1817
    %1831 = vmatprep.subr.bf16.mxu0 0
    %1832 = vmatpush1.bf16.msra.mxu0 %v1816
    %1833 = vmatprep.subr.bf16.mxu0 0
    %1834 = vmatpush1.bf16.msra.mxu0 %v1815
    %1835 = vmatprep.subr.bf16.mxu0 0
    %1836 = vmatpush1.bf16.msra.mxu0 %v1814
    %1837 = vmatprep.subr.bf16.mxu0 0
    %1838 = vmatpush1.bf16.msra.mxu0 %v1813
    %1839 = vmatprep.subr.bf16.mxu0 0
    %1840 = vmatpush1.bf16.msra.mxu0 %v1812
    %1841 = vmatprep.subr.bf16.mxu0 0
    %1842 = vmatpush1.bf16.msra.mxu0 %v1811
    %1843 = vmatprep.subr.bf16.mxu0 0
    %1844 = vmatpush2.bf16.msra.mxu0 0
    %1845 = vmatprep.subr.bf16.mxu0 0
    %1846 = vmatpush2.bf16.msra.mxu0 0
    %1847 = vmatprep.subr.bf16.mxu0 0
    %1848 = vmatpush2.bf16.msra.mxu0 0
    %1849 = vmatprep.subr.bf16.mxu0 0
    %1850 = vmatpush2.bf16.msra.mxu0 0
    %1851 = vmatprep.subr.bf16.mxu0 0
    %1852 = vmatpush2.bf16.msra.mxu0 0
    %1853 = vmatprep.subr.bf16.mxu0 0
    %1854 = vmatpush2.bf16.msra.mxu0 0
    %1855 = vmatprep.subr.bf16.mxu0 0
    %1856 = vmatpush2.bf16.msra.mxu0 0
    %1857 = vmatprep.subr.bf16.mxu0 0
    %1858 = vmatpush2.bf16.msra.mxu0 0
    %1859 = vmatprep.mubr.bf16.mxu0 0
    %1860 = vmatmul.mubr.bf16.gmra.mxu0 %v1774
    %v1861 = vpop.f32.mrf.mxu0
    %v1862 = vadd.f32 %v1778, %v1861
    %v1863 = vpop.f32.mrf.mxu0
    %v1864 = vpop.f32.mrf.mxu0
    %v1865 = vpop.f32.mrf.mxu0
    %1866 = vdwg.mxu0
    %v1867 = vld [vmem:[%s2 + $0x1c] sm:$0x1]
    %v1868 = vld [vmem:[%s2 + $0x1d] sm:$0x1]
    %v1869 = vrot.slane %v1862, 4
    %v1870 = vadd.f32 %v1862, %v1869
    %v1871 = vrot.slane %v1870, 2
    %v1872 = vadd.f32 %v1870, %v1871
    %v1873 = vrot.slane %v1872, 1
    %v1874 = vadd.f32 %v1872, %v1873
    %v1875 = vmul.f32 %v1874, %v259
    %v1876 = vsub.f32 %v1862, %v1875
    %v1877 = vmul.f32 %v1876, %v1876
    %v1878 = vrot.slane %v1877, 4
    %v1879 = vadd.f32 %v1877, %v1878
    %v1880 = vrot.slane %v1879, 2
    %v1881 = vadd.f32 %v1879, %v1880
    %v1882 = vrot.slane %v1881, 1
    %v1883 = vadd.f32 %v1881, %v1882
    %v1884 = vmul.f32 %v1883, %v259
    %v1885 = vadd.f32 %v1884, 1e-05
    %v1886 = vrsqrt.pop %v1885
    %v1887 = vmul.f32 %v1867, %v1886
    %v1888 = vlaneseq
    %v1889 = vshrl.u32 %v1888, 7
    %v1890 = vsub.s32 0, %v1889
    %v1891 = vrot.slane %v1887, %v1890
    %v1892 = vmul.f32 %v1876, %v1891
    %v1893 = vlaneseq
    %v1894 = vshrl.u32 %v1893, 7
    %v1895 = vsub.s32 0, %v1894
    %v1896 = vrot.slane %v1868, %v1895
    %v1897 = vadd.f32 %v1892, %v1896
    %v1898 = vadd.f32 %v1897, %v1614
    %v1899 = vmax.f32 %v1898, 0.0
    %v1900 = vld [vmem:[#allocation2 + $0x3c0] sm:$0xf]
    %v1901 = vld [vmem:[#allocation2 + $0x3c4] sm:$0xf]
    %v1902 = vld [vmem:[#allocation2 + $0x3c8] sm:$0xf]
    %v1903 = vld [vmem:[#allocation2 + $0x3cc] sm:$0xf]
    %v1904 = vld [vmem:[#allocation2 + $0x3d0] sm:$0xf]
    %v1905 = vld [vmem:[#allocation2 + $0x3d4] sm:$0xf]
    %v1906 = vld [vmem:[#allocation2 + $0x3d8] sm:$0xf]
    %v1907 = vld [vmem:[#allocation2 + $0x3dc] sm:$0xf]
    %v1908 = vld [vmem:[#allocation2 + $0x3e0] sm:$0xf]
    %v1909 = vld [vmem:[#allocation2 + $0x3e4] sm:$0xf]
    %v1910 = vld [vmem:[#allocation2 + $0x3e8] sm:$0xf]
    %v1911 = vld [vmem:[#allocation2 + $0x3ec] sm:$0xf]
    %v1912 = vld [vmem:[#allocation2 + $0x3f0] sm:$0xf]
    %v1913 = vld [vmem:[#allocation2 + $0x3f4] sm:$0xf]
    %v1914 = vld [vmem:[#allocation2 + $0x3f8] sm:$0xf]
    %v1915 = vld [vmem:[#allocation2 + $0x3fc] sm:$0xf]
    %v1916 = vld [vmem:[%s2 + $0x1e] sm:$0x1]
    %v1917 = vpack.c.bf16 %v1899, %v1899
    %v1918 = vlaneseq
    %v1919 = vshrl.u32 %v1918, 7
    %v1920 = vsub.s32 0, %v1919
    %v1921 = vrot.slane %v1916, %v1920
    %v1938 = vunpack.c.l.b16 %v1900
    %v1939 = vunpack.c.l.b16 %v1901
    %v1940 = vunpack.c.l.b16 %v1902
    %v1941 = vunpack.c.l.b16 %v1903
    %v1942 = vunpack.c.l.b16 %v1904
    %v1943 = vunpack.c.l.b16 %v1905
    %v1944 = vunpack.c.l.b16 %v1906
    %v1945 = vunpack.c.l.b16 %v1907
    %v1946 = vunpack.c.l.b16 %v1908
    %v1947 = vunpack.c.l.b16 %v1909
    %v1948 = vunpack.c.l.b16 %v1910
    %v1949 = vunpack.c.l.b16 %v1911
    %v1950 = vunpack.c.l.b16 %v1912
    %v1951 = vunpack.c.l.b16 %v1913
    %v1952 = vunpack.c.l.b16 %v1914
    %v1953 = vunpack.c.l.b16 %v1915
    %v1954 = vpack.c.b16 %v1939, %v1938
    %v1955 = vpack.c.b16 %v1941, %v1940
    %v1956 = vpack.c.b16 %v1943, %v1942
    %v1957 = vpack.c.b16 %v1945, %v1944
    %v1958 = vpack.c.b16 %v1947, %v1946
    %v1959 = vpack.c.b16 %v1949, %v1948
    %v1960 = vpack.c.b16 %v1951, %v1950
    %v1961 = vpack.c.b16 %v1953, %v1952
    %1970 = vmatprep.subr.bf16.mxu0 0
    %1971 = vmatpush1.bf16.msra.mxu0 %v1961
    %1972 = vmatprep.subr.bf16.mxu0 0
    %1973 = vmatpush1.bf16.msra.mxu0 %v1960
    %1974 = vmatprep.subr.bf16.mxu0 0
    %1975 = vmatpush1.bf16.msra.mxu0 %v1959
    %1976 = vmatprep.subr.bf16.mxu0 0
    %1977 = vmatpush1.bf16.msra.mxu0 %v1958
    %1978 = vmatprep.subr.bf16.mxu0 0
    %1979 = vmatpush1.bf16.msra.mxu0 %v1957
    %1980 = vmatprep.subr.bf16.mxu0 0
    %1981 = vmatpush1.bf16.msra.mxu0 %v1956
    %1982 = vmatprep.subr.bf16.mxu0 0
    %1983 = vmatpush1.bf16.msra.mxu0 %v1955
    %1984 = vmatprep.subr.bf16.mxu0 0
    %1985 = vmatpush1.bf16.msra.mxu0 %v1954
    %1986 = vmatprep.subr.bf16.mxu0 0
    %1987 = vmatpush2.bf16.msra.mxu0 0
    %1988 = vmatprep.subr.bf16.mxu0 0
    %1989 = vmatpush2.bf16.msra.mxu0 0
    %1990 = vmatprep.subr.bf16.mxu0 0
    %1991 = vmatpush2.bf16.msra.mxu0 0
    %1992 = vmatprep.subr.bf16.mxu0 0
    %1993 = vmatpush2.bf16.msra.mxu0 0
    %1994 = vmatprep.subr.bf16.mxu0 0
    %1995 = vmatpush2.bf16.msra.mxu0 0
    %1996 = vmatprep.subr.bf16.mxu0 0
    %1997 = vmatpush2.bf16.msra.mxu0 0
    %1998 = vmatprep.subr.bf16.mxu0 0
    %1999 = vmatpush2.bf16.msra.mxu0 0
    %2000 = vmatprep.subr.bf16.mxu0 0
    %2001 = vmatpush2.bf16.msra.mxu0 0
    %2002 = vmatprep.mubr.bf16.mxu0 0
    %2003 = vmatmul.mubr.bf16.gmra.mxu0 %v1917
    %v2004 = vpop.f32.mrf.mxu0
    %v2005 = vadd.f32 %v1921, %v2004
    %v2006 = vpop.f32.mrf.mxu0
    %v2007 = vpop.f32.mrf.mxu0
    %v2008 = vpop.f32.mrf.mxu0
    %2009 = vdwg.mxu0
    %v2010 = vld [vmem:[#allocation2 + $0x400] sm:$0xf]
    %v2011 = vld [vmem:[#allocation2 + $0x404] sm:$0xf]
    %v2012 = vld [vmem:[#allocation2 + $0x408] sm:$0xf]
    %v2013 = vld [vmem:[#allocation2 + $0x40c] sm:$0xf]
    %v2014 = vld [vmem:[#allocation2 + $0x410] sm:$0xf]
    %v2015 = vld [vmem:[#allocation2 + $0x414] sm:$0xf]
    %v2016 = vld [vmem:[#allocation2 + $0x418] sm:$0xf]
    %v2017 = vld [vmem:[#allocation2 + $0x41c] sm:$0xf]
    %v2018 = vld [vmem:[#allocation2 + $0x420] sm:$0xf]
    %v2019 = vld [vmem:[#allocation2 + $0x424] sm:$0xf]
    %v2020 = vld [vmem:[#allocation2 + $0x428] sm:$0xf]
    %v2021 = vld [vmem:[#allocation2 + $0x42c] sm:$0xf]
    %v2022 = vld [vmem:[#allocation2 + $0x430] sm:$0xf]
    %v2023 = vld [vmem:[#allocation2 + $0x434] sm:$0xf]
    %v2024 = vld [vmem:[#allocation2 + $0x438] sm:$0xf]
    %v2025 = vld [vmem:[#allocation2 + $0x43c] sm:$0xf]
    %v2026 = vld [vmem:[%s2 + $0x1f] sm:$0x1]
    %v2027 = vpack.c.bf16 %v2005, %v2005
    %v2028 = vlaneseq
    %v2029 = vshrl.u32 %v2028, 7
    %v2030 = vsub.s32 0, %v2029
    %v2031 = vrot.slane %v2026, %v2030
    %v2048 = vunpack.c.l.b16 %v2010
    %v2049 = vunpack.c.l.b16 %v2011
    %v2050 = vunpack.c.l.b16 %v2012
    %v2051 = vunpack.c.l.b16 %v2013
    %v2052 = vunpack.c.l.b16 %v2014
    %v2053 = vunpack.c.l.b16 %v2015
    %v2054 = vunpack.c.l.b16 %v2016
    %v2055 = vunpack.c.l.b16 %v2017
    %v2056 = vunpack.c.l.b16 %v2018
    %v2057 = vunpack.c.l.b16 %v2019
    %v2058 = vunpack.c.l.b16 %v2020
    %v2059 = vunpack.c.l.b16 %v2021
    %v2060 = vunpack.c.l.b16 %v2022
    %v2061 = vunpack.c.l.b16 %v2023
    %v2062 = vunpack.c.l.b16 %v2024
    %v2063 = vunpack.c.l.b16 %v2025
    %v2064 = vpack.c.b16 %v2049, %v2048
    %v2065 = vpack.c.b16 %v2051, %v2050
    %v2066 = vpack.c.b16 %v2053, %v2052
    %v2067 = vpack.c.b16 %v2055, %v2054
    %v2068 = vpack.c.b16 %v2057, %v2056
    %v2069 = vpack.c.b16 %v2059, %v2058
    %v2070 = vpack.c.b16 %v2061, %v2060
    %v2071 = vpack.c.b16 %v2063, %v2062
    %2080 = vmatprep.subr.bf16.mxu0 0
    %2081 = vmatpush1.bf16.msra.mxu0 %v2071
    %2082 = vmatprep.subr.bf16.mxu0 0
    %2083 = vmatpush1.bf16.msra.mxu0 %v2070
    %2084 = vmatprep.subr.bf16.mxu0 0
    %2085 = vmatpush1.bf16.msra.mxu0 %v2069
    %2086 = vmatprep.subr.bf16.mxu0 0
    %2087 = vmatpush1.bf16.msra.mxu0 %v2068
    %2088 = vmatprep.subr.bf16.mxu0 0
    %2089 = vmatpush1.bf16.msra.mxu0 %v2067
    %2090 = vmatprep.subr.bf16.mxu0 0
    %2091 = vmatpush1.bf16.msra.mxu0 %v2066
    %2092 = vmatprep.subr.bf16.mxu0 0
    %2093 = vmatpush1.bf16.msra.mxu0 %v2065
    %2094 = vmatprep.subr.bf16.mxu0 0
    %2095 = vmatpush1.bf16.msra.mxu0 %v2064
    %2096 = vmatprep.subr.bf16.mxu0 0
    %2097 = vmatpush2.bf16.msra.mxu0 0
    %2098 = vmatprep.subr.bf16.mxu0 0
    %2099 = vmatpush2.bf16.msra.mxu0 0
    %2100 = vmatprep.subr.bf16.mxu0 0
    %2101 = vmatpush2.bf16.msra.mxu0 0
    %2102 = vmatprep.subr.bf16.mxu0 0
    %2103 = vmatpush2.bf16.msra.mxu0 0
    %2104 = vmatprep.subr.bf16.mxu0 0
    %2105 = vmatpush2.bf16.msra.mxu0 0
    %2106 = vmatprep.subr.bf16.mxu0 0
    %2107 = vmatpush2.bf16.msra.mxu0 0
    %2108 = vmatprep.subr.bf16.mxu0 0
    %2109 = vmatpush2.bf16.msra.mxu0 0
    %2110 = vmatprep.subr.bf16.mxu0 0
    %2111 = vmatpush2.bf16.msra.mxu0 0
    %2112 = vmatprep.mubr.bf16.mxu0 0
    %2113 = vmatmul.mubr.bf16.gmra.mxu0 %v2027
    %v2114 = vpop.f32.mrf.mxu0
    %v2115 = vadd.f32 %v2031, %v2114
    %v2116 = vpop.f32.mrf.mxu0
    %v2117 = vpop.f32.mrf.mxu0
    %v2118 = vpop.f32.mrf.mxu0
    %2119 = vdwg.mxu0
    %v2120 = vld [vmem:[%s2 + $0x20] sm:$0x1]
    %v2121 = vld [vmem:[%s2 + $0x21] sm:$0x1]
    %v2122 = vrot.slane %v2115, 4
    %v2123 = vadd.f32 %v2115, %v2122
    %v2124 = vrot.slane %v2123, 2
    %v2125 = vadd.f32 %v2123, %v2124
    %v2126 = vrot.slane %v2125, 1
    %v2127 = vadd.f32 %v2125, %v2126
    %v2128 = vmul.f32 %v2127, %v259
    %v2129 = vsub.f32 %v2115, %v2128
    %v2130 = vmul.f32 %v2129, %v2129
    %v2131 = vrot.slane %v2130, 4
    %v2132 = vadd.f32 %v2130, %v2131
    %v2133 = vrot.slane %v2132, 2
    %v2134 = vadd.f32 %v2132, %v2133
    %v2135 = vrot.slane %v2134, 1
    %v2136 = vadd.f32 %v2134, %v2135
    %v2137 = vmul.f32 %v2136, %v259
    %v2138 = vadd.f32 %v2137, 1e-05
    %v2139 = vrsqrt.pop %v2138
    %v2140 = vmul.f32 %v2120, %v2139
    %v2141 = vlaneseq
    %v2142 = vshrl.u32 %v2141, 7
    %v2143 = vsub.s32 0, %v2142
    %v2144 = vrot.slane %v2140, %v2143
    %v2145 = vmul.f32 %v2129, %v2144
    %v2146 = vlaneseq
    %v2147 = vshrl.u32 %v2146, 7
    %v2148 = vsub.s32 0, %v2147
    %v2149 = vrot.slane %v2121, %v2148
    %v2150 = vadd.f32 %v2145, %v2149
    %v2151 = vmax.f32 %v2150, 0.0
    %v2152 = vld [vmem:[#allocation2 + $0x440] sm:$0xf]
    %v2153 = vld [vmem:[#allocation2 + $0x444] sm:$0xf]
    %v2154 = vld [vmem:[#allocation2 + $0x448] sm:$0xf]
    %v2155 = vld [vmem:[#allocation2 + $0x44c] sm:$0xf]
    %v2156 = vld [vmem:[#allocation2 + $0x450] sm:$0xf]
    %v2157 = vld [vmem:[#allocation2 + $0x454] sm:$0xf]
    %v2158 = vld [vmem:[#allocation2 + $0x458] sm:$0xf]
    %v2159 = vld [vmem:[#allocation2 + $0x45c] sm:$0xf]
    %v2160 = vld [vmem:[#allocation2 + $0x460] sm:$0xf]
    %v2161 = vld [vmem:[#allocation2 + $0x464] sm:$0xf]
    %v2162 = vld [vmem:[#allocation2 + $0x468] sm:$0xf]
    %v2163 = vld [vmem:[#allocation2 + $0x46c] sm:$0xf]
    %v2164 = vld [vmem:[#allocation2 + $0x470] sm:$0xf]
    %v2165 = vld [vmem:[#allocation2 + $0x474] sm:$0xf]
    %v2166 = vld [vmem:[#allocation2 + $0x478] sm:$0xf]
    %v2167 = vld [vmem:[#allocation2 + $0x47c] sm:$0xf]
    %v2168 = vld [vmem:[%s2 + $0x22] sm:$0x1]
    %v2169 = vpack.c.bf16 %v2151, %v2151
    %v2170 = vlaneseq
    %v2171 = vshrl.u32 %v2170, 7
    %v2172 = vsub.s32 0, %v2171
    %v2173 = vrot.slane %v2168, %v2172
    %v2190 = vunpack.c.l.b16 %v2152
    %v2191 = vunpack.c.l.b16 %v2153
    %v2192 = vunpack.c.l.b16 %v2154
    %v2193 = vunpack.c.l.b16 %v2155
    %v2194 = vunpack.c.l.b16 %v2156
    %v2195 = vunpack.c.l.b16 %v2157
    %v2196 = vunpack.c.l.b16 %v2158
    %v2197 = vunpack.c.l.b16 %v2159
    %v2198 = vunpack.c.l.b16 %v2160
    %v2199 = vunpack.c.l.b16 %v2161
    %v2200 = vunpack.c.l.b16 %v2162
    %v2201 = vunpack.c.l.b16 %v2163
    %v2202 = vunpack.c.l.b16 %v2164
    %v2203 = vunpack.c.l.b16 %v2165
    %v2204 = vunpack.c.l.b16 %v2166
    %v2205 = vunpack.c.l.b16 %v2167
    %v2206 = vpack.c.b16 %v2191, %v2190
    %v2207 = vpack.c.b16 %v2193, %v2192
    %v2208 = vpack.c.b16 %v2195, %v2194
    %v2209 = vpack.c.b16 %v2197, %v2196
    %v2210 = vpack.c.b16 %v2199, %v2198
    %v2211 = vpack.c.b16 %v2201, %v2200
    %v2212 = vpack.c.b16 %v2203, %v2202
    %v2213 = vpack.c.b16 %v2205, %v2204
    %2222 = vmatprep.subr.bf16.mxu0 0
    %2223 = vmatpush1.bf16.msra.mxu0 %v2213
    %2224 = vmatprep.subr.bf16.mxu0 0
    %2225 = vmatpush1.bf16.msra.mxu0 %v2212
    %2226 = vmatprep.subr.bf16.mxu0 0
    %2227 = vmatpush1.bf16.msra.mxu0 %v2211
    %2228 = vmatprep.subr.bf16.mxu0 0
    %2229 = vmatpush1.bf16.msra.mxu0 %v2210
    %2230 = vmatprep.subr.bf16.mxu0 0
    %2231 = vmatpush1.bf16.msra.mxu0 %v2209
    %2232 = vmatprep.subr.bf16.mxu0 0
    %2233 = vmatpush1.bf16.msra.mxu0 %v2208
    %2234 = vmatprep.subr.bf16.mxu0 0
    %2235 = vmatpush1.bf16.msra.mxu0 %v2207
    %2236 = vmatprep.subr.bf16.mxu0 0
    %2237 = vmatpush1.bf16.msra.mxu0 %v2206
    %2238 = vmatprep.subr.bf16.mxu0 0
    %2239 = vmatpush2.bf16.msra.mxu0 0
    %2240 = vmatprep.subr.bf16.mxu0 0
    %2241 = vmatpush2.bf16.msra.mxu0 0
    %2242 = vmatprep.subr.bf16.mxu0 0
    %2243 = vmatpush2.bf16.msra.mxu0 0
    %2244 = vmatprep.subr.bf16.mxu0 0
    %2245 = vmatpush2.bf16.msra.mxu0 0
    %2246 = vmatprep.subr.bf16.mxu0 0
    %2247 = vmatpush2.bf16.msra.mxu0 0
    %2248 = vmatprep.subr.bf16.mxu0 0
    %2249 = vmatpush2.bf16.msra.mxu0 0
    %2250 = vmatprep.subr.bf16.mxu0 0
    %2251 = vmatpush2.bf16.msra.mxu0 0
    %2252 = vmatprep.subr.bf16.mxu0 0
    %2253 = vmatpush2.bf16.msra.mxu0 0
    %2254 = vmatprep.mubr.bf16.mxu0 0
    %2255 = vmatmul.mubr.bf16.gmra.mxu0 %v2169
    %v2256 = vpop.f32.mrf.mxu0
    %v2257 = vadd.f32 %v2173, %v2256
    %v2258 = vpop.f32.mrf.mxu0
    %v2259 = vpop.f32.mrf.mxu0
    %v2260 = vpop.f32.mrf.mxu0
    %2261 = vdwg.mxu0
    %v2262 = vld [vmem:[%s2 + $0x23] sm:$0x1]
    %v2263 = vld [vmem:[%s2 + $0x24] sm:$0x1]
    %v2264 = vrot.slane %v2257, 4
    %v2265 = vadd.f32 %v2257, %v2264
    %v2266 = vrot.slane %v2265, 2
    %v2267 = vadd.f32 %v2265, %v2266
    %v2268 = vrot.slane %v2267, 1
    %v2269 = vadd.f32 %v2267, %v2268
    %v2270 = vmul.f32 %v2269, %v259
    %v2271 = vsub.f32 %v2257, %v2270
    %v2272 = vmul.f32 %v2271, %v2271
    %v2273 = vrot.slane %v2272, 4
    %v2274 = vadd.f32 %v2272, %v2273
    %v2275 = vrot.slane %v2274, 2
    %v2276 = vadd.f32 %v2274, %v2275
    %v2277 = vrot.slane %v2276, 1
    %v2278 = vadd.f32 %v2276, %v2277
    %v2279 = vmul.f32 %v2278, %v259
    %v2280 = vadd.f32 %v2279, 1e-05
    %v2281 = vrsqrt.pop %v2280
    %v2282 = vmul.f32 %v2262, %v2281
    %v2283 = vlaneseq
    %v2284 = vshrl.u32 %v2283, 7
    %v2285 = vsub.s32 0, %v2284
    %v2286 = vrot.slane %v2282, %v2285
    %v2287 = vmul.f32 %v2271, %v2286
    %v2288 = vlaneseq
    %v2289 = vshrl.u32 %v2288, 7
    %v2290 = vsub.s32 0, %v2289
    %v2291 = vrot.slane %v2263, %v2290
    %v2292 = vadd.f32 %v2287, %v2291
    %v2293 = vadd.f32 %v2292, %v2005
    %v2294 = vmax.f32 %v2293, 0.0
    %v2295 = vld [vmem:[#allocation2 + $0x480] sm:$0xf]
    %v2296 = vld [vmem:[#allocation2 + $0x484] sm:$0xf]
    %v2297 = vld [vmem:[#allocation2 + $0x488] sm:$0xf]
    %v2298 = vld [vmem:[#allocation2 + $0x48c] sm:$0xf]
    %v2299 = vld [vmem:[#allocation2 + $0x490] sm:$0xf]
    %v2300 = vld [vmem:[#allocation2 + $0x494] sm:$0xf]
    %v2301 = vld [vmem:[#allocation2 + $0x498] sm:$0xf]
    %v2302 = vld [vmem:[#allocation2 + $0x49c] sm:$0xf]
    %v2303 = vld [vmem:[#allocation2 + $0x4a0] sm:$0xf]
    %v2304 = vld [vmem:[#allocation2 + $0x4a4] sm:$0xf]
    %v2305 = vld [vmem:[#allocation2 + $0x4a8] sm:$0xf]
    %v2306 = vld [vmem:[#allocation2 + $0x4ac] sm:$0xf]
    %v2307 = vld [vmem:[#allocation2 + $0x4b0] sm:$0xf]
    %v2308 = vld [vmem:[#allocation2 + $0x4b4] sm:$0xf]
    %v2309 = vld [vmem:[#allocation2 + $0x4b8] sm:$0xf]
    %v2310 = vld [vmem:[#allocation2 + $0x4bc] sm:$0xf]
    %v2311 = vld [vmem:[%s2 + $0x25] sm:$0x1]
    %v2312 = vpack.c.bf16 %v2294, %v2294
    %v2313 = vlaneseq
    %v2314 = vshrl.u32 %v2313, 7
    %v2315 = vsub.s32 0, %v2314
    %v2316 = vrot.slane %v2311, %v2315
    %v2333 = vunpack.c.l.b16 %v2295
    %v2334 = vunpack.c.l.b16 %v2296
    %v2335 = vunpack.c.l.b16 %v2297
    %v2336 = vunpack.c.l.b16 %v2298
    %v2337 = vunpack.c.l.b16 %v2299
    %v2338 = vunpack.c.l.b16 %v2300
    %v2339 = vunpack.c.l.b16 %v2301
    %v2340 = vunpack.c.l.b16 %v2302
    %v2341 = vunpack.c.l.b16 %v2303
    %v2342 = vunpack.c.l.b16 %v2304
    %v2343 = vunpack.c.l.b16 %v2305
    %v2344 = vunpack.c.l.b16 %v2306
    %v2345 = vunpack.c.l.b16 %v2307
    %v2346 = vunpack.c.l.b16 %v2308
    %v2347 = vunpack.c.l.b16 %v2309
    %v2348 = vunpack.c.l.b16 %v2310
    %v2349 = vpack.c.b16 %v2334, %v2333
    %v2350 = vpack.c.b16 %v2336, %v2335
    %v2351 = vpack.c.b16 %v2338, %v2337
    %v2352 = vpack.c.b16 %v2340, %v2339
    %v2353 = vpack.c.b16 %v2342, %v2341
    %v2354 = vpack.c.b16 %v2344, %v2343
    %v2355 = vpack.c.b16 %v2346, %v2345
    %v2356 = vpack.c.b16 %v2348, %v2347
    %2365 = vmatprep.subr.bf16.mxu0 0
    %2366 = vmatpush1.bf16.msra.mxu0 %v2356
    %2367 = vmatprep.subr.bf16.mxu0 0
    %2368 = vmatpush1.bf16.msra.mxu0 %v2355
    %2369 = vmatprep.subr.bf16.mxu0 0
    %2370 = vmatpush1.bf16.msra.mxu0 %v2354
    %2371 = vmatprep.subr.bf16.mxu0 0
    %2372 = vmatpush1.bf16.msra.mxu0 %v2353
    %2373 = vmatprep.subr.bf16.mxu0 0
    %2374 = vmatpush1.bf16.msra.mxu0 %v2352
    %2375 = vmatprep.subr.bf16.mxu0 0
    %2376 = vmatpush1.bf16.msra.mxu0 %v2351
    %2377 = vmatprep.subr.bf16.mxu0 0
    %2378 = vmatpush1.bf16.msra.mxu0 %v2350
    %2379 = vmatprep.subr.bf16.mxu0 0
    %2380 = vmatpush1.bf16.msra.mxu0 %v2349
    %2381 = vmatprep.subr.bf16.mxu0 0
    %2382 = vmatpush2.bf16.msra.mxu0 0
    %2383 = vmatprep.subr.bf16.mxu0 0
    %2384 = vmatpush2.bf16.msra.mxu0 0
    %2385 = vmatprep.subr.bf16.mxu0 0
    %2386 = vmatpush2.bf16.msra.mxu0 0
    %2387 = vmatprep.subr.bf16.mxu0 0
    %2388 = vmatpush2.bf16.msra.mxu0 0
    %2389 = vmatprep.subr.bf16.mxu0 0
    %2390 = vmatpush2.bf16.msra.mxu0 0
    %2391 = vmatprep.subr.bf16.mxu0 0
    %2392 = vmatpush2.bf16.msra.mxu0 0
    %2393 = vmatprep.subr.bf16.mxu0 0
    %2394 = vmatpush2.bf16.msra.mxu0 0
    %2395 = vmatprep.subr.bf16.mxu0 0
    %2396 = vmatpush2.bf16.msra.mxu0 0
    %2397 = vmatprep.mubr.bf16.mxu0 0
    %2398 = vmatmul.mubr.bf16.gmra.mxu0 %v2312
    %v2399 = vpop.f32.mrf.mxu0
    %v2400 = vadd.f32 %v2316, %v2399
    %v2401 = vpop.f32.mrf.mxu0
    %v2402 = vpop.f32.mrf.mxu0
    %v2403 = vpop.f32.mrf.mxu0
    %2404 = vdwg.mxu0
    %v2405 = vld [vmem:[#allocation2 + $0x4c0] sm:$0xf]
    %v2406 = vld [vmem:[#allocation2 + $0x4c4] sm:$0xf]
    %v2407 = vld [vmem:[#allocation2 + $0x4c8] sm:$0xf]
    %v2408 = vld [vmem:[#allocation2 + $0x4cc] sm:$0xf]
    %v2409 = vld [vmem:[#allocation2 + $0x4d0] sm:$0xf]
    %v2410 = vld [vmem:[#allocation2 + $0x4d4] sm:$0xf]
    %v2411 = vld [vmem:[#allocation2 + $0x4d8] sm:$0xf]
    %v2412 = vld [vmem:[#allocation2 + $0x4dc] sm:$0xf]
    %v2413 = vld [vmem:[#allocation2 + $0x4e0] sm:$0xf]
    %v2414 = vld [vmem:[#allocation2 + $0x4e4] sm:$0xf]
    %v2415 = vld [vmem:[#allocation2 + $0x4e8] sm:$0xf]
    %v2416 = vld [vmem:[#allocation2 + $0x4ec] sm:$0xf]
    %v2417 = vld [vmem:[#allocation2 + $0x4f0] sm:$0xf]
    %v2418 = vld [vmem:[#allocation2 + $0x4f4] sm:$0xf]
    %v2419 = vld [vmem:[#allocation2 + $0x4f8] sm:$0xf]
    %v2420 = vld [vmem:[#allocation2 + $0x4fc] sm:$0xf]
    %v2421 = vld [vmem:[%s2 + $0x26] sm:$0x1]
    %v2422 = vpack.c.bf16 %v2400, %v2400
    %v2423 = vlaneseq
    %v2424 = vshrl.u32 %v2423, 7
    %v2425 = vsub.s32 0, %v2424
    %v2426 = vrot.slane %v2421, %v2425
    %v2443 = vunpack.c.l.b16 %v2405
    %v2444 = vunpack.c.l.b16 %v2406
    %v2445 = vunpack.c.l.b16 %v2407
    %v2446 = vunpack.c.l.b16 %v2408
    %v2447 = vunpack.c.l.b16 %v2409
    %v2448 = vunpack.c.l.b16 %v2410
    %v2449 = vunpack.c.l.b16 %v2411
    %v2450 = vunpack.c.l.b16 %v2412
    %v2451 = vunpack.c.l.b16 %v2413
    %v2452 = vunpack.c.l.b16 %v2414
    %v2453 = vunpack.c.l.b16 %v2415
    %v2454 = vunpack.c.l.b16 %v2416
    %v2455 = vunpack.c.l.b16 %v2417
    %v2456 = vunpack.c.l.b16 %v2418
    %v2457 = vunpack.c.l.b16 %v2419
    %v2458 = vunpack.c.l.b16 %v2420
    %v2459 = vpack.c.b16 %v2444, %v2443
    %v2460 = vpack.c.b16 %v2446, %v2445
    %v2461 = vpack.c.b16 %v2448, %v2447
    %v2462 = vpack.c.b16 %v2450, %v2449
    %v2463 = vpack.c.b16 %v2452, %v2451
    %v2464 = vpack.c.b16 %v2454, %v2453
    %v2465 = vpack.c.b16 %v2456, %v2455
    %v2466 = vpack.c.b16 %v2458, %v2457
    %2475 = vmatprep.subr.bf16.mxu0 0
    %2476 = vmatpush1.bf16.msra.mxu0 %v2466
    %2477 = vmatprep.subr.bf16.mxu0 0
    %2478 = vmatpush1.bf16.msra.mxu0 %v2465
    %2479 = vmatprep.subr.bf16.mxu0 0
    %2480 = vmatpush1.bf16.msra.mxu0 %v2464
    %2481 = vmatprep.subr.bf16.mxu0 0
    %2482 = vmatpush1.bf16.msra.mxu0 %v2463
    %2483 = vmatprep.subr.bf16.mxu0 0
    %2484 = vmatpush1.bf16.msra.mxu0 %v2462
    %2485 = vmatprep.subr.bf16.mxu0 0
    %2486 = vmatpush1.bf16.msra.mxu0 %v2461
    %2487 = vmatprep.subr.bf16.mxu0 0
    %2488 = vmatpush1.bf16.msra.mxu0 %v2460
    %2489 = vmatprep.subr.bf16.mxu0 0
    %2490 = vmatpush1.bf16.msra.mxu0 %v2459
    %2491 = vmatprep.subr.bf16.mxu0 0
    %2492 = vmatpush2.bf16.msra.mxu0 0
    %2493 = vmatprep.subr.bf16.mxu0 0
    %2494 = vmatpush2.bf16.msra.mxu0 0
    %2495 = vmatprep.subr.bf16.mxu0 0
    %2496 = vmatpush2.bf16.msra.mxu0 0
    %2497 = vmatprep.subr.bf16.mxu0 0
    %2498 = vmatpush2.bf16.msra.mxu0 0
    %2499 = vmatprep.subr.bf16.mxu0 0
    %2500 = vmatpush2.bf16.msra.mxu0 0
    %2501 = vmatprep.subr.bf16.mxu0 0
    %2502 = vmatpush2.bf16.msra.mxu0 0
    %2503 = vmatprep.subr.bf16.mxu0 0
    %2504 = vmatpush2.bf16.msra.mxu0 0
    %2505 = vmatprep.subr.bf16.mxu0 0
    %2506 = vmatpush2.bf16.msra.mxu0 0
    %2507 = vmatprep.mubr.bf16.mxu0 0
    %2508 = vmatmul.mubr.bf16.gmra.mxu0 %v2422
    %v2509 = vpop.f32.mrf.mxu0
    %v2510 = vadd.f32 %v2426, %v2509
    %v2511 = vpop.f32.mrf.mxu0
    %v2512 = vpop.f32.mrf.mxu0
    %v2513 = vpop.f32.mrf.mxu0
    %2514 = vdwg.mxu0
    %v2515 = vld [vmem:[%s2 + $0x27] sm:$0x1]
    %v2516 = vld [vmem:[%s2 + $0x28] sm:$0x1]
    %v2517 = vrot.slane %v2510, 4
    %v2518 = vadd.f32 %v2510, %v2517
    %v2519 = vrot.slane %v2518, 2
    %v2520 = vadd.f32 %v2518, %v2519
    %v2521 = vrot.slane %v2520, 1
    %v2522 = vadd.f32 %v2520, %v2521
    %v2523 = vmul.f32 %v2522, %v259
    %v2524 = vsub.f32 %v2510, %v2523
    %v2525 = vmul.f32 %v2524, %v2524
    %v2526 = vrot.slane %v2525, 4
    %v2527 = vadd.f32 %v2525, %v2526
    %v2528 = vrot.slane %v2527, 2
    %v2529 = vadd.f32 %v2527, %v2528
    %v2530 = vrot.slane %v2529, 1
    %v2531 = vadd.f32 %v2529, %v2530
    %v2532 = vmul.f32 %v2531, %v259
    %v2533 = vadd.f32 %v2532, 1e-05
    %v2534 = vrsqrt.pop %v2533
    %v2535 = vmul.f32 %v2515, %v2534
    %v2536 = vlaneseq
    %v2537 = vshrl.u32 %v2536, 7
    %v2538 = vsub.s32 0, %v2537
    %v2539 = vrot.slane %v2535, %v2538
    %v2540 = vmul.f32 %v2524, %v2539
    %v2541 = vlaneseq
    %v2542 = vshrl.u32 %v2541, 7
    %v2543 = vsub.s32 0, %v2542
    %v2544 = vrot.slane %v2516, %v2543
    %v2545 = vadd.f32 %v2540, %v2544
    %v2546 = vmax.f32 %v2545, 0.0
    %v2547 = vld [vmem:[#allocation2 + $0x500] sm:$0xf]
    %v2548 = vld [vmem:[#allocation2 + $0x504] sm:$0xf]
    %v2549 = vld [vmem:[#allocation2 + $0x508] sm:$0xf]
    %v2550 = vld [vmem:[#allocation2 + $0x50c] sm:$0xf]
    %v2551 = vld [vmem:[#allocation2 + $0x510] sm:$0xf]
    %v2552 = vld [vmem:[#allocation2 + $0x514] sm:$0xf]
    %v2553 = vld [vmem:[#allocation2 + $0x518] sm:$0xf]
    %v2554 = vld [vmem:[#allocation2 + $0x51c] sm:$0xf]
    %v2555 = vld [vmem:[#allocation2 + $0x520] sm:$0xf]
    %v2556 = vld [vmem:[#allocation2 + $0x524] sm:$0xf]
    %v2557 = vld [vmem:[#allocation2 + $0x528] sm:$0xf]
    %v2558 = vld [vmem:[#allocation2 + $0x52c] sm:$0xf]
    %v2559 = vld [vmem:[#allocation2 + $0x530] sm:$0xf]
    %v2560 = vld [vmem:[#allocation2 + $0x534] sm:$0xf]
    %v2561 = vld [vmem:[#allocation2 + $0x538] sm:$0xf]
    %v2562 = vld [vmem:[#allocation2 + $0x53c] sm:$0xf]
    %v2563 = vld [vmem:[%s2 + $0x29] sm:$0x1]
    %v2564 = vpack.c.bf16 %v2546, %v2546
    %v2565 = vlaneseq
    %v2566 = vshrl.u32 %v2565, 7
    %v2567 = vsub.s32 0, %v2566
    %v2568 = vrot.slane %v2563, %v2567
    %v2585 = vunpack.c.l.b16 %v2547
    %v2586 = vunpack.c.l.b16 %v2548
    %v2587 = vunpack.c.l.b16 %v2549
    %v2588 = vunpack.c.l.b16 %v2550
    %v2589 = vunpack.c.l.b16 %v2551
    %v2590 = vunpack.c.l.b16 %v2552
    %v2591 = vunpack.c.l.b16 %v2553
    %v2592 = vunpack.c.l.b16 %v2554
    %v2593 = vunpack.c.l.b16 %v2555
    %v2594 = vunpack.c.l.b16 %v2556
    %v2595 = vunpack.c.l.b16 %v2557
    %v2596 = vunpack.c.l.b16 %v2558
    %v2597 = vunpack.c.l.b16 %v2559
    %v2598 = vunpack.c.l.b16 %v2560
    %v2599 = vunpack.c.l.b16 %v2561
    %v2600 = vunpack.c.l.b16 %v2562
    %v2601 = vpack.c.b16 %v2586, %v2585
    %v2602 = vpack.c.b16 %v2588, %v2587
    %v2603 = vpack.c.b16 %v2590, %v2589
    %v2604 = vpack.c.b16 %v2592, %v2591
    %v2605 = vpack.c.b16 %v2594, %v2593
    %v2606 = vpack.c.b16 %v2596, %v2595
    %v2607 = vpack.c.b16 %v2598, %v2597
    %v2608 = vpack.c.b16 %v2600, %v2599
    %2617 = vmatprep.subr.bf16.mxu0 0
    %2618 = vmatpush1.bf16.msra.mxu0 %v2608
    %2619 = vmatprep.subr.bf16.mxu0 0
    %2620 = vmatpush1.bf16.msra.mxu0 %v2607
    %2621 = vmatprep.subr.bf16.mxu0 0
    %2622 = vmatpush1.bf16.msra.mxu0 %v2606
    %2623 = vmatprep.subr.bf16.mxu0 0
    %2624 = vmatpush1.bf16.msra.mxu0 %v2605
    %2625 = vmatprep.subr.bf16.mxu0 0
    %2626 = vmatpush1.bf16.msra.mxu0 %v2604
    %2627 = vmatprep.subr.bf16.mxu0 0
    %2628 = vmatpush1.bf16.msra.mxu0 %v2603
    %2629 = vmatprep.subr.bf16.mxu0 0
    %2630 = vmatpush1.bf16.msra.mxu0 %v2602
    %2631 = vmatprep.subr.bf16.mxu0 0
    %2632 = vmatpush1.bf16.msra.mxu0 %v2601
    %2633 = vmatprep.subr.bf16.mxu0 0
    %2634 = vmatpush2.bf16.msra.mxu0 0
    %2635 = vmatprep.subr.bf16.mxu0 0
    %2636 = vmatpush2.bf16.msra.mxu0 0
    %2637 = vmatprep.subr.bf16.mxu0 0
    %2638 = vmatpush2.bf16.msra.mxu0 0
    %2639 = vmatprep.subr.bf16.mxu0 0
    %2640 = vmatpush2.bf16.msra.mxu0 0
    %2641 = vmatprep.subr.bf16.mxu0 0
    %2642 = vmatpush2.bf16.msra.mxu0 0
    %2643 = vmatprep.subr.bf16.mxu0 0
    %2644 = vmatpush2.bf16.msra.mxu0 0
    %2645 = vmatprep.subr.bf16.mxu0 0
    %2646 = vmatpush2.bf16.msra.mxu0 0
    %2647 = vmatprep.subr.bf16.mxu0 0
    %2648 = vmatpush2.bf16.msra.mxu0 0
    %2649 = vmatprep.mubr.bf16.mxu0 0
    %2650 = vmatmul.mubr.bf16.gmra.mxu0 %v2564
    %v2651 = vpop.f32.mrf.mxu0
    %v2652 = vadd.f32 %v2568, %v2651
    %v2653 = vpop.f32.mrf.mxu0
    %v2654 = vpop.f32.mrf.mxu0
    %v2655 = vpop.f32.mrf.mxu0
    %2656 = vdwg.mxu0
    %v2657 = vld [vmem:[%s2 + $0x2a] sm:$0x1]
    %v2658 = vld [vmem:[%s2 + $0x2b] sm:$0x1]
    %v2659 = vrot.slane %v2652, 4
    %v2660 = vadd.f32 %v2652, %v2659
    %v2661 = vrot.slane %v2660, 2
    %v2662 = vadd.f32 %v2660, %v2661
    %v2663 = vrot.slane %v2662, 1
    %v2664 = vadd.f32 %v2662, %v2663
    %v2665 = vmul.f32 %v2664, %v259
    %v2666 = vsub.f32 %v2652, %v2665
    %v2667 = vmul.f32 %v2666, %v2666
    %v2668 = vrot.slane %v2667, 4
    %v2669 = vadd.f32 %v2667, %v2668
    %v2670 = vrot.slane %v2669, 2
    %v2671 = vadd.f32 %v2669, %v2670
    %v2672 = vrot.slane %v2671, 1
    %v2673 = vadd.f32 %v2671, %v2672
    %v2674 = vmul.f32 %v2673, %v259
    %v2675 = vadd.f32 %v2674, 1e-05
    %v2676 = vrsqrt.pop %v2675
    %v2677 = vmul.f32 %v2657, %v2676
    %v2678 = vlaneseq
    %v2679 = vshrl.u32 %v2678, 7
    %v2680 = vsub.s32 0, %v2679
    %v2681 = vrot.slane %v2677, %v2680
    %v2682 = vmul.f32 %v2666, %v2681
    %v2683 = vlaneseq
    %v2684 = vshrl.u32 %v2683, 7
    %v2685 = vsub.s32 0, %v2684
    %v2686 = vrot.slane %v2658, %v2685
    %v2687 = vadd.f32 %v2682, %v2686
    %v2688 = vadd.f32 %v2687, %v2400
    %v2689 = vmax.f32 %v2688, 0.0
    %v2690 = vld [vmem:[#allocation2 + $0x540] sm:$0xf]
    %v2691 = vld [vmem:[#allocation2 + $0x544] sm:$0xf]
    %v2692 = vld [vmem:[#allocation2 + $0x548] sm:$0xf]
    %v2693 = vld [vmem:[#allocation2 + $0x54c] sm:$0xf]
    %v2694 = vld [vmem:[#allocation2 + $0x550] sm:$0xf]
    %v2695 = vld [vmem:[#allocation2 + $0x554] sm:$0xf]
    %v2696 = vld [vmem:[#allocation2 + $0x558] sm:$0xf]
    %v2697 = vld [vmem:[#allocation2 + $0x55c] sm:$0xf]
    %v2698 = vld [vmem:[#allocation2 + $0x560] sm:$0xf]
    %v2699 = vld [vmem:[#allocation2 + $0x564] sm:$0xf]
    %v2700 = vld [vmem:[#allocation2 + $0x568] sm:$0xf]
    %v2701 = vld [vmem:[#allocation2 + $0x56c] sm:$0xf]
    %v2702 = vld [vmem:[#allocation2 + $0x570] sm:$0xf]
    %v2703 = vld [vmem:[#allocation2 + $0x574] sm:$0xf]
    %v2704 = vld [vmem:[#allocation2 + $0x578] sm:$0xf]
    %v2705 = vld [vmem:[#allocation2 + $0x57c] sm:$0xf]
    %v2706 = vld [vmem:[%s2 + $0x2c] sm:$0x1]
    %v2707 = vpack.c.bf16 %v2689, %v2689
    %v2708 = vlaneseq
    %v2709 = vshrl.u32 %v2708, 7
    %v2710 = vsub.s32 0, %v2709
    %v2711 = vrot.slane %v2706, %v2710
    %v2728 = vunpack.c.l.b16 %v2690
    %v2729 = vunpack.c.l.b16 %v2691
    %v2730 = vunpack.c.l.b16 %v2692
    %v2731 = vunpack.c.l.b16 %v2693
    %v2732 = vunpack.c.l.b16 %v2694
    %v2733 = vunpack.c.l.b16 %v2695
    %v2734 = vunpack.c.l.b16 %v2696
    %v2735 = vunpack.c.l.b16 %v2697
    %v2736 = vunpack.c.l.b16 %v2698
    %v2737 = vunpack.c.l.b16 %v2699
    %v2738 = vunpack.c.l.b16 %v2700
    %v2739 = vunpack.c.l.b16 %v2701
    %v2740 = vunpack.c.l.b16 %v2702
    %v2741 = vunpack.c.l.b16 %v2703
    %v2742 = vunpack.c.l.b16 %v2704
    %v2743 = vunpack.c.l.b16 %v2705
    %v2744 = vpack.c.b16 %v2729, %v2728
    %v2745 = vpack.c.b16 %v2731, %v2730
    %v2746 = vpack.c.b16 %v2733, %v2732
    %v2747 = vpack.c.b16 %v2735, %v2734
    %v2748 = vpack.c.b16 %v2737, %v2736
    %v2749 = vpack.c.b16 %v2739, %v2738
    %v2750 = vpack.c.b16 %v2741, %v2740
    %v2751 = vpack.c.b16 %v2743, %v2742
    %2760 = vmatprep.subr.bf16.mxu0 0
    %2761 = vmatpush1.bf16.msra.mxu0 %v2751
    %2762 = vmatprep.subr.bf16.mxu0 0
    %2763 = vmatpush1.bf16.msra.mxu0 %v2750
    %2764 = vmatprep.subr.bf16.mxu0 0
    %2765 = vmatpush1.bf16.msra.mxu0 %v2749
    %2766 = vmatprep.subr.bf16.mxu0 0
    %2767 = vmatpush1.bf16.msra.mxu0 %v2748
    %2768 = vmatprep.subr.bf16.mxu0 0
    %2769 = vmatpush1.bf16.msra.mxu0 %v2747
    %2770 = vmatprep.subr.bf16.mxu0 0
    %2771 = vmatpush1.bf16.msra.mxu0 %v2746
    %2772 = vmatprep.subr.bf16.mxu0 0
    %2773 = vmatpush1.bf16.msra.mxu0 %v2745
    %2774 = vmatprep.subr.bf16.mxu0 0
    %2775 = vmatpush1.bf16.msra.mxu0 %v2744
    %2776 = vmatprep.subr.bf16.mxu0 0
    %2777 = vmatpush2.bf16.msra.mxu0 0
    %2778 = vmatprep.subr.bf16.mxu0 0
    %2779 = vmatpush2.bf16.msra.mxu0 0
    %2780 = vmatprep.subr.bf16.mxu0 0
    %2781 = vmatpush2.bf16.msra.mxu0 0
    %2782 = vmatprep.subr.bf16.mxu0 0
    %2783 = vmatpush2.bf16.msra.mxu0 0
    %2784 = vmatprep.subr.bf16.mxu0 0
    %2785 = vmatpush2.bf16.msra.mxu0 0
    %2786 = vmatprep.subr.bf16.mxu0 0
    %2787 = vmatpush2.bf16.msra.mxu0 0
    %2788 = vmatprep.subr.bf16.mxu0 0
    %2789 = vmatpush2.bf16.msra.mxu0 0
    %2790 = vmatprep.subr.bf16.mxu0 0
    %2791 = vmatpush2.bf16.msra.mxu0 0
    %2792 = vmatprep.mubr.bf16.mxu0 0
    %2793 = vmatmul.mubr.bf16.gmra.mxu0 %v2707
    %v2794 = vpop.f32.mrf.mxu0
    %v2795 = vadd.f32 %v2711, %v2794
    %v2796 = vpop.f32.mrf.mxu0
    %v2797 = vpop.f32.mrf.mxu0
    %v2798 = vpop.f32.mrf.mxu0
    %2799 = vdwg.mxu0
    %2800 = vst [vmem:[%s3] sm:$0xff] %v2795
    // Predicated region
    $region18: #{cvae_forward.1} parent=1 // pred_check
      _
    $region19: #{cvae_forward.1} parent=1 // pred_check_branch
      %2802 = sbr.rel (0) target = $region21
    $region20: #{cvae_forward.1} parent=1 // pred_region
      _
    $region21: #{cvae_forward.1} parent=1 // pred_fallthru
      _
    // Predicated region
    $region22: #{cvae_forward.1} parent=1 // pred_check
      _
    $region23: #{cvae_forward.1} parent=1 // pred_check_branch
      %2804 = sbr.rel (0) target = $region25
    $region24: #{cvae_forward.1} parent=1 // pred_region
      _
    $region25: #{cvae_forward.1} parent=1 // pred_fallthru
      _
    %2805 = vsyncpa [#allocation3], 1

</llo_original>
